<compile_context>
chip_gen: v5e
topology: v5e:2x2
jax: 0.10.0
libtpu: 0.0.40
codegen_flags: <defaults>
</compile_context>

<pallas_src>
import functools

import jax
import jax.numpy as jnp
from jax import lax
from jax.experimental import pallas as pl
from jax.experimental.pallas import tpu as pltpu


def _round_up(x, m):
    return (x + m - 1) // m * m


def resblock_kernel(x_ref, te_ref, w1_ref, w2_ref, wt_ref, cp_ref, gavg_ref,
                    m_ref, seg_ref, o_ref, *, W, eps, nb, co8):
    """One grid step: `nb` images, activations in (C, nb*H*W) lane-dense layout."""
    f32 = jnp.float32
    cdt = w1_ref.dtype                       # MXU operand dtype (bf16 default)
    x = x_ref[0]                             # (Ci8, L) f32
    L = x.shape[1]
    gavg = gavg_ref[...]                     # (Co8, Co8) f32 group-average matrix

    cp = cp_ref[...]                         # (Co8, 8) packed per-channel params
    b1, g1w, g1b = cp[:, 0:1], cp[:, 1:2], cp[:, 2:3]
    b2, g2w, g2b = cp[:, 3:4], cp[:, 4:5], cp[:, 5:6]
    bt, br = cp[:, 6:7], cp[:, 7:8]

    offs = [dy * W + dx for dy in (-1, 0, 1) for dx in (-1, 0, 1)]

    def im2col(a_f32):
        # Cast once BEFORE the 9 taps so the (9*C, L) matrix is built directly
        # in the compute dtype (masks are 0/1 -> exact).
        a = a_f32.astype(cdt)
        taps = []
        for i, off in enumerate(offs):
            t = a if off == 0 else pltpu.roll(a, (-off) % L, axis=1)
            if i != 4:                        # center tap needs no boundary mask
                t = t * m_ref[i:i + 1, :]
            taps.append(t)
        return jnp.concatenate(taps, axis=0)  # (9*C, L) cdt

    def gn_scale_shift(h, gamma, beta):
        # Per-image GroupNorm stats (masked lane sums), pooled over the group
        # and broadcast back to channels by ONE tiny (C, C) @ (C, 2*nb) matmul.
        if nb == 1:
            s = jnp.sum(h, axis=1, keepdims=True)
            ss = jnp.sum(h * h, axis=1, keepdims=True)
        else:
            s_cols, ss_cols = [], []
            for i in range(nb):
                hm = h * seg_ref[i:i + 1, :]
                s_cols.append(jnp.sum(hm, axis=1, keepdims=True))
                ss_cols.append(jnp.sum(hm * h, axis=1, keepdims=True))
            s = jnp.concatenate(s_cols, axis=1)        # (Co8, nb)
            ss = jnp.concatenate(ss_cols, axis=1)      # (Co8, nb)
        stats = jnp.dot(gavg, jnp.concatenate([s, ss], axis=1),
                        preferred_element_type=f32)    # (Co8, 2*nb)
        mean, ex2 = stats[:, :nb], stats[:, nb:]
        var = jnp.maximum(ex2 - mean * mean, 0.0)      # one-pass guard
        rstd = lax.rsqrt(var + eps)
        scale = rstd * gamma                           # (Co8, nb)
        shift = beta - mean * scale
        return scale, shift

    def bcast(cols):
        # (Co8, nb) per-image columns -> broadcastable over the (Co8, L) lanes.
        if nb == 1:
            return cols                                # (Co8, 1) broadcasts
        out = cols[:, 0:1] * seg_ref[0:1, :]
        for i in range(1, nb):
            out = out + cols[:, i:i + 1] * seg_ref[i:i + 1, :]
        return out

    # --- time-embedding MLP: SiLU -> Linear as one (Co8,S) @ (S,nb) dot ---
    te = te_ref[0]                                     # (step_dim, nb) f32
    te = te * jax.nn.sigmoid(te)
    te_cols = jnp.dot(wt_ref[...], te, preferred_element_type=f32) + bt

    # --- block1 conv3x3 + residual 1x1 fused into ONE im2col MXU matmul ---
    cols1 = im2col(x)                                  # (9*Ci8, L) cdt
    h_all = jnp.dot(w1_ref[...], cols1,
                    preferred_element_type=f32)        # (2*Co8, L) f32
    h = h_all[:co8] + b1
    res = h_all[co8:] + br                             # residual branch rows

    # --- GroupNorm1 + SiLU + time-embedding add (all f32) ---
    sc, sh = gn_scale_shift(h, g1w, g1b)
    h = h * bcast(sc) + bcast(sh)
    h = h * jax.nn.sigmoid(h)
    h = h + bcast(te_cols)

    # --- block2 conv3x3 (single im2col matmul) + GroupNorm2 + SiLU ---
    cols2 = im2col(h)                                  # (9*Co8, L) cdt
    h2 = jnp.dot(w2_ref[...], cols2, preferred_element_type=f32) + b2
    sc, sh = gn_scale_shift(h2, g2w, g2b)
    h2 = h2 * bcast(sc) + bcast(sh)
    h2 = h2 * jax.nn.sigmoid(h2)

    o_ref[0] = (h2 + res).astype(o_ref.dtype)          # lane-dense store


def residual_block_forward(x_nchw, time_emb, p, *, groups, eps=1e-5,
                           compute_dtype=jnp.bfloat16, out_dtype=jnp.float32,
                           single_buffer_weights=True):
    """x_nchw: (N, Cin, H, W); time_emb: (N, step_dim). Returns (N, Cout, H, W)."""
    N, Cin, H, W = x_nchw.shape
    P = H * W
    step_dim = time_emb.shape[1]
    Cout = p["w1"].shape[-1]
    Ci8 = _round_up(Cin, 8)
    Co8 = _round_up(Cout, 8)
    cg = Cout // groups
    f32 = jnp.float32

    # Batch folding: NB images per grid step so the streamed lane width is
    # >= 512 (only worthwhile when a single image has few pixels).
    NB = 1
    if P % 128 == 0 and P < 512:
        for cand in (4, 2):
            if N % cand == 0 and cand * P <= 4096:
                NB = cand
                break
    G = N // NB
    L = NB * P

    # Input NCHW -> (G, Ci8, NB*P): channels in sublanes, pixels lane-dense.
    x_flat = x_nchw.reshape(N, Cin, P).astype(f32)
    x_flat = jnp.pad(x_flat, ((0, 0), (0, Ci8 - Cin), (0, 0)))
    x_fold = x_flat.reshape(G, NB, Ci8, P).transpose(0, 2, 1, 3).reshape(G, Ci8, L)

    # time_emb (N, step) -> (G, step, NB) so the kernel does wt @ te directly.
    te_fold = time_emb.astype(f32).reshape(G, NB, step_dim).transpose(0, 2, 1)

    # Conv weights HWIO -> (Co8, 9*Ci8), flattened in im2col tap order (ky,kx,ci).
    def conv_flat(w, ci, ci8):
        w = jnp.pad(w.astype(f32),
                    ((0, 0), (0, 0), (0, ci8 - ci), (0, Co8 - Cout)))
        return jnp.transpose(w, (3, 0, 1, 2)).reshape(Co8, 9 * ci8)

    # Residual 1x1 conv merged into the block1 matmul: extra Co8 rows holding
    # wr in the center-tap (dy=dx=0) column block, zeros elsewhere.
    w1_flat = conv_flat(p["w1"], Cin, Ci8)
    wr_pad = jnp.pad(p["wr"].astype(f32).T, ((0, Co8 - Cout), (0, Ci8 - Cin)))
    wr_rows = jnp.zeros((Co8, 9 * Ci8), f32).at[:, 4 * Ci8:5 * Ci8].set(wr_pad)
    w1_aug = jnp.concatenate([w1_flat, wr_rows], axis=0).astype(compute_dtype)
    w2_flat = conv_flat(p["w2"], Cout, Co8).astype(compute_dtype)

    def pad_c(v):
        return jnp.pad(v.astype(f32), (0, Co8 - Cout))

    # time-MLP Linear (step, Cout) -> (Co8, step); stays f32 (tiny-K dot).
    wt = jnp.pad(p["wt"].astype(f32).T, ((0, Co8 - Cout), (0, 0)))

    # Eight per-channel vectors packed into a single (Co8, 8) operand.
    cp = jnp.stack([pad_c(p["b1"]), pad_c(p["gn1w"]), pad_c(p["gn1b"]),
                    pad_c(p["b2"]), pad_c(p["gn2w"]), pad_c(p["gn2b"]),
                    pad_c(p["bt"]), pad_c(p["br"])], axis=1)

    # Group-average matrix: 1/(cg*H*W) for same-group REAL channels, else 0.
    ch = jnp.arange(Co8)
    same_group = (ch[:, None] // cg) == (ch[None, :] // cg)
    real = (ch[:, None] < Cout) & (ch[None, :] < Cout)
    gavg = jnp.where(same_group & real, 1.0 / (cg * P), 0.0).astype(f32)

    # 3x3 conv boundary masks, precomputed once, tiled per folded image, and
    # cast to the compute dtype so im2col stays in compute dtype end to end.
    r = jnp.arange(P) // W
    c = jnp.arange(P) % W
    rows = []
    for dy in (-1, 0, 1):
        for dx in (-1, 0, 1):
            ok = jnp.ones((P,), bool)
            if dy == -1:
                ok = ok & (r >= 1)
            if dy == 1:
                ok = ok & (r <= H - 2)
            if dx == -1:
                ok = ok & (c >= 1)
            if dx == 1:
                ok = ok & (c <= W - 2)
            rows.append(ok)
    masks = jnp.tile(jnp.stack(rows, 0), (1, NB)).astype(compute_dtype)  # (9, L)

    # Per-image lane-segment indicator (per-image GN stats / broadcasts).
    seg = (jnp.arange(L)[None, :] // P ==
           jnp.arange(NB)[:, None]).astype(f32)                          # (NB, L)

    kernel = functools.partial(resblock_kernel, W=W, eps=eps, nb=NB, co8=Co8)
    args = (x_fold, te_fold, w1_aug, w2_flat, wt, cp, gavg, masks, seg)

    def build(single_buffer):
        def cspec(shape):
            idx = lambda g, n=len(shape): (0,) * n
            if single_buffer:
                # Grid-invariant operands: single buffer (VMEM headroom at
                # real DDPM sizes, most important on v7x's 64 MiB VMEM).
                return pl.BlockSpec(shape, idx, pipeline_mode=pl.Buffered(1))
            return pl.BlockSpec(shape, idx)

        return pl.pallas_call(
            kernel,
            out_shape=jax.ShapeDtypeStruct((G, Co8, L), out_dtype),
            grid_spec=pltpu.PrefetchScalarGridSpec(
                num_scalar_prefetch=0,
                grid=(G,),
                in_specs=[
                    pl.BlockSpec((1, Ci8, L), lambda g: (g, 0, 0)),        # x
                    pl.BlockSpec((1, step_dim, NB), lambda g: (g, 0, 0)),  # temb
                    cspec((2 * Co8, 9 * Ci8)),                             # w1+wr
                    cspec((Co8, 9 * Co8)),                                 # w2
                    cspec((Co8, step_dim)),                                # wt
                    cspec((Co8, 8)),                                       # packed
                    cspec((Co8, Co8)),                                     # gavg
                    cspec((9, L)),                                         # masks
                    cspec((NB, L)),                                        # seg
                ],
                out_specs=pl.BlockSpec((1, Co8, L), lambda g: (g, 0, 0)),
            ),
            compiler_params=pltpu.CompilerParams(
                dimension_semantics=("parallel",),
                vmem_limit_bytes=64 * 1024 * 1024),
        )

    if single_buffer_weights:
        try:
            out = build(True)(*args)
        except Exception:
            # pl.Buffered(1) not supported by this jax/Mosaic version; fall
            # back to default double-buffering of the constant operands.
            out = build(False)(*args)
    else:
        out = build(False)(*args)

    out = out.reshape(G, Co8, NB, P).transpose(0, 2, 1, 3).reshape(N, Co8, P)
    return out[:, :Cout, :].reshape(N, Cout, H, W)


def ref_forward(x_nchw, time_emb, p, *, groups, eps=1e-5):
    """Pure-JAX reference matching the PyTorch module semantics."""
    x = jnp.transpose(x_nchw, (0, 2, 3, 1)).astype(jnp.float32)

    def conv3x3(inp, w, b):
        out = lax.conv_general_dilated(
            inp, w, (1, 1), "SAME",
            dimension_numbers=("NHWC", "HWIO", "NHWC"))
        return out + b.reshape(1, 1, 1, -1)

    def gn(inp, gamma, beta):
        N, H, W, C = inp.shape
        cg = C // groups
        xr = inp.reshape(N, H, W, groups, cg)
        mean = xr.mean(axis=(1, 2, 4), keepdims=True)
        var = ((xr - mean) ** 2).mean(axis=(1, 2, 4), keepdims=True)
        xn = ((xr - mean) / jnp.sqrt(var + eps)).reshape(N, H, W, C)
        return xn * gamma.reshape(1, 1, 1, -1) + beta.reshape(1, 1, 1, -1)

    silu = lambda v: v * jax.nn.sigmoid(v)

    h = silu(gn(conv3x3(x, p["w1"], p["b1"]), p["gn1w"], p["gn1b"]))
    te = silu(time_emb.astype(jnp.float32)) @ p["wt"] + p["bt"]
    h = h + te[:, None, None, :]
    h = silu(gn(conv3x3(h, p["w2"], p["b2"]), p["gn2w"], p["gn2b"]))
    res = jnp.einsum("nhwc,co->nhwo", x, p["wr"]) + p["br"].reshape(1, 1, 1, -1)
    return jnp.transpose(h + res, (0, 3, 1, 2))


if __name__ == "__main__":
    # Shapes consistent with ResidualBlock(input_channels=4, output_channels=8,
    # step_dim=32, groups=4).
    N, Cin, Cout, H, W, step_dim, groups = 2, 4, 8, 16, 16, 32, 4

    key = jax.random.PRNGKey(0)
    ks = jax.random.split(key, 12)

    params = {
        # conv1: HWIO
        "w1": 0.1 * jax.random.normal(ks[0], (3, 3, Cin, Cout), jnp.float32),
        "b1": 0.1 * jax.random.normal(ks[1], (Cout,), jnp.float32),
        # GroupNorm1 affine (PyTorch init: ones / zeros)
        "gn1w": jnp.ones((Cout,), jnp.float32),
        "gn1b": jnp.zeros((Cout,), jnp.float32),
        # conv2
        "w2": 0.1 * jax.random.normal(ks[2], (3, 3, Cout, Cout), jnp.float32),
        "b2": 0.1 * jax.random.normal(ks[3], (Cout,), jnp.float32),
        "gn2w": jnp.ones((Cout,), jnp.float32),
        "gn2b": jnp.zeros((Cout,), jnp.float32),
        # time-embedding Linear: (step_dim, Cout)
        "wt": 0.1 * jax.random.normal(ks[4], (step_dim, Cout), jnp.float32),
        "bt": 0.1 * jax.random.normal(ks[5], (Cout,), jnp.float32),
        # residual 1x1 conv (Cin != Cout)
        "wr": 0.1 * jax.random.normal(ks[6], (Cin, Cout), jnp.float32),
        "br": 0.1 * jax.random.normal(ks[7], (Cout,), jnp.float32),
    }

    x = jax.random.normal(ks[8], (N, Cin, H, W), jnp.float32)
    time_emb = jax.random.normal(ks[9], (N, step_dim), jnp.float32)

    ref = jax.block_until_ready(ref_forward(x, time_emb, params, groups=groups))

    # f32 MXU operand path: tight tolerance vs reference.
    out_f32 = jax.block_until_ready(
        residual_block_forward(x, time_emb, params, groups=groups,
                               compute_dtype=jnp.float32))
    assert out_f32.shape == (N, Cout, H, W)
    assert jnp.allclose(out_f32, ref, atol=5e-4, rtol=5e-4), (
        float(jnp.max(jnp.abs(out_f32 - ref))))

    # Default path: bf16 MXU operands, f32 accumulation + f32 GroupNorm/SiLU.
    out_bf16 = jax.block_until_ready(
        residual_block_forward(x, time_emb, params, groups=groups))
    assert out_bf16.shape == (N, Cout, H, W)
    assert jnp.allclose(out_bf16, ref, atol=1e-1, rtol=1e-1), (
        float(jnp.max(jnp.abs(out_bf16 - ref))))

    print("KERNEL_OK")
</pallas_src>

<mosaic_0001>
module attributes {stable_mosaic.version = 11 : i64} {
  func.func @resblock_kernel(%arg0: i32, %arg1: memref<1x8x512xf32, #tpu.memory_space<vmem>>, %arg2: memref<1x32x2xf32, #tpu.memory_space<vmem>>, %arg3: memref<16x72xf32, #tpu.memory_space<vmem>>, %arg4: memref<8x72xf32, #tpu.memory_space<vmem>>, %arg5: memref<8x32xf32, #tpu.memory_space<vmem>>, %arg6: memref<8x8xf32, #tpu.memory_space<vmem>>, %arg7: memref<8x8xf32, #tpu.memory_space<vmem>>, %arg8: memref<9x512xf32, #tpu.memory_space<vmem>>, %arg9: memref<2x512xf32, #tpu.memory_space<vmem>>, %arg10: memref<1x8x512xf32, #tpu.memory_space<vmem>>) attributes {dimension_semantics = [#tpu.dimension_semantics<parallel>], iteration_bounds = array<i64: 1>, scalar_prefetch = 0 : i64, scratch_operands = 0 : i64, tpu.core_type = #tpu.core_type<tc>, window_params = [{transform_indices = @transform_0, window_bounds = array<i64: 1, 8, 512>}, {transform_indices = @transform_1, window_bounds = array<i64: 1, 32, 2>}, {pipeline_mode = #tpu.pipeline_mode<synchronous>, transform_indices = @transform_2, window_bounds = array<i64: 16, 72>}, {pipeline_mode = #tpu.pipeline_mode<synchronous>, transform_indices = @transform_3, window_bounds = array<i64: 8, 72>}, {pipeline_mode = #tpu.pipeline_mode<synchronous>, transform_indices = @transform_4, window_bounds = array<i64: 8, 32>}, {pipeline_mode = #tpu.pipeline_mode<synchronous>, transform_indices = @transform_5, window_bounds = array<i64: 8, 8>}, {pipeline_mode = #tpu.pipeline_mode<synchronous>, transform_indices = @transform_6, window_bounds = array<i64: 8, 8>}, {pipeline_mode = #tpu.pipeline_mode<synchronous>, transform_indices = @transform_7, window_bounds = array<i64: 9, 512>}, {pipeline_mode = #tpu.pipeline_mode<synchronous>, transform_indices = @transform_8, window_bounds = array<i64: 2, 512>}, {transform_indices = @transform_9, window_bounds = array<i64: 1, 8, 512>}]} {
    %c0 = arith.constant 0 : index
    %c0_0 = arith.constant 0 : index
    %c0_1 = arith.constant 0 : index
    %0 = vector.load %arg1[%c0, %c0_0, %c0_1] : memref<1x8x512xf32, #tpu.memory_space<vmem>>, vector<1x8x512xf32>
    %1 = vector.shape_cast %0 : vector<1x8x512xf32> to vector<8x512xf32>
    %c0_2 = arith.constant 0 : index
    %c0_3 = arith.constant 0 : index
    %2 = vector.load %arg7[%c0_2, %c0_3] : memref<8x8xf32, #tpu.memory_space<vmem>>, vector<8x8xf32>
    %c0_4 = arith.constant 0 : index
    %c0_5 = arith.constant 0 : index
    %3 = vector.load %arg6[%c0_4, %c0_5] : memref<8x8xf32, #tpu.memory_space<vmem>>, vector<8x8xf32>
    %4 = vector.extract_strided_slice %3 {offsets = [0, 0], sizes = [8, 1], strides = [1, 1]} : vector<8x8xf32> to vector<8x1xf32>
    %5 = vector.extract_strided_slice %3 {offsets = [0, 1], sizes = [8, 1], strides = [1, 1]} : vector<8x8xf32> to vector<8x1xf32>
    %6 = vector.extract_strided_slice %3 {offsets = [0, 2], sizes = [8, 1], strides = [1, 1]} : vector<8x8xf32> to vector<8x1xf32>
    %7 = vector.extract_strided_slice %3 {offsets = [0, 3], sizes = [8, 1], strides = [1, 1]} : vector<8x8xf32> to vector<8x1xf32>
    %8 = vector.extract_strided_slice %3 {offsets = [0, 4], sizes = [8, 1], strides = [1, 1]} : vector<8x8xf32> to vector<8x1xf32>
    %9 = vector.extract_strided_slice %3 {offsets = [0, 5], sizes = [8, 1], strides = [1, 1]} : vector<8x8xf32> to vector<8x1xf32>
    %10 = vector.extract_strided_slice %3 {offsets = [0, 6], sizes = [8, 1], strides = [1, 1]} : vector<8x8xf32> to vector<8x1xf32>
    %11 = vector.extract_strided_slice %3 {offsets = [0, 7], sizes = [8, 1], strides = [1, 1]} : vector<8x8xf32> to vector<8x1xf32>
    %c0_6 = arith.constant 0 : index
    %c0_7 = arith.constant 0 : index
    %c0_8 = arith.constant 0 : index
    %12 = vector.load %arg2[%c0_6, %c0_7, %c0_8] : memref<1x32x2xf32, #tpu.memory_space<vmem>>, vector<1x32x2xf32>
    %13 = vector.shape_cast %12 : vector<1x32x2xf32> to vector<32x2xf32>
    %14 = arith.negf %13 : vector<32x2xf32>
    %15 = math.exp %14 : vector<32x2xf32>
    %cst = arith.constant 1.000000e+00 : f32
    %16 = vector.broadcast %cst : f32 to vector<32x2xf32>
    %17 = arith.addf %16, %15 : vector<32x2xf32>
    %18 = arith.divf %16, %17 : vector<32x2xf32>
    %19 = arith.mulf %13, %18 : vector<32x2xf32>
    %c0_9 = arith.constant 0 : index
    %c0_10 = arith.constant 0 : index
    %20 = vector.load %arg5[%c0_9, %c0_10] : memref<8x32xf32, #tpu.memory_space<vmem>>, vector<8x32xf32>
    %cst_11 = arith.constant dense<0.000000e+00> : vector<8x2xf32>
    %21 = tpu.matmul %20, %19, %cst_11 {dimension_numbers = #tpu.dot_dimension_numbers<[1], [0], [0], [1], [0, 0, 1, 1], [], []>} : vector<8x32xf32>, vector<32x2xf32>, vector<8x2xf32> -> vector<8x2xf32>
    %22 = vector.broadcast %10 : vector<8x1xf32> to vector<8x2xf32>
    %23 = arith.addf %21, %22 : vector<8x2xf32>
    %c17_i32 = arith.constant 17 : i32
    %24 = tpu.dynamic_rotate %1 by %c17_i32 dim 1 : vector<8x512xf32>, i32 -> vector<8x512xf32>
    %c0_12 = arith.constant 0 : index
    %c0_13 = arith.constant 0 : index
    %25 = vector.load %arg8[%c0_12, %c0_13] : memref<9x512xf32, #tpu.memory_space<vmem>>, vector<1x512xf32>
    %26 = vector.broadcast %25 : vector<1x512xf32> to vector<8x512xf32>
    %27 = arith.mulf %24, %26 : vector<8x512xf32>
    %c16_i32 = arith.constant 16 : i32
    %28 = tpu.dynamic_rotate %1 by %c16_i32 dim 1 : vector<8x512xf32>, i32 -> vector<8x512xf32>
    %c1 = arith.constant 1 : index
    %c0_14 = arith.constant 0 : index
    %29 = vector.load %arg8[%c1, %c0_14] : memref<9x512xf32, #tpu.memory_space<vmem>>, vector<1x512xf32>
    %30 = vector.broadcast %29 : vector<1x512xf32> to vector<8x512xf32>
    %31 = arith.mulf %28, %30 : vector<8x512xf32>
    %c15_i32 = arith.constant 15 : i32
    %32 = tpu.dynamic_rotate %1 by %c15_i32 dim 1 : vector<8x512xf32>, i32 -> vector<8x512xf32>
    %c2 = arith.constant 2 : index
    %c0_15 = arith.constant 0 : index
    %33 = vector.load %arg8[%c2, %c0_15] : memref<9x512xf32, #tpu.memory_space<vmem>>, vector<1x512xf32>
    %34 = vector.broadcast %33 : vector<1x512xf32> to vector<8x512xf32>
    %35 = arith.mulf %32, %34 : vector<8x512xf32>
    %c1_i32 = arith.constant 1 : i32
    %36 = tpu.dynamic_rotate %1 by %c1_i32 dim 1 : vector<8x512xf32>, i32 -> vector<8x512xf32>
    %c3 = arith.constant 3 : index
    %c0_16 = arith.constant 0 : index
    %37 = vector.load %arg8[%c3, %c0_16] : memref<9x512xf32, #tpu.memory_space<vmem>>, vector<1x512xf32>
    %38 = vector.broadcast %37 : vector<1x512xf32> to vector<8x512xf32>
    %39 = arith.mulf %36, %38 : vector<8x512xf32>
    %c511_i32 = arith.constant 511 : i32
    %40 = tpu.dynamic_rotate %1 by %c511_i32 dim 1 : vector<8x512xf32>, i32 -> vector<8x512xf32>
    %c5 = arith.constant 5 : index
    %c0_17 = arith.constant 0 : index
    %41 = vector.load %arg8[%c5, %c0_17] : memref<9x512xf32, #tpu.memory_space<vmem>>, vector<1x512xf32>
    %42 = vector.broadcast %41 : vector<1x512xf32> to vector<8x512xf32>
    %43 = arith.mulf %40, %42 : vector<8x512xf32>
    %c497_i32 = arith.constant 497 : i32
    %44 = tpu.dynamic_rotate %1 by %c497_i32 dim 1 : vector<8x512xf32>, i32 -> vector<8x512xf32>
    %c6 = arith.constant 6 : index
    %c0_18 = arith.constant 0 : index
    %45 = vector.load %arg8[%c6, %c0_18] : memref<9x512xf32, #tpu.memory_space<vmem>>, vector<1x512xf32>
    %46 = vector.broadcast %45 : vector<1x512xf32> to vector<8x512xf32>
    %47 = arith.mulf %44, %46 : vector<8x512xf32>
    %c496_i32 = arith.constant 496 : i32
    %48 = tpu.dynamic_rotate %1 by %c496_i32 dim 1 : vector<8x512xf32>, i32 -> vector<8x512xf32>
    %c7 = arith.constant 7 : index
    %c0_19 = arith.constant 0 : index
    %49 = vector.load %arg8[%c7, %c0_19] : memref<9x512xf32, #tpu.memory_space<vmem>>, vector<1x512xf32>
    %50 = vector.broadcast %49 : vector<1x512xf32> to vector<8x512xf32>
    %51 = arith.mulf %48, %50 : vector<8x512xf32>
    %c495_i32 = arith.constant 495 : i32
    %52 = tpu.dynamic_rotate %1 by %c495_i32 dim 1 : vector<8x512xf32>, i32 -> vector<8x512xf32>
    %c8 = arith.constant 8 : index
    %c0_20 = arith.constant 0 : index
    %53 = vector.load %arg8[%c8, %c0_20] : memref<9x512xf32, #tpu.memory_space<vmem>>, vector<1x512xf32>
    %54 = vector.broadcast %53 : vector<1x512xf32> to vector<8x512xf32>
    %55 = arith.mulf %52, %54 : vector<8x512xf32>
    %56 = tpu.concatenate %27, %31, %35, %39, %1, %43, %47, %51, %55 in 0 : vector<8x512xf32>, vector<8x512xf32>, vector<8x512xf32>, vector<8x512xf32>, vector<8x512xf32>, vector<8x512xf32>, vector<8x512xf32>, vector<8x512xf32>, vector<8x512xf32> -> vector<72x512xf32>
    %c0_21 = arith.constant 0 : index
    %c0_22 = arith.constant 0 : index
    %57 = vector.load %arg3[%c0_21, %c0_22] : memref<16x72xf32, #tpu.memory_space<vmem>>, vector<16x72xf32>
    %cst_23 = arith.constant dense<0.000000e+00> : vector<16x512xf32>
    %58 = tpu.matmul %57, %56, %cst_23 {dimension_numbers = #tpu.dot_dimension_numbers<[1], [0], [0], [1], [0, 0, 1, 1], [], []>} : vector<16x72xf32>, vector<72x512xf32>, vector<16x512xf32> -> vector<16x512xf32>
    %59 = vector.extract_strided_slice %58 {offsets = [0, 0], sizes = [8, 512], strides = [1, 1]} : vector<16x512xf32> to vector<8x512xf32>
    %60 = vector.broadcast %4 : vector<8x1xf32> to vector<8x512xf32>
    %61 = arith.addf %59, %60 : vector<8x512xf32>
    %62 = vector.extract_strided_slice %58 {offsets = [8, 0], sizes = [8, 512], strides = [1, 1]} : vector<16x512xf32> to vector<8x512xf32>
    %63 = vector.broadcast %11 : vector<8x1xf32> to vector<8x512xf32>
    %64 = arith.addf %62, %63 : vector<8x512xf32>
    %c0_24 = arith.constant 0 : index
    %c0_25 = arith.constant 0 : index
    %65 = vector.load %arg9[%c0_24, %c0_25] : memref<2x512xf32, #tpu.memory_space<vmem>>, vector<1x512xf32>
    %66 = vector.broadcast %65 : vector<1x512xf32> to vector<8x512xf32>
    %67 = arith.mulf %61, %66 : vector<8x512xf32>
    %cst_26 = arith.constant dense<0.000000e+00> : vector<8xf32>
    %68 = vector.multi_reduction <add>, %67, %cst_26 [1] : vector<8x512xf32> to vector<8xf32>
    %69 = vector.shape_cast %68 : vector<8xf32> to vector<8x1xf32>
    %70 = arith.mulf %67, %61 : vector<8x512xf32>
    %cst_27 = arith.constant dense<0.000000e+00> : vector<8xf32>
    %71 = vector.multi_reduction <add>, %70, %cst_27 [1] : vector<8x512xf32> to vector<8xf32>
    %72 = vector.shape_cast %71 : vector<8xf32> to vector<8x1xf32>
    %c1_28 = arith.constant 1 : index
    %c0_29 = arith.constant 0 : index
    %73 = vector.load %arg9[%c1_28, %c0_29] : memref<2x512xf32, #tpu.memory_space<vmem>>, vector<1x512xf32>
    %74 = vector.broadcast %73 : vector<1x512xf32> to vector<8x512xf32>
    %75 = arith.mulf %61, %74 : vector<8x512xf32>
    %cst_30 = arith.constant dense<0.000000e+00> : vector<8xf32>
    %76 = vector.multi_reduction <add>, %75, %cst_30 [1] : vector<8x512xf32> to vector<8xf32>
    %77 = vector.shape_cast %76 : vector<8xf32> to vector<8x1xf32>
    %78 = arith.mulf %75, %61 : vector<8x512xf32>
    %cst_31 = arith.constant dense<0.000000e+00> : vector<8xf32>
    %79 = vector.multi_reduction <add>, %78, %cst_31 [1] : vector<8x512xf32> to vector<8xf32>
    %80 = vector.shape_cast %79 : vector<8xf32> to vector<8x1xf32>
    %81 = tpu.concatenate %69, %77 in 1 : vector<8x1xf32>, vector<8x1xf32> -> vector<8x2xf32>
    %82 = tpu.concatenate %72, %80 in 1 : vector<8x1xf32>, vector<8x1xf32> -> vector<8x2xf32>
    %83 = tpu.concatenate %81, %82 in 1 : vector<8x2xf32>, vector<8x2xf32> -> vector<8x4xf32>
    %cst_32 = arith.constant dense<0.000000e+00> : vector<8x4xf32>
    %84 = tpu.matmul %2, %83, %cst_32 {dimension_numbers = #tpu.dot_dimension_numbers<[1], [0], [0], [1], [0, 0, 1, 1], [], []>} : vector<8x8xf32>, vector<8x4xf32>, vector<8x4xf32> -> vector<8x4xf32>
    %85 = vector.extract_strided_slice %84 {offsets = [0, 0], sizes = [8, 2], strides = [1, 1]} : vector<8x4xf32> to vector<8x2xf32>
    %86 = vector.extract_strided_slice %84 {offsets = [0, 2], sizes = [8, 2], strides = [1, 1]} : vector<8x4xf32> to vector<8x2xf32>
    %87 = arith.mulf %85, %85 : vector<8x2xf32>
    %88 = arith.subf %86, %87 : vector<8x2xf32>
    %cst_33 = arith.constant 0.000000e+00 : f32
    %89 = vector.broadcast %cst_33 : f32 to vector<8x2xf32>
    %90 = arith.maximumf %88, %89 : vector<8x2xf32>
    %cst_34 = arith.constant 9.99999974E-6 : f32
    %91 = vector.broadcast %cst_34 : f32 to vector<8x2xf32>
    %92 = arith.addf %90, %91 : vector<8x2xf32>
    %93 = math.rsqrt %92 : vector<8x2xf32>
    %94 = vector.broadcast %5 : vector<8x1xf32> to vector<8x2xf32>
    %95 = arith.mulf %93, %94 : vector<8x2xf32>
    %96 = arith.mulf %85, %95 : vector<8x2xf32>
    %97 = vector.broadcast %6 : vector<8x1xf32> to vector<8x2xf32>
    %98 = arith.subf %97, %96 : vector<8x2xf32>
    %99 = vector.extract_strided_slice %95 {offsets = [0, 0], sizes = [8, 1], strides = [1, 1]} : vector<8x2xf32> to vector<8x1xf32>
    %c0_35 = arith.constant 0 : index
    %c0_36 = arith.constant 0 : index
    %100 = vector.load %arg9[%c0_35, %c0_36] : memref<2x512xf32, #tpu.memory_space<vmem>>, vector<1x512xf32>
    %101 = vector.broadcast %99 : vector<8x1xf32> to vector<8x512xf32>
    %102 = vector.broadcast %100 : vector<1x512xf32> to vector<8x512xf32>
    %103 = arith.mulf %101, %102 : vector<8x512xf32>
    %104 = vector.extract_strided_slice %95 {offsets = [0, 1], sizes = [8, 1], strides = [1, 1]} : vector<8x2xf32> to vector<8x1xf32>
    %c1_37 = arith.constant 1 : index
    %c0_38 = arith.constant 0 : index
    %105 = vector.load %arg9[%c1_37, %c0_38] : memref<2x512xf32, #tpu.memory_space<vmem>>, vector<1x512xf32>
    %106 = vector.broadcast %104 : vector<8x1xf32> to vector<8x512xf32>
    %107 = vector.broadcast %105 : vector<1x512xf32> to vector<8x512xf32>
    %108 = arith.mulf %106, %107 : vector<8x512xf32>
    %109 = arith.addf %103, %108 : vector<8x512xf32>
    %110 = arith.mulf %61, %109 : vector<8x512xf32>
    %111 = vector.extract_strided_slice %98 {offsets = [0, 0], sizes = [8, 1], strides = [1, 1]} : vector<8x2xf32> to vector<8x1xf32>
    %c0_39 = arith.constant 0 : index
    %c0_40 = arith.constant 0 : index
    %112 = vector.load %arg9[%c0_39, %c0_40] : memref<2x512xf32, #tpu.memory_space<vmem>>, vector<1x512xf32>
    %113 = vector.broadcast %111 : vector<8x1xf32> to vector<8x512xf32>
    %114 = vector.broadcast %112 : vector<1x512xf32> to vector<8x512xf32>
    %115 = arith.mulf %113, %114 : vector<8x512xf32>
    %116 = vector.extract_strided_slice %98 {offsets = [0, 1], sizes = [8, 1], strides = [1, 1]} : vector<8x2xf32> to vector<8x1xf32>
    %c1_41 = arith.constant 1 : index
    %c0_42 = arith.constant 0 : index
    %117 = vector.load %arg9[%c1_41, %c0_42] : memref<2x512xf32, #tpu.memory_space<vmem>>, vector<1x512xf32>
    %118 = vector.broadcast %116 : vector<8x1xf32> to vector<8x512xf32>
    %119 = vector.broadcast %117 : vector<1x512xf32> to vector<8x512xf32>
    %120 = arith.mulf %118, %119 : vector<8x512xf32>
    %121 = arith.addf %115, %120 : vector<8x512xf32>
    %122 = arith.addf %110, %121 : vector<8x512xf32>
    %123 = arith.negf %122 : vector<8x512xf32>
    %124 = math.exp %123 : vector<8x512xf32>
    %cst_43 = arith.constant 1.000000e+00 : f32
    %125 = vector.broadcast %cst_43 : f32 to vector<8x512xf32>
    %126 = arith.addf %125, %124 : vector<8x512xf32>
    %127 = arith.divf %125, %126 : vector<8x512xf32>
    %128 = arith.mulf %122, %127 : vector<8x512xf32>
    %129 = vector.extract_strided_slice %23 {offsets = [0, 0], sizes = [8, 1], strides = [1, 1]} : vector<8x2xf32> to vector<8x1xf32>
    %c0_44 = arith.constant 0 : index
    %c0_45 = arith.constant 0 : index
    %130 = vector.load %arg9[%c0_44, %c0_45] : memref<2x512xf32, #tpu.memory_space<vmem>>, vector<1x512xf32>
    %131 = vector.broadcast %129 : vector<8x1xf32> to vector<8x512xf32>
    %132 = vector.broadcast %130 : vector<1x512xf32> to vector<8x512xf32>
    %133 = arith.mulf %131, %132 : vector<8x512xf32>
    %134 = vector.extract_strided_slice %23 {offsets = [0, 1], sizes = [8, 1], strides = [1, 1]} : vector<8x2xf32> to vector<8x1xf32>
    %c1_46 = arith.constant 1 : index
    %c0_47 = arith.constant 0 : index
    %135 = vector.load %arg9[%c1_46, %c0_47] : memref<2x512xf32, #tpu.memory_space<vmem>>, vector<1x512xf32>
    %136 = vector.broadcast %134 : vector<8x1xf32> to vector<8x512xf32>
    %137 = vector.broadcast %135 : vector<1x512xf32> to vector<8x512xf32>
    %138 = arith.mulf %136, %137 : vector<8x512xf32>
    %139 = arith.addf %133, %138 : vector<8x512xf32>
    %140 = arith.addf %128, %139 : vector<8x512xf32>
    %c17_i32_48 = arith.constant 17 : i32
    %141 = tpu.dynamic_rotate %140 by %c17_i32_48 dim 1 : vector<8x512xf32>, i32 -> vector<8x512xf32>
    %c0_49 = arith.constant 0 : index
    %c0_50 = arith.constant 0 : index
    %142 = vector.load %arg8[%c0_49, %c0_50] : memref<9x512xf32, #tpu.memory_space<vmem>>, vector<1x512xf32>
    %143 = vector.broadcast %142 : vector<1x512xf32> to vector<8x512xf32>
    %144 = arith.mulf %141, %143 : vector<8x512xf32>
    %c16_i32_51 = arith.constant 16 : i32
    %145 = tpu.dynamic_rotate %140 by %c16_i32_51 dim 1 : vector<8x512xf32>, i32 -> vector<8x512xf32>
    %c1_52 = arith.constant 1 : index
    %c0_53 = arith.constant 0 : index
    %146 = vector.load %arg8[%c1_52, %c0_53] : memref<9x512xf32, #tpu.memory_space<vmem>>, vector<1x512xf32>
    %147 = vector.broadcast %146 : vector<1x512xf32> to vector<8x512xf32>
    %148 = arith.mulf %145, %147 : vector<8x512xf32>
    %c15_i32_54 = arith.constant 15 : i32
    %149 = tpu.dynamic_rotate %140 by %c15_i32_54 dim 1 : vector<8x512xf32>, i32 -> vector<8x512xf32>
    %c2_55 = arith.constant 2 : index
    %c0_56 = arith.constant 0 : index
    %150 = vector.load %arg8[%c2_55, %c0_56] : memref<9x512xf32, #tpu.memory_space<vmem>>, vector<1x512xf32>
    %151 = vector.broadcast %150 : vector<1x512xf32> to vector<8x512xf32>
    %152 = arith.mulf %149, %151 : vector<8x512xf32>
    %c1_i32_57 = arith.constant 1 : i32
    %153 = tpu.dynamic_rotate %140 by %c1_i32_57 dim 1 : vector<8x512xf32>, i32 -> vector<8x512xf32>
    %c3_58 = arith.constant 3 : index
    %c0_59 = arith.constant 0 : index
    %154 = vector.load %arg8[%c3_58, %c0_59] : memref<9x512xf32, #tpu.memory_space<vmem>>, vector<1x512xf32>
    %155 = vector.broadcast %154 : vector<1x512xf32> to vector<8x512xf32>
    %156 = arith.mulf %153, %155 : vector<8x512xf32>
    %c511_i32_60 = arith.constant 511 : i32
    %157 = tpu.dynamic_rotate %140 by %c511_i32_60 dim 1 : vector<8x512xf32>, i32 -> vector<8x512xf32>
    %c5_61 = arith.constant 5 : index
    %c0_62 = arith.constant 0 : index
    %158 = vector.load %arg8[%c5_61, %c0_62] : memref<9x512xf32, #tpu.memory_space<vmem>>, vector<1x512xf32>
    %159 = vector.broadcast %158 : vector<1x512xf32> to vector<8x512xf32>
    %160 = arith.mulf %157, %159 : vector<8x512xf32>
    %c497_i32_63 = arith.constant 497 : i32
    %161 = tpu.dynamic_rotate %140 by %c497_i32_63 dim 1 : vector<8x512xf32>, i32 -> vector<8x512xf32>
    %c6_64 = arith.constant 6 : index
    %c0_65 = arith.constant 0 : index
    %162 = vector.load %arg8[%c6_64, %c0_65] : memref<9x512xf32, #tpu.memory_space<vmem>>, vector<1x512xf32>
    %163 = vector.broadcast %162 : vector<1x512xf32> to vector<8x512xf32>
    %164 = arith.mulf %161, %163 : vector<8x512xf32>
    %c496_i32_66 = arith.constant 496 : i32
    %165 = tpu.dynamic_rotate %140 by %c496_i32_66 dim 1 : vector<8x512xf32>, i32 -> vector<8x512xf32>
    %c7_67 = arith.constant 7 : index
    %c0_68 = arith.constant 0 : index
    %166 = vector.load %arg8[%c7_67, %c0_68] : memref<9x512xf32, #tpu.memory_space<vmem>>, vector<1x512xf32>
    %167 = vector.broadcast %166 : vector<1x512xf32> to vector<8x512xf32>
    %168 = arith.mulf %165, %167 : vector<8x512xf32>
    %c495_i32_69 = arith.constant 495 : i32
    %169 = tpu.dynamic_rotate %140 by %c495_i32_69 dim 1 : vector<8x512xf32>, i32 -> vector<8x512xf32>
    %c8_70 = arith.constant 8 : index
    %c0_71 = arith.constant 0 : index
    %170 = vector.load %arg8[%c8_70, %c0_71] : memref<9x512xf32, #tpu.memory_space<vmem>>, vector<1x512xf32>
    %171 = vector.broadcast %170 : vector<1x512xf32> to vector<8x512xf32>
    %172 = arith.mulf %169, %171 : vector<8x512xf32>
    %173 = tpu.concatenate %144, %148, %152, %156, %140, %160, %164, %168, %172 in 0 : vector<8x512xf32>, vector<8x512xf32>, vector<8x512xf32>, vector<8x512xf32>, vector<8x512xf32>, vector<8x512xf32>, vector<8x512xf32>, vector<8x512xf32>, vector<8x512xf32> -> vector<72x512xf32>
    %c0_72 = arith.constant 0 : index
    %c0_73 = arith.constant 0 : index
    %174 = vector.load %arg4[%c0_72, %c0_73] : memref<8x72xf32, #tpu.memory_space<vmem>>, vector<8x72xf32>
    %cst_74 = arith.constant dense<0.000000e+00> : vector<8x512xf32>
    %175 = tpu.matmul %174, %173, %cst_74 {dimension_numbers = #tpu.dot_dimension_numbers<[1], [0], [0], [1], [0, 0, 1, 1], [], []>} : vector<8x72xf32>, vector<72x512xf32>, vector<8x512xf32> -> vector<8x512xf32>
    %176 = vector.broadcast %7 : vector<8x1xf32> to vector<8x512xf32>
    %177 = arith.addf %175, %176 : vector<8x512xf32>
    %c0_75 = arith.constant 0 : index
    %c0_76 = arith.constant 0 : index
    %178 = vector.load %arg9[%c0_75, %c0_76] : memref<2x512xf32, #tpu.memory_space<vmem>>, vector<1x512xf32>
    %179 = vector.broadcast %178 : vector<1x512xf32> to vector<8x512xf32>
    %180 = arith.mulf %177, %179 : vector<8x512xf32>
    %cst_77 = arith.constant dense<0.000000e+00> : vector<8xf32>
    %181 = vector.multi_reduction <add>, %180, %cst_77 [1] : vector<8x512xf32> to vector<8xf32>
    %182 = vector.shape_cast %181 : vector<8xf32> to vector<8x1xf32>
    %183 = arith.mulf %180, %177 : vector<8x512xf32>
    %cst_78 = arith.constant dense<0.000000e+00> : vector<8xf32>
    %184 = vector.multi_reduction <add>, %183, %cst_78 [1] : vector<8x512xf32> to vector<8xf32>
    %185 = vector.shape_cast %184 : vector<8xf32> to vector<8x1xf32>
    %c1_79 = arith.constant 1 : index
    %c0_80 = arith.constant 0 : index
    %186 = vector.load %arg9[%c1_79, %c0_80] : memref<2x512xf32, #tpu.memory_space<vmem>>, vector<1x512xf32>
    %187 = vector.broadcast %186 : vector<1x512xf32> to vector<8x512xf32>
    %188 = arith.mulf %177, %187 : vector<8x512xf32>
    %cst_81 = arith.constant dense<0.000000e+00> : vector<8xf32>
    %189 = vector.multi_reduction <add>, %188, %cst_81 [1] : vector<8x512xf32> to vector<8xf32>
    %190 = vector.shape_cast %189 : vector<8xf32> to vector<8x1xf32>
    %191 = arith.mulf %188, %177 : vector<8x512xf32>
    %cst_82 = arith.constant dense<0.000000e+00> : vector<8xf32>
    %192 = vector.multi_reduction <add>, %191, %cst_82 [1] : vector<8x512xf32> to vector<8xf32>
    %193 = vector.shape_cast %192 : vector<8xf32> to vector<8x1xf32>
    %194 = tpu.concatenate %182, %190 in 1 : vector<8x1xf32>, vector<8x1xf32> -> vector<8x2xf32>
    %195 = tpu.concatenate %185, %193 in 1 : vector<8x1xf32>, vector<8x1xf32> -> vector<8x2xf32>
    %196 = tpu.concatenate %194, %195 in 1 : vector<8x2xf32>, vector<8x2xf32> -> vector<8x4xf32>
    %cst_83 = arith.constant dense<0.000000e+00> : vector<8x4xf32>
    %197 = tpu.matmul %2, %196, %cst_83 {dimension_numbers = #tpu.dot_dimension_numbers<[1], [0], [0], [1], [0, 0, 1, 1], [], []>} : vector<8x8xf32>, vector<8x4xf32>, vector<8x4xf32> -> vector<8x4xf32>
    %198 = vector.extract_strided_slice %197 {offsets = [0, 0], sizes = [8, 2], strides = [1, 1]} : vector<8x4xf32> to vector<8x2xf32>
    %199 = vector.extract_strided_slice %197 {offsets = [0, 2], sizes = [8, 2], strides = [1, 1]} : vector<8x4xf32> to vector<8x2xf32>
    %200 = arith.mulf %198, %198 : vector<8x2xf32>
    %201 = arith.subf %199, %200 : vector<8x2xf32>
    %cst_84 = arith.constant 0.000000e+00 : f32
    %202 = vector.broadcast %cst_84 : f32 to vector<8x2xf32>
    %203 = arith.maximumf %201, %202 : vector<8x2xf32>
    %cst_85 = arith.constant 9.99999974E-6 : f32
    %204 = vector.broadcast %cst_85 : f32 to vector<8x2xf32>
    %205 = arith.addf %203, %204 : vector<8x2xf32>
    %206 = math.rsqrt %205 : vector<8x2xf32>
    %207 = vector.broadcast %8 : vector<8x1xf32> to vector<8x2xf32>
    %208 = arith.mulf %206, %207 : vector<8x2xf32>
    %209 = arith.mulf %198, %208 : vector<8x2xf32>
    %210 = vector.broadcast %9 : vector<8x1xf32> to vector<8x2xf32>
    %211 = arith.subf %210, %209 : vector<8x2xf32>
    %212 = vector.extract_strided_slice %208 {offsets = [0, 0], sizes = [8, 1], strides = [1, 1]} : vector<8x2xf32> to vector<8x1xf32>
    %c0_86 = arith.constant 0 : index
    %c0_87 = arith.constant 0 : index
    %213 = vector.load %arg9[%c0_86, %c0_87] : memref<2x512xf32, #tpu.memory_space<vmem>>, vector<1x512xf32>
    %214 = vector.broadcast %212 : vector<8x1xf32> to vector<8x512xf32>
    %215 = vector.broadcast %213 : vector<1x512xf32> to vector<8x512xf32>
    %216 = arith.mulf %214, %215 : vector<8x512xf32>
    %217 = vector.extract_strided_slice %208 {offsets = [0, 1], sizes = [8, 1], strides = [1, 1]} : vector<8x2xf32> to vector<8x1xf32>
    %c1_88 = arith.constant 1 : index
    %c0_89 = arith.constant 0 : index
    %218 = vector.load %arg9[%c1_88, %c0_89] : memref<2x512xf32, #tpu.memory_space<vmem>>, vector<1x512xf32>
    %219 = vector.broadcast %217 : vector<8x1xf32> to vector<8x512xf32>
    %220 = vector.broadcast %218 : vector<1x512xf32> to vector<8x512xf32>
    %221 = arith.mulf %219, %220 : vector<8x512xf32>
    %222 = arith.addf %216, %221 : vector<8x512xf32>
    %223 = arith.mulf %177, %222 : vector<8x512xf32>
    %224 = vector.extract_strided_slice %211 {offsets = [0, 0], sizes = [8, 1], strides = [1, 1]} : vector<8x2xf32> to vector<8x1xf32>
    %c0_90 = arith.constant 0 : index
    %c0_91 = arith.constant 0 : index
    %225 = vector.load %arg9[%c0_90, %c0_91] : memref<2x512xf32, #tpu.memory_space<vmem>>, vector<1x512xf32>
    %226 = vector.broadcast %224 : vector<8x1xf32> to vector<8x512xf32>
    %227 = vector.broadcast %225 : vector<1x512xf32> to vector<8x512xf32>
    %228 = arith.mulf %226, %227 : vector<8x512xf32>
    %229 = vector.extract_strided_slice %211 {offsets = [0, 1], sizes = [8, 1], strides = [1, 1]} : vector<8x2xf32> to vector<8x1xf32>
    %c1_92 = arith.constant 1 : index
    %c0_93 = arith.constant 0 : index
    %230 = vector.load %arg9[%c1_92, %c0_93] : memref<2x512xf32, #tpu.memory_space<vmem>>, vector<1x512xf32>
    %231 = vector.broadcast %229 : vector<8x1xf32> to vector<8x512xf32>
    %232 = vector.broadcast %230 : vector<1x512xf32> to vector<8x512xf32>
    %233 = arith.mulf %231, %232 : vector<8x512xf32>
    %234 = arith.addf %228, %233 : vector<8x512xf32>
    %235 = arith.addf %223, %234 : vector<8x512xf32>
    %236 = arith.negf %235 : vector<8x512xf32>
    %237 = math.exp %236 : vector<8x512xf32>
    %cst_94 = arith.constant 1.000000e+00 : f32
    %238 = vector.broadcast %cst_94 : f32 to vector<8x512xf32>
    %239 = arith.addf %238, %237 : vector<8x512xf32>
    %240 = arith.divf %238, %239 : vector<8x512xf32>
    %241 = arith.mulf %235, %240 : vector<8x512xf32>
    %242 = arith.addf %241, %64 : vector<8x512xf32>
    %c0_95 = arith.constant 0 : index
    %c0_96 = arith.constant 0 : index
    %c0_97 = arith.constant 0 : index
    %243 = vector.load %arg10[%c0_95, %c0_96, %c0_97] : memref<1x8x512xf32, #tpu.memory_space<vmem>>, vector<1x8x512xf32>
    %244 = vector.shape_cast %243 : vector<1x8x512xf32> to vector<8x512xf32>
    %245 = vector.shape_cast %242 : vector<8x512xf32> to vector<1x8x512xf32>
    tpu.vector_store %arg10[%c0_95, %c0_96, %c0_97], %245 {strides = array<i32>} : memref<1x8x512xf32, #tpu.memory_space<vmem>>, vector<1x8x512xf32>,
    return
  }
  func.func @transform_0(%arg0: i32) -> (i32, i32, i32) {
    %c0_i32 = arith.constant 0 : i32
    %c0_i32_0 = arith.constant 0 : i32
    %c0_i32_1 = arith.constant 0 : i32
    return %arg0, %c0_i32, %c0_i32_0 : i32, i32, i32
  }
  func.func @transform_1(%arg0: i32) -> (i32, i32, i32) {
    %c0_i32 = arith.constant 0 : i32
    %c0_i32_0 = arith.constant 0 : i32
    %c0_i32_1 = arith.constant 0 : i32
    return %arg0, %c0_i32, %c0_i32_0 : i32, i32, i32
  }
  func.func @transform_2(%arg0: i32) -> (i32, i32) {
    %c0_i32 = arith.constant 0 : i32
    %c0_i32_0 = arith.constant 0 : i32
    %c0_i32_1 = arith.constant 0 : i32
    return %c0_i32, %c0_i32_0 : i32, i32
  }
  func.func @transform_3(%arg0: i32) -> (i32, i32) {
    %c0_i32 = arith.constant 0 : i32
    %c0_i32_0 = arith.constant 0 : i32
    %c0_i32_1 = arith.constant 0 : i32
    return %c0_i32, %c0_i32_0 : i32, i32
  }
  func.func @transform_4(%arg0: i32) -> (i32, i32) {
    %c0_i32 = arith.constant 0 : i32
    %c0_i32_0 = arith.constant 0 : i32
    %c0_i32_1 = arith.constant 0 : i32
    return %c0_i32, %c0_i32_0 : i32, i32
  }
  func.func @transform_5(%arg0: i32) -> (i32, i32) {
    %c0_i32 = arith.constant 0 : i32
    %c0_i32_0 = arith.constant 0 : i32
    %c0_i32_1 = arith.constant 0 : i32
    return %c0_i32, %c0_i32_0 : i32, i32
  }
  func.func @transform_6(%arg0: i32) -> (i32, i32) {
    %c0_i32 = arith.constant 0 : i32
    %c0_i32_0 = arith.constant 0 : i32
    %c0_i32_1 = arith.constant 0 : i32
    return %c0_i32, %c0_i32_0 : i32, i32
  }
  func.func @transform_7(%arg0: i32) -> (i32, i32) {
    %c0_i32 = arith.constant 0 : i32
    %c0_i32_0 = arith.constant 0 : i32
    %c0_i32_1 = arith.constant 0 : i32
    return %c0_i32, %c0_i32_0 : i32, i32
  }
  func.func @transform_8(%arg0: i32) -> (i32, i32) {
    %c0_i32 = arith.constant 0 : i32
    %c0_i32_0 = arith.constant 0 : i32
    %c0_i32_1 = arith.constant 0 : i32
    return %c0_i32, %c0_i32_0 : i32, i32
  }
  func.func @transform_9(%arg0: i32) -> (i32, i32, i32) {
    %c0_i32 = arith.constant 0 : i32
    %c0_i32_0 = arith.constant 0 : i32
    %c0_i32_1 = arith.constant 0 : i32
    return %arg0, %c0_i32, %c0_i32_0 : i32, i32, i32
  }
}

module attributes {stable_mosaic.version = 11 : i64} {
  func.func @resblock_kernel(%arg0: i32, %arg1: memref<1x8x512xf32, #tpu.memory_space<vmem>>, %arg2: memref<1x32x2xf32, #tpu.memory_space<vmem>>, %arg3: memref<16x72xf32, #tpu.memory_space<vmem>>, %arg4: memref<8x72xf32, #tpu.memory_space<vmem>>, %arg5: memref<8x32xf32, #tpu.memory_space<vmem>>, %arg6: memref<8x8xf32, #tpu.memory_space<vmem>>, %arg7: memref<8x8xf32, #tpu.memory_space<vmem>>, %arg8: memref<9x512xf32, #tpu.memory_space<vmem>>, %arg9: memref<2x512xf32, #tpu.memory_space<vmem>>, %arg10: memref<1x8x512xf32, #tpu.memory_space<vmem>>) attributes {dimension_semantics = [#tpu.dimension_semantics<parallel>], iteration_bounds = array<i64: 1>, scalar_prefetch = 0 : i64, scratch_operands = 0 : i64, tpu.core_type = #tpu.core_type<tc>, window_params = [{transform_indices = @transform_0, window_bounds = array<i64: 1, 8, 512>}, {transform_indices = @transform_1, window_bounds = array<i64: 1, 32, 2>}, {pipeline_mode = #tpu.pipeline_mode<synchronous>, transform_indices = @transform_2, window_bounds = array<i64: 16, 72>}, {pipeline_mode = #tpu.pipeline_mode<synchronous>, transform_indices = @transform_3, window_bounds = array<i64: 8, 72>}, {pipeline_mode = #tpu.pipeline_mode<synchronous>, transform_indices = @transform_4, window_bounds = array<i64: 8, 32>}, {pipeline_mode = #tpu.pipeline_mode<synchronous>, transform_indices = @transform_5, window_bounds = array<i64: 8, 8>}, {pipeline_mode = #tpu.pipeline_mode<synchronous>, transform_indices = @transform_6, window_bounds = array<i64: 8, 8>}, {pipeline_mode = #tpu.pipeline_mode<synchronous>, transform_indices = @transform_7, window_bounds = array<i64: 9, 512>}, {pipeline_mode = #tpu.pipeline_mode<synchronous>, transform_indices = @transform_8, window_bounds = array<i64: 2, 512>}, {transform_indices = @transform_9, window_bounds = array<i64: 1, 8, 512>}]} {
    %c0 = arith.constant 0 : index
    %c0_0 = arith.constant 0 : index
    %c0_1 = arith.constant 0 : index
    %0 = vector.load %arg1[%c0, %c0_0, %c0_1] : memref<1x8x512xf32, #tpu.memory_space<vmem>>, vector<1x8x512xf32>
    %1 = vector.shape_cast %0 : vector<1x8x512xf32> to vector<8x512xf32>
    %c0_2 = arith.constant 0 : index
    %c0_3 = arith.constant 0 : index
    %2 = vector.load %arg7[%c0_2, %c0_3] : memref<8x8xf32, #tpu.memory_space<vmem>>, vector<8x8xf32>
    %c0_4 = arith.constant 0 : index
    %c0_5 = arith.constant 0 : index
    %3 = vector.load %arg6[%c0_4, %c0_5] : memref<8x8xf32, #tpu.memory_space<vmem>>, vector<8x8xf32>
    %4 = vector.extract_strided_slice %3 {offsets = [0, 0], sizes = [8, 1], strides = [1, 1]} : vector<8x8xf32> to vector<8x1xf32>
    %5 = vector.extract_strided_slice %3 {offsets = [0, 1], sizes = [8, 1], strides = [1, 1]} : vector<8x8xf32> to vector<8x1xf32>
    %6 = vector.extract_strided_slice %3 {offsets = [0, 2], sizes = [8, 1], strides = [1, 1]} : vector<8x8xf32> to vector<8x1xf32>
    %7 = vector.extract_strided_slice %3 {offsets = [0, 3], sizes = [8, 1], strides = [1, 1]} : vector<8x8xf32> to vector<8x1xf32>
    %8 = vector.extract_strided_slice %3 {offsets = [0, 4], sizes = [8, 1], strides = [1, 1]} : vector<8x8xf32> to vector<8x1xf32>
    %9 = vector.extract_strided_slice %3 {offsets = [0, 5], sizes = [8, 1], strides = [1, 1]} : vector<8x8xf32> to vector<8x1xf32>
    %10 = vector.extract_strided_slice %3 {offsets = [0, 6], sizes = [8, 1], strides = [1, 1]} : vector<8x8xf32> to vector<8x1xf32>
    %11 = vector.extract_strided_slice %3 {offsets = [0, 7], sizes = [8, 1], strides = [1, 1]} : vector<8x8xf32> to vector<8x1xf32>
    %c0_6 = arith.constant 0 : index
    %c0_7 = arith.constant 0 : index
    %c0_8 = arith.constant 0 : index
    %12 = vector.load %arg2[%c0_6, %c0_7, %c0_8] : memref<1x32x2xf32, #tpu.memory_space<vmem>>, vector<1x32x2xf32>
    %13 = vector.shape_cast %12 : vector<1x32x2xf32> to vector<32x2xf32>
    %14 = arith.negf %13 : vector<32x2xf32>
    %15 = math.exp %14 : vector<32x2xf32>
    %cst = arith.constant 1.000000e+00 : f32
    %16 = vector.broadcast %cst : f32 to vector<32x2xf32>
    %17 = arith.addf %16, %15 : vector<32x2xf32>
    %18 = arith.divf %16, %17 : vector<32x2xf32>
    %19 = arith.mulf %13, %18 : vector<32x2xf32>
    %c0_9 = arith.constant 0 : index
    %c0_10 = arith.constant 0 : index
    %20 = vector.load %arg5[%c0_9, %c0_10] : memref<8x32xf32, #tpu.memory_space<vmem>>, vector<8x32xf32>
    %cst_11 = arith.constant dense<0.000000e+00> : vector<8x2xf32>
    %21 = tpu.matmul %20, %19, %cst_11 {dimension_numbers = #tpu.dot_dimension_numbers<[1], [0], [0], [1], [0, 0, 1, 1], [], []>} : vector<8x32xf32>, vector<32x2xf32>, vector<8x2xf32> -> vector<8x2xf32>
    %22 = vector.broadcast %10 : vector<8x1xf32> to vector<8x2xf32>
    %23 = arith.addf %21, %22 : vector<8x2xf32>
    %c17_i32 = arith.constant 17 : i32
    %24 = tpu.dynamic_rotate %1 by %c17_i32 dim 1 : vector<8x512xf32>, i32 -> vector<8x512xf32>
    %c0_12 = arith.constant 0 : index
    %c0_13 = arith.constant 0 : index
    %25 = vector.load %arg8[%c0_12, %c0_13] : memref<9x512xf32, #tpu.memory_space<vmem>>, vector<1x512xf32>
    %26 = vector.broadcast %25 : vector<1x512xf32> to vector<8x512xf32>
    %27 = arith.mulf %24, %26 : vector<8x512xf32>
    %c16_i32 = arith.constant 16 : i32
    %28 = tpu.dynamic_rotate %1 by %c16_i32 dim 1 : vector<8x512xf32>, i32 -> vector<8x512xf32>
    %c1 = arith.constant 1 : index
    %c0_14 = arith.constant 0 : index
    %29 = vector.load %arg8[%c1, %c0_14] : memref<9x512xf32, #tpu.memory_space<vmem>>, vector<1x512xf32>
    %30 = vector.broadcast %29 : vector<1x512xf32> to vector<8x512xf32>
    %31 = arith.mulf %28, %30 : vector<8x512xf32>
    %c15_i32 = arith.constant 15 : i32
    %32 = tpu.dynamic_rotate %1 by %c15_i32 dim 1 : vector<8x512xf32>, i32 -> vector<8x512xf32>
    %c2 = arith.constant 2 : index
    %c0_15 = arith.constant 0 : index
    %33 = vector.load %arg8[%c2, %c0_15] : memref<9x512xf32, #tpu.memory_space<vmem>>, vector<1x512xf32>
    %34 = vector.broadcast %33 : vector<1x512xf32> to vector<8x512xf32>
    %35 = arith.mulf %32, %34 : vector<8x512xf32>
    %c1_i32 = arith.constant 1 : i32
    %36 = tpu.dynamic_rotate %1 by %c1_i32 dim 1 : vector<8x512xf32>, i32 -> vector<8x512xf32>
    %c3 = arith.constant 3 : index
    %c0_16 = arith.constant 0 : index
    %37 = vector.load %arg8[%c3, %c0_16] : memref<9x512xf32, #tpu.memory_space<vmem>>, vector<1x512xf32>
    %38 = vector.broadcast %37 : vector<1x512xf32> to vector<8x512xf32>
    %39 = arith.mulf %36, %38 : vector<8x512xf32>
    %c511_i32 = arith.constant 511 : i32
    %40 = tpu.dynamic_rotate %1 by %c511_i32 dim 1 : vector<8x512xf32>, i32 -> vector<8x512xf32>
    %c5 = arith.constant 5 : index
    %c0_17 = arith.constant 0 : index
    %41 = vector.load %arg8[%c5, %c0_17] : memref<9x512xf32, #tpu.memory_space<vmem>>, vector<1x512xf32>
    %42 = vector.broadcast %41 : vector<1x512xf32> to vector<8x512xf32>
    %43 = arith.mulf %40, %42 : vector<8x512xf32>
    %c497_i32 = arith.constant 497 : i32
    %44 = tpu.dynamic_rotate %1 by %c497_i32 dim 1 : vector<8x512xf32>, i32 -> vector<8x512xf32>
    %c6 = arith.constant 6 : index
    %c0_18 = arith.constant 0 : index
    %45 = vector.load %arg8[%c6, %c0_18] : memref<9x512xf32, #tpu.memory_space<vmem>>, vector<1x512xf32>
    %46 = vector.broadcast %45 : vector<1x512xf32> to vector<8x512xf32>
    %47 = arith.mulf %44, %46 : vector<8x512xf32>
    %c496_i32 = arith.constant 496 : i32
    %48 = tpu.dynamic_rotate %1 by %c496_i32 dim 1 : vector<8x512xf32>, i32 -> vector<8x512xf32>
    %c7 = arith.constant 7 : index
    %c0_19 = arith.constant 0 : index
    %49 = vector.load %arg8[%c7, %c0_19] : memref<9x512xf32, #tpu.memory_space<vmem>>, vector<1x512xf32>
    %50 = vector.broadcast %49 : vector<1x512xf32> to vector<8x512xf32>
    %51 = arith.mulf %48, %50 : vector<8x512xf32>
    %c495_i32 = arith.constant 495 : i32
    %52 = tpu.dynamic_rotate %1 by %c495_i32 dim 1 : vector<8x512xf32>, i32 -> vector<8x512xf32>
    %c8 = arith.constant 8 : index
    %c0_20 = arith.constant 0 : index
    %53 = vector.load %arg8[%c8, %c0_20] : memref<9x512xf32, #tpu.memory_space<vmem>>, vector<1x512xf32>
    %54 = vector.broadcast %53 : vector<1x512xf32> to vector<8x512xf32>
    %55 = arith.mulf %52, %54 : vector<8x512xf32>
    %56 = tpu.concatenate %27, %31, %35, %39, %1, %43, %47, %51, %55 in 0 : vector<8x512xf32>, vector<8x512xf32>, vector<8x512xf32>, vector<8x512xf32>, vector<8x512xf32>, vector<8x512xf32>, vector<8x512xf32>, vector<8x512xf32>, vector<8x512xf32> -> vector<72x512xf32>
    %c0_21 = arith.constant 0 : index
    %c0_22 = arith.constant 0 : index
    %57 = vector.load %arg3[%c0_21, %c0_22] : memref<16x72xf32, #tpu.memory_space<vmem>>, vector<16x72xf32>
    %cst_23 = arith.constant dense<0.000000e+00> : vector<16x512xf32>
    %58 = tpu.matmul %57, %56, %cst_23 {dimension_numbers = #tpu.dot_dimension_numbers<[1], [0], [0], [1], [0, 0, 1, 1], [], []>} : vector<16x72xf32>, vector<72x512xf32>, vector<16x512xf32> -> vector<16x512xf32>
    %59 = vector.extract_strided_slice %58 {offsets = [0, 0], sizes = [8, 512], strides = [1, 1]} : vector<16x512xf32> to vector<8x512xf32>
    %60 = vector.broadcast %4 : vector<8x1xf32> to vector<8x512xf32>
    %61 = arith.addf %59, %60 : vector<8x512xf32>
    %62 = vector.extract_strided_slice %58 {offsets = [8, 0], sizes = [8, 512], strides = [1, 1]} : vector<16x512xf32> to vector<8x512xf32>
    %63 = vector.broadcast %11 : vector<8x1xf32> to vector<8x512xf32>
    %64 = arith.addf %62, %63 : vector<8x512xf32>
    %c0_24 = arith.constant 0 : index
    %c0_25 = arith.constant 0 : index
    %65 = vector.load %arg9[%c0_24, %c0_25] : memref<2x512xf32, #tpu.memory_space<vmem>>, vector<1x512xf32>
    %66 = vector.broadcast %65 : vector<1x512xf32> to vector<8x512xf32>
    %67 = arith.mulf %61, %66 : vector<8x512xf32>
    %cst_26 = arith.constant dense<0.000000e+00> : vector<8xf32>
    %68 = vector.multi_reduction <add>, %67, %cst_26 [1] : vector<8x512xf32> to vector<8xf32>
    %69 = vector.shape_cast %68 : vector<8xf32> to vector<8x1xf32>
    %70 = arith.mulf %67, %61 : vector<8x512xf32>
    %cst_27 = arith.constant dense<0.000000e+00> : vector<8xf32>
    %71 = vector.multi_reduction <add>, %70, %cst_27 [1] : vector<8x512xf32> to vector<8xf32>
    %72 = vector.shape_cast %71 : vector<8xf32> to vector<8x1xf32>
    %c1_28 = arith.constant 1 : index
    %c0_29 = arith.constant 0 : index
    %73 = vector.load %arg9[%c1_28, %c0_29] : memref<2x512xf32, #tpu.memory_space<vmem>>, vector<1x512xf32>
    %74 = vector.broadcast %73 : vector<1x512xf32> to vector<8x512xf32>
    %75 = arith.mulf %61, %74 : vector<8x512xf32>
    %cst_30 = arith.constant dense<0.000000e+00> : vector<8xf32>
    %76 = vector.multi_reduction <add>, %75, %cst_30 [1] : vector<8x512xf32> to vector<8xf32>
    %77 = vector.shape_cast %76 : vector<8xf32> to vector<8x1xf32>
    %78 = arith.mulf %75, %61 : vector<8x512xf32>
    %cst_31 = arith.constant dense<0.000000e+00> : vector<8xf32>
    %79 = vector.multi_reduction <add>, %78, %cst_31 [1] : vector<8x512xf32> to vector<8xf32>
    %80 = vector.shape_cast %79 : vector<8xf32> to vector<8x1xf32>
    %81 = tpu.concatenate %69, %77 in 1 : vector<8x1xf32>, vector<8x1xf32> -> vector<8x2xf32>
    %82 = tpu.concatenate %72, %80 in 1 : vector<8x1xf32>, vector<8x1xf32> -> vector<8x2xf32>
    %83 = tpu.concatenate %81, %82 in 1 : vector<8x2xf32>, vector<8x2xf32> -> vector<8x4xf32>
    %cst_32 = arith.constant dense<0.000000e+00> : vector<8x4xf32>
    %84 = tpu.matmul %2, %83, %cst_32 {dimension_numbers = #tpu.dot_dimension_numbers<[1], [0], [0], [1], [0, 0, 1, 1], [], []>} : vector<8x8xf32>, vector<8x4xf32>, vector<8x4xf32> -> vector<8x4xf32>
    %85 = vector.extract_strided_slice %84 {offsets = [0, 0], sizes = [8, 2], strides = [1, 1]} : vector<8x4xf32> to vector<8x2xf32>
    %86 = vector.extract_strided_slice %84 {offsets = [0, 2], sizes = [8, 2], strides = [1, 1]} : vector<8x4xf32> to vector<8x2xf32>
    %87 = arith.mulf %85, %85 : vector<8x2xf32>
    %88 = arith.subf %86, %87 : vector<8x2xf32>
    %cst_33 = arith.constant 0.000000e+00 : f32
    %89 = vector.broadcast %cst_33 : f32 to vector<8x2xf32>
    %90 = arith.maximumf %88, %89 : vector<8x2xf32>
    %cst_34 = arith.constant 9.99999974E-6 : f32
    %91 = vector.broadcast %cst_34 : f32 to vector<8x2xf32>
    %92 = arith.addf %90, %91 : vector<8x2xf32>
    %93 = math.rsqrt %92 : vector<8x2xf32>
    %94 = vector.broadcast %5 : vector<8x1xf32> to vector<8x2xf32>
    %95 = arith.mulf %93, %94 : vector<8x2xf32>
    %96 = arith.mulf %85, %95 : vector<8x2xf32>
    %97 = vector.broadcast %6 : vector<8x1xf32> to vector<8x2xf32>
    %98 = arith.subf %97, %96 : vector<8x2xf32>
    %99 = vector.extract_strided_slice %95 {offsets = [0, 0], sizes = [8, 1], strides = [1, 1]} : vector<8x2xf32> to vector<8x1xf32>
    %c0_35 = arith.constant 0 : index
    %c0_36 = arith.constant 0 : index
    %100 = vector.load %arg9[%c0_35, %c0_36] : memref<2x512xf32, #tpu.memory_space<vmem>>, vector<1x512xf32>
    %101 = vector.broadcast %99 : vector<8x1xf32> to vector<8x512xf32>
    %102 = vector.broadcast %100 : vector<1x512xf32> to vector<8x512xf32>
    %103 = arith.mulf %101, %102 : vector<8x512xf32>
    %104 = vector.extract_strided_slice %95 {offsets = [0, 1], sizes = [8, 1], strides = [1, 1]} : vector<8x2xf32> to vector<8x1xf32>
    %c1_37 = arith.constant 1 : index
    %c0_38 = arith.constant 0 : index
    %105 = vector.load %arg9[%c1_37, %c0_38] : memref<2x512xf32, #tpu.memory_space<vmem>>, vector<1x512xf32>
    %106 = vector.broadcast %104 : vector<8x1xf32> to vector<8x512xf32>
    %107 = vector.broadcast %105 : vector<1x512xf32> to vector<8x512xf32>
    %108 = arith.mulf %106, %107 : vector<8x512xf32>
    %109 = arith.addf %103, %108 : vector<8x512xf32>
    %110 = arith.mulf %61, %109 : vector<8x512xf32>
    %111 = vector.extract_strided_slice %98 {offsets = [0, 0], sizes = [8, 1], strides = [1, 1]} : vector<8x2xf32> to vector<8x1xf32>
    %c0_39 = arith.constant 0 : index
    %c0_40 = arith.constant 0 : index
    %112 = vector.load %arg9[%c0_39, %c0_40] : memref<2x512xf32, #tpu.memory_space<vmem>>, vector<1x512xf32>
    %113 = vector.broadcast %111 : vector<8x1xf32> to vector<8x512xf32>
    %114 = vector.broadcast %112 : vector<1x512xf32> to vector<8x512xf32>
    %115 = arith.mulf %113, %114 : vector<8x512xf32>
    %116 = vector.extract_strided_slice %98 {offsets = [0, 1], sizes = [8, 1], strides = [1, 1]} : vector<8x2xf32> to vector<8x1xf32>
    %c1_41 = arith.constant 1 : index
    %c0_42 = arith.constant 0 : index
    %117 = vector.load %arg9[%c1_41, %c0_42] : memref<2x512xf32, #tpu.memory_space<vmem>>, vector<1x512xf32>
    %118 = vector.broadcast %116 : vector<8x1xf32> to vector<8x512xf32>
    %119 = vector.broadcast %117 : vector<1x512xf32> to vector<8x512xf32>
    %120 = arith.mulf %118, %119 : vector<8x512xf32>
    %121 = arith.addf %115, %120 : vector<8x512xf32>
    %122 = arith.addf %110, %121 : vector<8x512xf32>
    %123 = arith.negf %122 : vector<8x512xf32>
    %124 = math.exp %123 : vector<8x512xf32>
    %cst_43 = arith.constant 1.000000e+00 : f32
    %125 = vector.broadcast %cst_43 : f32 to vector<8x512xf32>
    %126 = arith.addf %125, %124 : vector<8x512xf32>
    %127 = arith.divf %125, %126 : vector<8x512xf32>
    %128 = arith.mulf %122, %127 : vector<8x512xf32>
    %129 = vector.extract_strided_slice %23 {offsets = [0, 0], sizes = [8, 1], strides = [1, 1]} : vector<8x2xf32> to vector<8x1xf32>
    %c0_44 = arith.constant 0 : index
    %c0_45 = arith.constant 0 : index
    %130 = vector.load %arg9[%c0_44, %c0_45] : memref<2x512xf32, #tpu.memory_space<vmem>>, vector<1x512xf32>
    %131 = vector.broadcast %129 : vector<8x1xf32> to vector<8x512xf32>
    %132 = vector.broadcast %130 : vector<1x512xf32> to vector<8x512xf32>
    %133 = arith.mulf %131, %132 : vector<8x512xf32>
    %134 = vector.extract_strided_slice %23 {offsets = [0, 1], sizes = [8, 1], strides = [1, 1]} : vector<8x2xf32> to vector<8x1xf32>
    %c1_46 = arith.constant 1 : index
    %c0_47 = arith.constant 0 : index
    %135 = vector.load %arg9[%c1_46, %c0_47] : memref<2x512xf32, #tpu.memory_space<vmem>>, vector<1x512xf32>
    %136 = vector.broadcast %134 : vector<8x1xf32> to vector<8x512xf32>
    %137 = vector.broadcast %135 : vector<1x512xf32> to vector<8x512xf32>
    %138 = arith.mulf %136, %137 : vector<8x512xf32>
    %139 = arith.addf %133, %138 : vector<8x512xf32>
    %140 = arith.addf %128, %139 : vector<8x512xf32>
    %c17_i32_48 = arith.constant 17 : i32
    %141 = tpu.dynamic_rotate %140 by %c17_i32_48 dim 1 : vector<8x512xf32>, i32 -> vector<8x512xf32>
    %c0_49 = arith.constant 0 : index
    %c0_50 = arith.constant 0 : index
    %142 = vector.load %arg8[%c0_49, %c0_50] : memref<9x512xf32, #tpu.memory_space<vmem>>, vector<1x512xf32>
    %143 = vector.broadcast %142 : vector<1x512xf32> to vector<8x512xf32>
    %144 = arith.mulf %141, %143 : vector<8x512xf32>
    %c16_i32_51 = arith.constant 16 : i32
    %145 = tpu.dynamic_rotate %140 by %c16_i32_51 dim 1 : vector<8x512xf32>, i32 -> vector<8x512xf32>
    %c1_52 = arith.constant 1 : index
    %c0_53 = arith.constant 0 : index
    %146 = vector.load %arg8[%c1_52, %c0_53] : memref<9x512xf32, #tpu.memory_space<vmem>>, vector<1x512xf32>
    %147 = vector.broadcast %146 : vector<1x512xf32> to vector<8x512xf32>
    %148 = arith.mulf %145, %147 : vector<8x512xf32>
    %c15_i32_54 = arith.constant 15 : i32
    %149 = tpu.dynamic_rotate %140 by %c15_i32_54 dim 1 : vector<8x512xf32>, i32 -> vector<8x512xf32>
    %c2_55 = arith.constant 2 : index
    %c0_56 = arith.constant 0 : index
    %150 = vector.load %arg8[%c2_55, %c0_56] : memref<9x512xf32, #tpu.memory_space<vmem>>, vector<1x512xf32>
    %151 = vector.broadcast %150 : vector<1x512xf32> to vector<8x512xf32>
    %152 = arith.mulf %149, %151 : vector<8x512xf32>
    %c1_i32_57 = arith.constant 1 : i32
    %153 = tpu.dynamic_rotate %140 by %c1_i32_57 dim 1 : vector<8x512xf32>, i32 -> vector<8x512xf32>
    %c3_58 = arith.constant 3 : index
    %c0_59 = arith.constant 0 : index
    %154 = vector.load %arg8[%c3_58, %c0_59] : memref<9x512xf32, #tpu.memory_space<vmem>>, vector<1x512xf32>
    %155 = vector.broadcast %154 : vector<1x512xf32> to vector<8x512xf32>
    %156 = arith.mulf %153, %155 : vector<8x512xf32>
    %c511_i32_60 = arith.constant 511 : i32
    %157 = tpu.dynamic_rotate %140 by %c511_i32_60 dim 1 : vector<8x512xf32>, i32 -> vector<8x512xf32>
    %c5_61 = arith.constant 5 : index
    %c0_62 = arith.constant 0 : index
    %158 = vector.load %arg8[%c5_61, %c0_62] : memref<9x512xf32, #tpu.memory_space<vmem>>, vector<1x512xf32>
    %159 = vector.broadcast %158 : vector<1x512xf32> to vector<8x512xf32>
    %160 = arith.mulf %157, %159 : vector<8x512xf32>
    %c497_i32_63 = arith.constant 497 : i32
    %161 = tpu.dynamic_rotate %140 by %c497_i32_63 dim 1 : vector<8x512xf32>, i32 -> vector<8x512xf32>
    %c6_64 = arith.constant 6 : index
    %c0_65 = arith.constant 0 : index
    %162 = vector.load %arg8[%c6_64, %c0_65] : memref<9x512xf32, #tpu.memory_space<vmem>>, vector<1x512xf32>
    %163 = vector.broadcast %162 : vector<1x512xf32> to vector<8x512xf32>
    %164 = arith.mulf %161, %163 : vector<8x512xf32>
    %c496_i32_66 = arith.constant 496 : i32
    %165 = tpu.dynamic_rotate %140 by %c496_i32_66 dim 1 : vector<8x512xf32>, i32 -> vector<8x512xf32>
    %c7_67 = arith.constant 7 : index
    %c0_68 = arith.constant 0 : index
    %166 = vector.load %arg8[%c7_67, %c0_68] : memref<9x512xf32, #tpu.memory_space<vmem>>, vector<1x512xf32>
    %167 = vector.broadcast %166 : vector<1x512xf32> to vector<8x512xf32>
    %168 = arith.mulf %165, %167 : vector<8x512xf32>
    %c495_i32_69 = arith.constant 495 : i32
    %169 = tpu.dynamic_rotate %140 by %c495_i32_69 dim 1 : vector<8x512xf32>, i32 -> vector<8x512xf32>
    %c8_70 = arith.constant 8 : index
    %c0_71 = arith.constant 0 : index
    %170 = vector.load %arg8[%c8_70, %c0_71] : memref<9x512xf32, #tpu.memory_space<vmem>>, vector<1x512xf32>
    %171 = vector.broadcast %170 : vector<1x512xf32> to vector<8x512xf32>
    %172 = arith.mulf %169, %171 : vector<8x512xf32>
    %173 = tpu.concatenate %144, %148, %152, %156, %140, %160, %164, %168, %172 in 0 : vector<8x512xf32>, vector<8x512xf32>, vector<8x512xf32>, vector<8x512xf32>, vector<8x512xf32>, vector<8x512xf32>, vector<8x512xf32>, vector<8x512xf32>, vector<8x512xf32> -> vector<72x512xf32>
    %c0_72 = arith.constant 0 : index
    %c0_73 = arith.constant 0 : index
    %174 = vector.load %arg4[%c0_72, %c0_73] : memref<8x72xf32, #tpu.memory_space<vmem>>, vector<8x72xf32>
    %cst_74 = arith.constant dense<0.000000e+00> : vector<8x512xf32>
    %175 = tpu.matmul %174, %173, %cst_74 {dimension_numbers = #tpu.dot_dimension_numbers<[1], [0], [0], [1], [0, 0, 1, 1], [], []>} : vector<8x72xf32>, vector<72x512xf32>, vector<8x512xf32> -> vector<8x512xf32>
    %176 = vector.broadcast %7 : vector<8x1xf32> to vector<8x512xf32>
    %177 = arith.addf %175, %176 : vector<8x512xf32>
    %c0_75 = arith.constant 0 : index
    %c0_76 = arith.constant 0 : index
    %178 = vector.load %arg9[%c0_75, %c0_76] : memref<2x512xf32, #tpu.memory_space<vmem>>, vector<1x512xf32>
    %179 = vector.broadcast %178 : vector<1x512xf32> to vector<8x512xf32>
    %180 = arith.mulf %177, %179 : vector<8x512xf32>
    %cst_77 = arith.constant dense<0.000000e+00> : vector<8xf32>
    %181 = vector.multi_reduction <add>, %180, %cst_77 [1] : vector<8x512xf32> to vector<8xf32>
    %182 = vector.shape_cast %181 : vector<8xf32> to vector<8x1xf32>
    %183 = arith.mulf %180, %177 : vector<8x512xf32>
    %cst_78 = arith.constant dense<0.000000e+00> : vector<8xf32>
    %184 = vector.multi_reduction <add>, %183, %cst_78 [1] : vector<8x512xf32> to vector<8xf32>
    %185 = vector.shape_cast %184 : vector<8xf32> to vector<8x1xf32>
    %c1_79 = arith.constant 1 : index
    %c0_80 = arith.constant 0 : index
    %186 = vector.load %arg9[%c1_79, %c0_80] : memref<2x512xf32, #tpu.memory_space<vmem>>, vector<1x512xf32>
    %187 = vector.broadcast %186 : vector<1x512xf32> to vector<8x512xf32>
    %188 = arith.mulf %177, %187 : vector<8x512xf32>
    %cst_81 = arith.constant dense<0.000000e+00> : vector<8xf32>
    %189 = vector.multi_reduction <add>, %188, %cst_81 [1] : vector<8x512xf32> to vector<8xf32>
    %190 = vector.shape_cast %189 : vector<8xf32> to vector<8x1xf32>
    %191 = arith.mulf %188, %177 : vector<8x512xf32>
    %cst_82 = arith.constant dense<0.000000e+00> : vector<8xf32>
    %192 = vector.multi_reduction <add>, %191, %cst_82 [1] : vector<8x512xf32> to vector<8xf32>
    %193 = vector.shape_cast %192 : vector<8xf32> to vector<8x1xf32>
    %194 = tpu.concatenate %182, %190 in 1 : vector<8x1xf32>, vector<8x1xf32> -> vector<8x2xf32>
    %195 = tpu.concatenate %185, %193 in 1 : vector<8x1xf32>, vector<8x1xf32> -> vector<8x2xf32>
    %196 = tpu.concatenate %194, %195 in 1 : vector<8x2xf32>, vector<8x2xf32> -> vector<8x4xf32>
    %cst_83 = arith.constant dense<0.000000e+00> : vector<8x4xf32>
    %197 = tpu.matmul %2, %196, %cst_83 {dimension_numbers = #tpu.dot_dimension_numbers<[1], [0], [0], [1], [0, 0, 1, 1], [], []>} : vector<8x8xf32>, vector<8x4xf32>, vector<8x4xf32> -> vector<8x4xf32>
    %198 = vector.extract_strided_slice %197 {offsets = [0, 0], sizes = [8, 2], strides = [1, 1]} : vector<8x4xf32> to vector<8x2xf32>
    %199 = vector.extract_strided_slice %197 {offsets = [0, 2], sizes = [8, 2], strides = [1, 1]} : vector<8x4xf32> to vector<8x2xf32>
    %200 = arith.mulf %198, %198 : vector<8x2xf32>
    %201 = arith.subf %199, %200 : vector<8x2xf32>
    %cst_84 = arith.constant 0.000000e+00 : f32
    %202 = vector.broadcast %cst_84 : f32 to vector<8x2xf32>
    %203 = arith.maximumf %201, %202 : vector<8x2xf32>
    %cst_85 = arith.constant 9.99999974E-6 : f32
    %204 = vector.broadcast %cst_85 : f32 to vector<8x2xf32>
    %205 = arith.addf %203, %204 : vector<8x2xf32>
    %206 = math.rsqrt %205 : vector<8x2xf32>
    %207 = vector.broadcast %8 : vector<8x1xf32> to vector<8x2xf32>
    %208 = arith.mulf %206, %207 : vector<8x2xf32>
    %209 = arith.mulf %198, %208 : vector<8x2xf32>
    %210 = vector.broadcast %9 : vector<8x1xf32> to vector<8x2xf32>
    %211 = arith.subf %210, %209 : vector<8x2xf32>
    %212 = vector.extract_strided_slice %208 {offsets = [0, 0], sizes = [8, 1], strides = [1, 1]} : vector<8x2xf32> to vector<8x1xf32>
    %c0_86 = arith.constant 0 : index
    %c0_87 = arith.constant 0 : index
    %213 = vector.load %arg9[%c0_86, %c0_87] : memref<2x512xf32, #tpu.memory_space<vmem>>, vector<1x512xf32>
    %214 = vector.broadcast %212 : vector<8x1xf32> to vector<8x512xf32>
    %215 = vector.broadcast %213 : vector<1x512xf32> to vector<8x512xf32>
    %216 = arith.mulf %214, %215 : vector<8x512xf32>
    %217 = vector.extract_strided_slice %208 {offsets = [0, 1], sizes = [8, 1], strides = [1, 1]} : vector<8x2xf32> to vector<8x1xf32>
    %c1_88 = arith.constant 1 : index
    %c0_89 = arith.constant 0 : index
    %218 = vector.load %arg9[%c1_88, %c0_89] : memref<2x512xf32, #tpu.memory_space<vmem>>, vector<1x512xf32>
    %219 = vector.broadcast %217 : vector<8x1xf32> to vector<8x512xf32>
    %220 = vector.broadcast %218 : vector<1x512xf32> to vector<8x512xf32>
    %221 = arith.mulf %219, %220 : vector<8x512xf32>
    %222 = arith.addf %216, %221 : vector<8x512xf32>
    %223 = arith.mulf %177, %222 : vector<8x512xf32>
    %224 = vector.extract_strided_slice %211 {offsets = [0, 0], sizes = [8, 1], strides = [1, 1]} : vector<8x2xf32> to vector<8x1xf32>
    %c0_90 = arith.constant 0 : index
    %c0_91 = arith.constant 0 : index
    %225 = vector.load %arg9[%c0_90, %c0_91] : memref<2x512xf32, #tpu.memory_space<vmem>>, vector<1x512xf32>
    %226 = vector.broadcast %224 : vector<8x1xf32> to vector<8x512xf32>
    %227 = vector.broadcast %225 : vector<1x512xf32> to vector<8x512xf32>
    %228 = arith.mulf %226, %227 : vector<8x512xf32>
    %229 = vector.extract_strided_slice %211 {offsets = [0, 1], sizes = [8, 1], strides = [1, 1]} : vector<8x2xf32> to vector<8x1xf32>
    %c1_92 = arith.constant 1 : index
    %c0_93 = arith.constant 0 : index
    %230 = vector.load %arg9[%c1_92, %c0_93] : memref<2x512xf32, #tpu.memory_space<vmem>>, vector<1x512xf32>
    %231 = vector.broadcast %229 : vector<8x1xf32> to vector<8x512xf32>
    %232 = vector.broadcast %230 : vector<1x512xf32> to vector<8x512xf32>
    %233 = arith.mulf %231, %232 : vector<8x512xf32>
    %234 = arith.addf %228, %233 : vector<8x512xf32>
    %235 = arith.addf %223, %234 : vector<8x512xf32>
    %236 = arith.negf %235 : vector<8x512xf32>
    %237 = math.exp %236 : vector<8x512xf32>
    %cst_94 = arith.constant 1.000000e+00 : f32
    %238 = vector.broadcast %cst_94 : f32 to vector<8x512xf32>
    %239 = arith.addf %238, %237 : vector<8x512xf32>
    %240 = arith.divf %238, %239 : vector<8x512xf32>
    %241 = arith.mulf %235, %240 : vector<8x512xf32>
    %242 = arith.addf %241, %64 : vector<8x512xf32>
    %c0_95 = arith.constant 0 : index
    %c0_96 = arith.constant 0 : index
    %c0_97 = arith.constant 0 : index
    %243 = vector.load %arg10[%c0_95, %c0_96, %c0_97] : memref<1x8x512xf32, #tpu.memory_space<vmem>>, vector<1x8x512xf32>
    %244 = vector.shape_cast %243 : vector<1x8x512xf32> to vector<8x512xf32>
    %245 = vector.shape_cast %242 : vector<8x512xf32> to vector<1x8x512xf32>
    tpu.vector_store %arg10[%c0_95, %c0_96, %c0_97], %245 {strides = array<i32>} : memref<1x8x512xf32, #tpu.memory_space<vmem>>, vector<1x8x512xf32>,
    return
  }
  func.func @transform_0(%arg0: i32) -> (i32, i32, i32) {
    %c0_i32 = arith.constant 0 : i32
    %c0_i32_0 = arith.constant 0 : i32
    %c0_i32_1 = arith.constant 0 : i32
    return %arg0, %c0_i32, %c0_i32_0 : i32, i32, i32
  }
  func.func @transform_1(%arg0: i32) -> (i32, i32, i32) {
    %c0_i32 = arith.constant 0 : i32
    %c0_i32_0 = arith.constant 0 : i32
    %c0_i32_1 = arith.constant 0 : i32
    return %arg0, %c0_i32, %c0_i32_0 : i32, i32, i32
  }
  func.func @transform_2(%arg0: i32) -> (i32, i32) {
    %c0_i32 = arith.constant 0 : i32
    %c0_i32_0 = arith.constant 0 : i32
    %c0_i32_1 = arith.constant 0 : i32
    return %c0_i32, %c0_i32_0 : i32, i32
  }
  func.func @transform_3(%arg0: i32) -> (i32, i32) {
    %c0_i32 = arith.constant 0 : i32
    %c0_i32_0 = arith.constant 0 : i32
    %c0_i32_1 = arith.constant 0 : i32
    return %c0_i32, %c0_i32_0 : i32, i32
  }
  func.func @transform_4(%arg0: i32) -> (i32, i32) {
    %c0_i32 = arith.constant 0 : i32
    %c0_i32_0 = arith.constant 0 : i32
    %c0_i32_1 = arith.constant 0 : i32
    return %c0_i32, %c0_i32_0 : i32, i32
  }
  func.func @transform_5(%arg0: i32) -> (i32, i32) {
    %c0_i32 = arith.constant 0 : i32
    %c0_i32_0 = arith.constant 0 : i32
    %c0_i32_1 = arith.constant 0 : i32
    return %c0_i32, %c0_i32_0 : i32, i32
  }
  func.func @transform_6(%arg0: i32) -> (i32, i32) {
    %c0_i32 = arith.constant 0 : i32
    %c0_i32_0 = arith.constant 0 : i32
    %c0_i32_1 = arith.constant 0 : i32
    return %c0_i32, %c0_i32_0 : i32, i32
  }
  func.func @transform_7(%arg0: i32) -> (i32, i32) {
    %c0_i32 = arith.constant 0 : i32
    %c0_i32_0 = arith.constant 0 : i32
    %c0_i32_1 = arith.constant 0 : i32
    return %c0_i32, %c0_i32_0 : i32, i32
  }
  func.func @transform_8(%arg0: i32) -> (i32, i32) {
    %c0_i32 = arith.constant 0 : i32
    %c0_i32_0 = arith.constant 0 : i32
    %c0_i32_1 = arith.constant 0 : i32
    return %c0_i32, %c0_i32_0 : i32, i32
  }
  func.func @transform_9(%arg0: i32) -> (i32, i32, i32) {
    %c0_i32 = arith.constant 0 : i32
    %c0_i32_0 = arith.constant 0 : i32
    %c0_i32_1 = arith.constant 0 : i32
    return %arg0, %c0_i32, %c0_i32_0 : i32, i32, i32
  }
}

</mosaic_0001>

<llo_original>
// kernel: tpu_custom_call.1
$region0: #{tpu_custom_call.1}
  #allocation0 [shape = 'u32[]', space=smem, size = 0x4, offset = 0x4, fixed_abs, tag = 'smem constant byte address 0x4 - core index']
  #allocation1 [shape = 'u32[72,128]{1,0:T(1,128)}', space=vmem, size = 0x9000, scoped, tag = 'internal scratch']
  %s0 = inlined_call_operand.vmem [shape: f32[1,8,512], index: 0, kind: input, shape index: {}]
  %s1 = inlined_call_operand.vmem [shape: f32[1,32,2], index: 1, kind: input, shape index: {}]
  %s2 = inlined_call_operand.hbm [shape: f32[16,72], index: 2, kind: input, shape index: {}]
  %s3 = inlined_call_operand.hbm [shape: f32[8,72], index: 3, kind: input, shape index: {}]
  %s4 = inlined_call_operand.hbm [shape: f32[8,32], index: 4, kind: input, shape index: {}]
  %s5 = inlined_call_operand.hbm [shape: f32[8,8], index: 5, kind: input, shape index: {}]
  %s6 = inlined_call_operand.hbm [shape: f32[8,8], index: 6, kind: input, shape index: {}]
  %s7 = inlined_call_operand.hbm [shape: f32[9,512], index: 7, kind: input, shape index: {}]
  %s8 = inlined_call_operand.vmem [shape: f32[2,512], index: 8, kind: input, shape index: {}]
  %s9 = inlined_call_operand.hbm [shape: f32[1,8,512], index: 9, kind: output, shape index: {}]
  %s10 = sld [smem:[#allocation0]]
  $region70: #{tpu_custom_call.1} parent=0
    _
  %s12 = ssub.s32 1, %s10
  %s13 = scalar_select 0, %s12, %s10
  $region1: #{tpu_custom_call.1} parent=0
    #allocation2 [shape = 'u8[8192]{0}', space=vmem, size = 0x2000, scoped, tag = 'input window, operand 2, single buffered']
    #allocation3 [shape = 's32[1]{0}', space=sflag, size = 0x4, scoped, tag = 'scoped memory for tpu_custom_call.1']
    #allocation4 [shape = 's32[1]{0}', space=sflag, size = 0x4, scoped, tag = 'scoped memory for tpu_custom_call.1']
    #allocation5 [shape = 'u8[4096]{0}', space=vmem, size = 0x1000, scoped, tag = 'input window, operand 3, single buffered']
    #allocation6 [shape = 's32[1]{0}', space=sflag, size = 0x4, scoped, tag = 'scoped memory for tpu_custom_call.1']
    #allocation7 [shape = 'u8[4096]{0}', space=vmem, size = 0x1000, scoped, tag = 'input window, operand 4, single buffered']
    #allocation8 [shape = 'u8[4096]{0}', space=vmem, size = 0x1000, scoped, tag = 'input window, operand 5, single buffered']
    #allocation9 [shape = 's32[1]{0}', space=sflag, size = 0x4, scoped, tag = 'scoped memory for tpu_custom_call.1']
    #allocation10 [shape = 'u8[4096]{0}', space=vmem, size = 0x1000, scoped, tag = 'input window, operand 6, single buffered']
    #allocation11 [shape = 'u8[32768]{0}', space=vmem, size = 0x8000, scoped, tag = 'input window, operand 7, single buffered']
    #allocation12 [shape = 's32[1]{0}', space=sflag, size = 0x4, scoped, tag = 'scoped memory for tpu_custom_call.1']
    #allocation13 [shape = 'u8[16384]{0}', space=vmem, size = 0x4000, scoped, tag = 'output window, operand 0, single buffered']
    %14 = vsyncpa [#allocation3], 0
    %15 = vsyncpa [#allocation6], 0
    %16 = vsyncpa [#allocation9], 0
    %17 = vsyncpa [#allocation12], 0
    %18 = vsyncpa [#allocation4], 0
    // Predicated region
    $region2: #{tpu_custom_call.1} parent=1 // pred_check
      _
    $region3: #{tpu_custom_call.1} parent=1 // pred_check_branch
      %20 = sbr.rel (0) target = $region5
    $region4: #{tpu_custom_call.1} parent=1 // pred_region
      _
    $region5: #{tpu_custom_call.1} parent=1 // pred_fallthru
      _
    // Predicated region
    $region6: #{tpu_custom_call.1} parent=1 // pred_check
      _
    $region7: #{tpu_custom_call.1} parent=1 // pred_check_branch
      %22 = sbr.rel (0) target = $region9
    $region8: #{tpu_custom_call.1} parent=1 // pred_region
      _
    $region9: #{tpu_custom_call.1} parent=1 // pred_fallthru
      _
    // Predicated region
    $region10: #{tpu_custom_call.1} parent=1 // pred_check
      _
    $region11: #{tpu_custom_call.1} parent=1 // pred_check_branch
      %24 = sbr.rel (0) target = $region13
    $region12: #{tpu_custom_call.1} parent=1 // pred_region
      %26 = vsyncadd [#allocation3], 0
      %s27 = sshll.u32 %s2, 4
      %s28 = int_to_ptr.hbm [resolvable:$true] %s27
      %s29 = sshll.u32 [#allocation2], 4
      %s30 = int_to_ptr.vmem [resolvable:$true] %s29
      %35 = dma.hbm_to_vmem [thread:$0]  %s28, 256, %s30, [#allocation3], 128, 128, 8
    $region13: #{tpu_custom_call.1} parent=1 // pred_fallthru
      _
    // Predicated region
    $region14: #{tpu_custom_call.1} parent=1 // pred_check
      _
    $region15: #{tpu_custom_call.1} parent=1 // pred_check_branch
      %37 = sbr.rel (0) target = $region17
    $region16: #{tpu_custom_call.1} parent=1 // pred_region
      %39 = vsyncadd [#allocation6], 0
      %s41 = sshll.u32 %s3, 4
      %s42 = int_to_ptr.hbm [resolvable:$true] %s41
      %s43 = sshll.u32 [#allocation5], 4
      %s44 = int_to_ptr.vmem [resolvable:$true] %s43
      %46 = dma.hbm_to_vmem [thread:$0]  %s42, 128, %s44, [#allocation6]
    $region17: #{tpu_custom_call.1} parent=1 // pred_fallthru
      _
    // Predicated region
    $region18: #{tpu_custom_call.1} parent=1 // pred_check
      _
    $region19: #{tpu_custom_call.1} parent=1 // pred_check_branch
      %48 = sbr.rel (0) target = $region21
    $region20: #{tpu_custom_call.1} parent=1 // pred_region
      %50 = vsyncadd [#allocation6], 0
      %s52 = sshll.u32 %s4, 4
      %s53 = int_to_ptr.hbm [resolvable:$true] %s52
      %s54 = sshll.u32 [#allocation7], 4
      %s55 = int_to_ptr.vmem [resolvable:$true] %s54
      %57 = dma.hbm_to_vmem [thread:$0]  %s53, 128, %s55, [#allocation6]
    $region21: #{tpu_custom_call.1} parent=1 // pred_fallthru
      _
    // Predicated region
    $region22: #{tpu_custom_call.1} parent=1 // pred_check
      _
    $region23: #{tpu_custom_call.1} parent=1 // pred_check_branch
      %59 = sbr.rel (0) target = $region25
    $region24: #{tpu_custom_call.1} parent=1 // pred_region
      %61 = vsyncadd [#allocation9], 0
      %s63 = sshll.u32 %s5, 4
      %s64 = int_to_ptr.hbm [resolvable:$true] %s63
      %s65 = sshll.u32 [#allocation8], 4
      %s66 = int_to_ptr.vmem [resolvable:$true] %s65
      %68 = dma.hbm_to_vmem [thread:$0]  %s64, 128, %s66, [#allocation9]
    $region25: #{tpu_custom_call.1} parent=1 // pred_fallthru
      _
    // Predicated region
    $region26: #{tpu_custom_call.1} parent=1 // pred_check
      _
    $region27: #{tpu_custom_call.1} parent=1 // pred_check_branch
      %70 = sbr.rel (0) target = $region29
    $region28: #{tpu_custom_call.1} parent=1 // pred_region
      %72 = vsyncadd [#allocation9], 0
      %s74 = sshll.u32 %s6, 4
      %s75 = int_to_ptr.hbm [resolvable:$true] %s74
      %s76 = sshll.u32 [#allocation10], 4
      %s77 = int_to_ptr.vmem [resolvable:$true] %s76
      %79 = dma.hbm_to_vmem [thread:$0]  %s75, 128, %s77, [#allocation9]
    $region29: #{tpu_custom_call.1} parent=1 // pred_fallthru
      _
    // Predicated region
    $region30: #{tpu_custom_call.1} parent=1 // pred_check
      _
    $region31: #{tpu_custom_call.1} parent=1 // pred_check_branch
      %81 = sbr.rel (0) target = $region33
    $region32: #{tpu_custom_call.1} parent=1 // pred_region
      %83 = vsyncadd [#allocation12], 0
      %s84 = sshll.u32 %s7, 4
      %s85 = int_to_ptr.hbm [resolvable:$true] %s84
      %s86 = sshll.u32 [#allocation11], 4
      %s87 = int_to_ptr.vmem [resolvable:$true] %s86
      %92 = dma.hbm_to_vmem [thread:$0]  %s85, 1024, %s87, [#allocation12], 512, 512, 32
    $region33: #{tpu_custom_call.1} parent=1 // pred_fallthru
      _
    // Predicated region
    $region34: #{tpu_custom_call.1} parent=1 // pred_check
      _
    $region35: #{tpu_custom_call.1} parent=1 // pred_check_branch
      %94 = sbr.rel (0) target = $region37
    $region36: #{tpu_custom_call.1} parent=1 // pred_region
      _
    $region37: #{tpu_custom_call.1} parent=1 // pred_fallthru
      _
    // Predicated region
    $region38: #{tpu_custom_call.1} parent=1 // pred_check
      _
    $region39: #{tpu_custom_call.1} parent=1 // pred_check_branch
      %96 = sbr.rel (0) target = $region41
    $region40: #{tpu_custom_call.1} parent=1 // pred_region
      %98 = dma.done [#allocation3], 256
    $region41: #{tpu_custom_call.1} parent=1 // pred_fallthru
      _
    // Predicated region
    $region42: #{tpu_custom_call.1} parent=1 // pred_check
      _
    $region43: #{tpu_custom_call.1} parent=1 // pred_check_branch
      %100 = sbr.rel (0) target = $region45
    $region44: #{tpu_custom_call.1} parent=1 // pred_region
      %102 = dma.done [#allocation6], 128
    $region45: #{tpu_custom_call.1} parent=1 // pred_fallthru
      _
    // Predicated region
    $region46: #{tpu_custom_call.1} parent=1 // pred_check
      _
    $region47: #{tpu_custom_call.1} parent=1 // pred_check_branch
      %104 = sbr.rel (0) target = $region49
    $region48: #{tpu_custom_call.1} parent=1 // pred_region
      %106 = dma.done [#allocation6], 128
    $region49: #{tpu_custom_call.1} parent=1 // pred_fallthru
      _
    // Predicated region
    $region50: #{tpu_custom_call.1} parent=1 // pred_check
      _
    $region51: #{tpu_custom_call.1} parent=1 // pred_check_branch
      %108 = sbr.rel (0) target = $region53
    $region52: #{tpu_custom_call.1} parent=1 // pred_region
      %110 = dma.done [#allocation9], 128
    $region53: #{tpu_custom_call.1} parent=1 // pred_fallthru
      _
    // Predicated region
    $region54: #{tpu_custom_call.1} parent=1 // pred_check
      _
    $region55: #{tpu_custom_call.1} parent=1 // pred_check_branch
      %112 = sbr.rel (0) target = $region57
    $region56: #{tpu_custom_call.1} parent=1 // pred_region
      %114 = dma.done [#allocation9], 128
    $region57: #{tpu_custom_call.1} parent=1 // pred_fallthru
      _
    // Predicated region
    $region58: #{tpu_custom_call.1} parent=1 // pred_check
      _
    $region59: #{tpu_custom_call.1} parent=1 // pred_check_branch
      %116 = sbr.rel (0) target = $region61
    $region60: #{tpu_custom_call.1} parent=1 // pred_region
      %118 = dma.done [#allocation12], 1024
    $region61: #{tpu_custom_call.1} parent=1 // pred_fallthru
      _
    %v119 = vld [vmem:[%s0] sm:$0xff]
    %v120 = vld [vmem:[%s0 + $0x8] sm:$0xff]
    %v121 = vld [vmem:[%s0 + $0x10] sm:$0xff]
    %v122 = vld [vmem:[%s0 + $0x18] sm:$0xff]
    %v123 = vld [vmem:[#allocation10] sm:$0xff]
    %v124 = vld [vmem:[#allocation8] sm:$0xff]
    %v125 = vld [vmem:[%s1] sm:$0xff]
    %v126 = vld [vmem:[%s1 + $0x8] sm:$0xff]
    %v127 = vld [vmem:[%s1 + $0x10] sm:$0xff]
    %v128 = vld [vmem:[%s1 + $0x18] sm:$0xff]
    %v129 = vxor.u32 %v125, 2147483648
    %v130 = vxor.u32 %v126, 2147483648
    %v131 = vxor.u32 %v127, 2147483648
    %v132 = vxor.u32 %v128, 2147483648
    %v133 = vmul.f32 %v129, 1.442695
    %v134 = vpow.pop %v133
    %v135 = vmul.f32 %v130, 1.442695
    %v136 = vpow.pop %v135
    %v137 = vmul.f32 %v131, 1.442695
    %v138 = vpow.pop %v137
    %v139 = vmul.f32 %v132, 1.442695
    %v140 = vpow.pop %v139
    %v141 = vadd.f32 %v134, 1.0
    %v142 = vadd.f32 %v136, 1.0
    %v143 = vadd.f32 %v138, 1.0
    %v144 = vadd.f32 %v140, 1.0
    %v145 = vrcp.pop %v141
    %v146 = vmul.f32 %v141, %v145
    %v147 = vsub.f32 1.0, %v146
    %v148 = vmul.f32 %v145, %v147
    %v149 = vadd.f32 %v145, %v148
    %vm150 = vweird.f32 %v141
    %vm151 = vweird.f32 %v145
    %vm152 = vmor %vm150, %vm151
    %v153 = vsel %vm152, %v145, %v149
    %v154 = vand.u32 2147483647, %v141
    %vm155 = vcmp.eq.f32.partialorder %v154, 8.507059e+37
    %v156 = vand.u32 %v141, 2147483648
    %v157 = vor.u32 1.1754944e-38, %v156
    %v158 = vsel %vm155, %v157, %v153
    %v159 = vmul.f32 1.0, %v158
    %v160 = vrcp.pop %v142
    %v161 = vmul.f32 %v142, %v160
    %v162 = vsub.f32 1.0, %v161
    %v163 = vmul.f32 %v160, %v162
    %v164 = vadd.f32 %v160, %v163
    %vm165 = vweird.f32 %v142
    %vm166 = vweird.f32 %v160
    %vm167 = vmor %vm165, %vm166
    %v168 = vsel %vm167, %v160, %v164
    %v169 = vand.u32 2147483647, %v142
    %vm170 = vcmp.eq.f32.partialorder %v169, 8.507059e+37
    %v171 = vand.u32 %v142, 2147483648
    %v172 = vor.u32 1.1754944e-38, %v171
    %v173 = vsel %vm170, %v172, %v168
    %v174 = vmul.f32 1.0, %v173
    %v175 = vrcp.pop %v143
    %v176 = vmul.f32 %v143, %v175
    %v177 = vsub.f32 1.0, %v176
    %v178 = vmul.f32 %v175, %v177
    %v179 = vadd.f32 %v175, %v178
    %vm180 = vweird.f32 %v143
    %vm181 = vweird.f32 %v175
    %vm182 = vmor %vm180, %vm181
    %v183 = vsel %vm182, %v175, %v179
    %v184 = vand.u32 2147483647, %v143
    %vm185 = vcmp.eq.f32.partialorder %v184, 8.507059e+37
    %v186 = vand.u32 %v143, 2147483648
    %v187 = vor.u32 1.1754944e-38, %v186
    %v188 = vsel %vm185, %v187, %v183
    %v189 = vmul.f32 1.0, %v188
    %v190 = vrcp.pop %v144
    %v191 = vmul.f32 %v144, %v190
    %v192 = vsub.f32 1.0, %v191
    %v193 = vmul.f32 %v190, %v192
    %v194 = vadd.f32 %v190, %v193
    %vm195 = vweird.f32 %v144
    %vm196 = vweird.f32 %v190
    %vm197 = vmor %vm195, %vm196
    %v198 = vsel %vm197, %v190, %v194
    %v199 = vand.u32 2147483647, %v144
    %vm200 = vcmp.eq.f32.partialorder %v199, 8.507059e+37
    %v201 = vand.u32 %v144, 2147483648
    %v202 = vor.u32 1.1754944e-38, %v201
    %v203 = vsel %vm200, %v202, %v198
    %v204 = vmul.f32 1.0, %v203
    %v205 = vmul.f32 %v125, %v159
    %v206 = vmul.f32 %v126, %v174
    %v207 = vmul.f32 %v127, %v189
    %v208 = vmul.f32 %v128, %v204
    %v209 = vld [vmem:[#allocation7] sm:$0xff]
    %211 = vset.pattern.permute.xlu0 6
    %212 = vperm.xlu0 %211, %v124
    %v213 = vpop.permute.xlu0 %212
    %vm215 = vcmask 261120
    %v217 = vsel %vm215, %v209, 0
    %219 = vmatpush.msra.mxu0 0.0
    %220 = vmatpush.msra.mxu0 0.0
    %221 = vmatpush.msra.mxu0 0.0
    %222 = vmatpush.msra.mxu0 0.0
    %223 = vmatpush.msra.mxu0 0.0
    %224 = vmatpush.msra.mxu0 0.0
    %225 = vmatpush.msra.mxu0 0.0
    %226 = vmatpush.msra.mxu0 0.0
    %227 = vmatpush.msra.mxu0 0.0
    %228 = vmatpush.msra.mxu0 0.0
    %229 = vmatpush.msra.mxu0 0.0
    %230 = vmatpush.msra.mxu0 0.0
    %231 = vmatpush.msra.mxu0 %v208
    %232 = vmatpush.msra.mxu0 %v207
    %233 = vmatpush.msra.mxu0 %v206
    %234 = vmatpush.msra.mxu0 %v205
    %235 = vmatmul.f32.gmra.mxu0 %v217
    %v236 = vpop.f32.mrf.mxu0
    %v237 = vadd.f32 %v213, %v236
    %238 = vdwg.mxu0
    %239 = vrot.lane.b32.xlu0 %v119, 17
    %v240 = vpop.permute.xlu0 %239
    %241 = vrot.lane.b32.xlu0 %v120, 17
    %v242 = vpop.permute.xlu0 %241
    %243 = vrot.lane.b32.xlu0 %v121, 17
    %v244 = vpop.permute.xlu0 %243
    %245 = vrot.lane.b32.xlu0 %v122, 17
    %v246 = vpop.permute.xlu0 %245
    %v247 = vlaneseq
    %v248 = vand.u32 %v247, 127
    %vm249 = vcmp.lt.s32.totalorder %v248, 17
    %v250 = vsel %vm249, %v244, %v246
    %v251 = vsel %vm249, %v242, %v244
    %v252 = vsel %vm249, %v240, %v242
    %v253 = vsel %vm249, %v246, %v240
    %v254 = vld [vmem:[#allocation11] ss:$8 sm:$0xf]
    %v256 = vperm.slane %v254, 0
    %v257 = vperm.slane %v254, 1
    %v258 = vperm.slane %v254, 2
    %v259 = vperm.slane %v254, 3
    %v264 = vmul.f32 %v253, %v256
    %v265 = vmul.f32 %v252, %v257
    %v266 = vmul.f32 %v251, %v258
    %v267 = vmul.f32 %v250, %v259
    %268 = vrot.lane.b32.xlu0 %v119, 16
    %v269 = vpop.permute.xlu0 %268
    %270 = vrot.lane.b32.xlu0 %v120, 16
    %v271 = vpop.permute.xlu0 %270
    %272 = vrot.lane.b32.xlu0 %v121, 16
    %v273 = vpop.permute.xlu0 %272
    %274 = vrot.lane.b32.xlu0 %v122, 16
    %v275 = vpop.permute.xlu0 %274
    %vm276 = vcmp.lt.s32.totalorder %v248, 16
    %v277 = vsel %vm276, %v273, %v275
    %v278 = vsel %vm276, %v271, %v273
    %v279 = vsel %vm276, %v269, %v271
    %v280 = vsel %vm276, %v275, %v269
    %s281 = scalar_lea.vmem [#allocation11], 1
    %v282 = vld [vmem:[%s281] ss:$8 sm:$0xf]
    %v284 = vperm.slane %v282, 0
    %v285 = vperm.slane %v282, 1
    %v286 = vperm.slane %v282, 2
    %v287 = vperm.slane %v282, 3
    %v292 = vmul.f32 %v280, %v284
    %v293 = vmul.f32 %v279, %v285
    %v294 = vmul.f32 %v278, %v286
    %v295 = vmul.f32 %v277, %v287
    %296 = vrot.lane.b32.xlu0 %v119, 15
    %v297 = vpop.permute.xlu0 %296
    %298 = vrot.lane.b32.xlu0 %v120, 15
    %v299 = vpop.permute.xlu0 %298
    %300 = vrot.lane.b32.xlu0 %v121, 15
    %v301 = vpop.permute.xlu0 %300
    %302 = vrot.lane.b32.xlu0 %v122, 15
    %v303 = vpop.permute.xlu0 %302
    %vm304 = vcmp.lt.s32.totalorder %v248, 15
    %v305 = vsel %vm304, %v301, %v303
    %v306 = vsel %vm304, %v299, %v301
    %v307 = vsel %vm304, %v297, %v299
    %v308 = vsel %vm304, %v303, %v297
    %s309 = scalar_lea.vmem [#allocation11], 2
    %v310 = vld [vmem:[%s309] ss:$8 sm:$0xf]
    %v312 = vperm.slane %v310, 0
    %v313 = vperm.slane %v310, 1
    %v314 = vperm.slane %v310, 2
    %v315 = vperm.slane %v310, 3
    %v320 = vmul.f32 %v308, %v312
    %v321 = vmul.f32 %v307, %v313
    %v322 = vmul.f32 %v306, %v314
    %v323 = vmul.f32 %v305, %v315
    %324 = vrot.lane.b32.xlu0 %v119, 1
    %v325 = vpop.permute.xlu0 %324
    %326 = vrot.lane.b32.xlu0 %v120, 1
    %v327 = vpop.permute.xlu0 %326
    %328 = vrot.lane.b32.xlu0 %v121, 1
    %v329 = vpop.permute.xlu0 %328
    %330 = vrot.lane.b32.xlu0 %v122, 1
    %v331 = vpop.permute.xlu0 %330
    %vm332 = vcmp.lt.s32.totalorder %v248, 1
    %v333 = vsel %vm332, %v329, %v331
    %v334 = vsel %vm332, %v327, %v329
    %v335 = vsel %vm332, %v325, %v327
    %v336 = vsel %vm332, %v331, %v325
    %s337 = scalar_lea.vmem [#allocation11], 3
    %v338 = vld [vmem:[%s337] ss:$8 sm:$0xf]
    %v340 = vperm.slane %v338, 0
    %v341 = vperm.slane %v338, 1
    %v342 = vperm.slane %v338, 2
    %v343 = vperm.slane %v338, 3
    %v348 = vmul.f32 %v336, %v340
    %v349 = vmul.f32 %v335, %v341
    %v350 = vmul.f32 %v334, %v342
    %v351 = vmul.f32 %v333, %v343
    %352 = vrot.lane.b32.xlu0 %v119, 127
    %v353 = vpop.permute.xlu0 %352
    %354 = vrot.lane.b32.xlu0 %v120, 127
    %v355 = vpop.permute.xlu0 %354
    %356 = vrot.lane.b32.xlu0 %v121, 127
    %v357 = vpop.permute.xlu0 %356
    %358 = vrot.lane.b32.xlu0 %v122, 127
    %v359 = vpop.permute.xlu0 %358
    %vm360 = vcmp.lt.s32.totalorder %v248, 127
    %v361 = vsel %vm360, %v357, %v359
    %v362 = vsel %vm360, %v355, %v357
    %v363 = vsel %vm360, %v353, %v355
    %v364 = vsel %vm360, %v359, %v353
    %s365 = scalar_lea.vmem [#allocation11], 5
    %v366 = vld [vmem:[%s365] ss:$8 sm:$0xf]
    %v368 = vperm.slane %v366, 0
    %v369 = vperm.slane %v366, 1
    %v370 = vperm.slane %v366, 2
    %v371 = vperm.slane %v366, 3
    %v376 = vmul.f32 %v363, %v368
    %v377 = vmul.f32 %v362, %v369
    %v378 = vmul.f32 %v361, %v370
    %v379 = vmul.f32 %v364, %v371
    %380 = vrot.lane.b32.xlu0 %v119, 113
    %v381 = vpop.permute.xlu0 %380
    %382 = vrot.lane.b32.xlu0 %v120, 113
    %v383 = vpop.permute.xlu0 %382
    %384 = vrot.lane.b32.xlu0 %v121, 113
    %v385 = vpop.permute.xlu0 %384
    %386 = vrot.lane.b32.xlu0 %v122, 113
    %v387 = vpop.permute.xlu0 %386
    %vm388 = vcmp.lt.s32.totalorder %v248, 113
    %v389 = vsel %vm388, %v385, %v387
    %v390 = vsel %vm388, %v383, %v385
    %v391 = vsel %vm388, %v381, %v383
    %v392 = vsel %vm388, %v387, %v381
    %s393 = scalar_lea.vmem [#allocation11], 6
    %v394 = vld [vmem:[%s393] ss:$8 sm:$0xf]
    %v396 = vperm.slane %v394, 0
    %v397 = vperm.slane %v394, 1
    %v398 = vperm.slane %v394, 2
    %v399 = vperm.slane %v394, 3
    %v404 = vmul.f32 %v391, %v396
    %v405 = vmul.f32 %v390, %v397
    %v406 = vmul.f32 %v389, %v398
    %v407 = vmul.f32 %v392, %v399
    %408 = vrot.lane.b32.xlu0 %v119, 112
    %v409 = vpop.permute.xlu0 %408
    %410 = vrot.lane.b32.xlu0 %v120, 112
    %v411 = vpop.permute.xlu0 %410
    %412 = vrot.lane.b32.xlu0 %v121, 112
    %v413 = vpop.permute.xlu0 %412
    %414 = vrot.lane.b32.xlu0 %v122, 112
    %v415 = vpop.permute.xlu0 %414
    %vm416 = vcmp.lt.s32.totalorder %v248, 112
    %v417 = vsel %vm416, %v413, %v415
    %v418 = vsel %vm416, %v411, %v413
    %v419 = vsel %vm416, %v409, %v411
    %v420 = vsel %vm416, %v415, %v409
    %s421 = scalar_lea.vmem [#allocation11], 7
    %v422 = vld [vmem:[%s421] ss:$8 sm:$0xf]
    %v424 = vperm.slane %v422, 0
    %v425 = vperm.slane %v422, 1
    %v426 = vperm.slane %v422, 2
    %v427 = vperm.slane %v422, 3
    %v432 = vmul.f32 %v419, %v424
    %v433 = vmul.f32 %v418, %v425
    %v434 = vmul.f32 %v417, %v426
    %v435 = vmul.f32 %v420, %v427
    %436 = vrot.lane.b32.xlu0 %v119, 111
    %v437 = vpop.permute.xlu0 %436
    %438 = vrot.lane.b32.xlu0 %v120, 111
    %v439 = vpop.permute.xlu0 %438
    %440 = vrot.lane.b32.xlu0 %v121, 111
    %v441 = vpop.permute.xlu0 %440
    %442 = vrot.lane.b32.xlu0 %v122, 111
    %v443 = vpop.permute.xlu0 %442
    %vm444 = vcmp.lt.s32.totalorder %v248, 111
    %v445 = vsel %vm444, %v441, %v443
    %v446 = vsel %vm444, %v439, %v441
    %v447 = vsel %vm444, %v437, %v439
    %v448 = vsel %vm444, %v443, %v437
    %s449 = scalar_lea.vmem [#allocation11], 32
    %v450 = vld [vmem:[%s449] ss:$8 sm:$0xf]
    %v452 = vperm.slane %v450, 0
    %v453 = vperm.slane %v450, 1
    %v454 = vperm.slane %v450, 2
    %v455 = vperm.slane %v450, 3
    %v460 = vmul.f32 %v447, %v452
    %v461 = vmul.f32 %v446, %v453
    %v462 = vmul.f32 %v445, %v454
    %v463 = vmul.f32 %v448, %v455
    %v464 = vld [vmem:[#allocation2] sm:$0xff]
    %v465 = vld [vmem:[#allocation2 + $0x8] sm:$0xff]
    %vm466 = vcmask 588800
    %v468 = vsel %vm466, %v464, 0
    %v471 = vsel %vm466, %v465, 0
    %473 = vmatpush.msra.mxu0 0.0
    %474 = vmatpush.msra.mxu0 0.0
    %475 = vmatpush.msra.mxu0 0.0
    %476 = vmatpush.msra.mxu0 0.0
    %477 = vmatpush.msra.mxu0 0.0
    %478 = vmatpush.msra.mxu0 0.0
    %479 = vmatpush.msra.mxu0 0.0
    %480 = vmatpush.msra.mxu0 %v460
    %481 = vmatpush.msra.mxu0 %v432
    %482 = vmatpush.msra.mxu0 %v404
    %483 = vmatpush.msra.mxu0 %v376
    %484 = vmatpush.msra.mxu0 %v119
    %485 = vmatpush.msra.mxu0 %v348
    %486 = vmatpush.msra.mxu0 %v320
    %487 = vmatpush.msra.mxu0 %v292
    %488 = vmatpush.msra.mxu0 %v264
    %489 = vmatmul.f32.gmra.mxu0 %v468
    %v490 = vpop.f32.mrf.mxu0
    %v491 = vadd.f32 0.0, %v490
    %492 = vmatmul.f32.gmra.mxu0 %v471
    %v493 = vpop.f32.mrf.mxu0
    %v494 = vadd.f32 0.0, %v493
    %495 = vdwg.mxu0
    %496 = vmatpush.msra.mxu0 0.0
    %497 = vmatpush.msra.mxu0 0.0
    %498 = vmatpush.msra.mxu0 0.0
    %499 = vmatpush.msra.mxu0 0.0
    %500 = vmatpush.msra.mxu0 0.0
    %501 = vmatpush.msra.mxu0 0.0
    %502 = vmatpush.msra.mxu0 0.0
    %503 = vmatpush.msra.mxu0 %v461
    %504 = vmatpush.msra.mxu0 %v433
    %505 = vmatpush.msra.mxu0 %v405
    %506 = vmatpush.msra.mxu0 %v377
    %507 = vmatpush.msra.mxu0 %v120
    %508 = vmatpush.msra.mxu0 %v349
    %509 = vmatpush.msra.mxu0 %v321
    %510 = vmatpush.msra.mxu0 %v293
    %511 = vmatpush.msra.mxu0 %v265
    %512 = vmatmul.f32.gmra.mxu0 %v468
    %v513 = vpop.f32.mrf.mxu0
    %v514 = vadd.f32 0.0, %v513
    %515 = vmatmul.f32.gmra.mxu0 %v471
    %v516 = vpop.f32.mrf.mxu0
    %v517 = vadd.f32 0.0, %v516
    %518 = vdwg.mxu0
    %519 = vmatpush.msra.mxu0 0.0
    %520 = vmatpush.msra.mxu0 0.0
    %521 = vmatpush.msra.mxu0 0.0
    %522 = vmatpush.msra.mxu0 0.0
    %523 = vmatpush.msra.mxu0 0.0
    %524 = vmatpush.msra.mxu0 0.0
    %525 = vmatpush.msra.mxu0 0.0
    %526 = vmatpush.msra.mxu0 %v462
    %527 = vmatpush.msra.mxu0 %v434
    %528 = vmatpush.msra.mxu0 %v406
    %529 = vmatpush.msra.mxu0 %v378
    %530 = vmatpush.msra.mxu0 %v121
    %531 = vmatpush.msra.mxu0 %v350
    %532 = vmatpush.msra.mxu0 %v322
    %533 = vmatpush.msra.mxu0 %v294
    %534 = vmatpush.msra.mxu0 %v266
    %535 = vmatmul.f32.gmra.mxu0 %v468
    %v536 = vpop.f32.mrf.mxu0
    %v537 = vadd.f32 0.0, %v536
    %538 = vmatmul.f32.gmra.mxu0 %v471
    %v539 = vpop.f32.mrf.mxu0
    %v540 = vadd.f32 0.0, %v539
    %541 = vdwg.mxu0
    %542 = vmatpush.msra.mxu0 0.0
    %543 = vmatpush.msra.mxu0 0.0
    %544 = vmatpush.msra.mxu0 0.0
    %545 = vmatpush.msra.mxu0 0.0
    %546 = vmatpush.msra.mxu0 0.0
    %547 = vmatpush.msra.mxu0 0.0
    %548 = vmatpush.msra.mxu0 0.0
    %549 = vmatpush.msra.mxu0 %v463
    %550 = vmatpush.msra.mxu0 %v435
    %551 = vmatpush.msra.mxu0 %v407
    %552 = vmatpush.msra.mxu0 %v379
    %553 = vmatpush.msra.mxu0 %v122
    %554 = vmatpush.msra.mxu0 %v351
    %555 = vmatpush.msra.mxu0 %v323
    %556 = vmatpush.msra.mxu0 %v295
    %557 = vmatpush.msra.mxu0 %v267
    %558 = vmatmul.f32.gmra.mxu0 %v468
    %v559 = vpop.f32.mrf.mxu0
    %v560 = vadd.f32 0.0, %v559
    %561 = vmatmul.f32.gmra.mxu0 %v471
    %v562 = vpop.f32.mrf.mxu0
    %v563 = vadd.f32 0.0, %v562
    %564 = vdwg.mxu0
    %565 = vset.pattern.permute.xlu0 0
    %566 = vperm.xlu0 %565, %v124
    %v567 = vpop.permute.xlu0 %566
    %v569 = vadd.f32 %v491, %v567
    %v570 = vadd.f32 %v514, %v567
    %v571 = vadd.f32 %v537, %v567
    %v572 = vadd.f32 %v560, %v567
    %573 = vset.pattern.permute.xlu0 7
    %574 = vperm.xlu0 %573, %v124
    %v575 = vpop.permute.xlu0 %574
    %v577 = vadd.f32 %v494, %v575
    %v578 = vadd.f32 %v517, %v575
    %v579 = vadd.f32 %v540, %v575
    %v580 = vadd.f32 %v563, %v575
    %v581 = vld [vmem:[%s8] ss:$2 sm:$0xf]
    %v583 = vperm.slane %v581, 0
    %v584 = vperm.slane %v581, 1
    %v585 = vperm.slane %v581, 2
    %v586 = vperm.slane %v581, 3
    %v591 = vmul.f32 %v569, %v583
    %v592 = vmul.f32 %v570, %v584
    %v593 = vmul.f32 %v571, %v585
    %v594 = vmul.f32 %v572, %v586
    %v595 = vadd.f32 %v591, %v592
    %v596 = vadd.f32 %v595, %v593
    %v597 = vadd.f32 %v596, %v594
    %598 = vadd.xlane.f32.xlu0 %v597
    %v599 = vpop.xlane.xlu0 %598
    %v600 = vmul.f32 %v591, %v569
    %v601 = vmul.f32 %v592, %v570
    %v602 = vmul.f32 %v593, %v571
    %v603 = vmul.f32 %v594, %v572
    %v604 = vadd.f32 %v600, %v601
    %v605 = vadd.f32 %v604, %v602
    %v606 = vadd.f32 %v605, %v603
    %607 = vadd.xlane.f32.xlu0 %v606
    %v608 = vpop.xlane.xlu0 %607
    %s609 = scalar_lea.vmem %s8, 1
    %v610 = vld [vmem:[%s609] ss:$2 sm:$0xf]
    %v612 = vperm.slane %v610, 0
    %v613 = vperm.slane %v610, 1
    %v614 = vperm.slane %v610, 2
    %v615 = vperm.slane %v610, 3
    %v620 = vmul.f32 %v569, %v612
    %v621 = vmul.f32 %v570, %v613
    %v622 = vmul.f32 %v571, %v614
    %v623 = vmul.f32 %v572, %v615
    %v624 = vadd.f32 %v620, %v621
    %v625 = vadd.f32 %v624, %v622
    %v626 = vadd.f32 %v625, %v623
    %627 = vadd.xlane.f32.xlu0 %v626
    %v628 = vpop.xlane.xlu0 %627
    %v629 = vmul.f32 %v620, %v569
    %v630 = vmul.f32 %v621, %v570
    %v631 = vmul.f32 %v622, %v571
    %v632 = vmul.f32 %v623, %v572
    %v633 = vadd.f32 %v629, %v630
    %v634 = vadd.f32 %v633, %v631
    %v635 = vadd.f32 %v634, %v632
    %636 = vadd.xlane.f32.xlu0 %v635
    %v637 = vpop.xlane.xlu0 %636
    %vm638 = vcmask 7168
    %v639 = vsel %vm638, %v599, %v628
    %v640 = vsel %vm638, %v608, %v637
    %642 = vrot.lane.b32.xlu0 %v640, 2
    %v643 = vpop.permute.xlu0 %642
    %vm645 = vcmask 15360
    %v646 = vsel %vm645, %v639, %v643
    %vm647 = vcmask 64512
    %v649 = vsel %vm647, %v123, 0
    %651 = vmatpush.msra.mxu0 0.0
    %652 = vmatpush.msra.mxu0 0.0
    %653 = vmatpush.msra.mxu0 0.0
    %654 = vmatpush.msra.mxu0 0.0
    %655 = vmatpush.msra.mxu0 0.0
    %656 = vmatpush.msra.mxu0 0.0
    %657 = vmatpush.msra.mxu0 0.0
    %658 = vmatpush.msra.mxu0 0.0
    %659 = vmatpush.msra.mxu0 0.0
    %660 = vmatpush.msra.mxu0 0.0
    %661 = vmatpush.msra.mxu0 0.0
    %662 = vmatpush.msra.mxu0 0.0
    %663 = vmatpush.msra.mxu0 0.0
    %664 = vmatpush.msra.mxu0 0.0
    %665 = vmatpush.msra.mxu0 0.0
    %666 = vmatpush.msra.mxu0 %v646
    %667 = vmatmul.f32.gmra.mxu0 %v649
    %v668 = vpop.f32.mrf.mxu0
    %v669 = vadd.f32 0.0, %v668
    %670 = vdwg.mxu0
    %v671 = vmul.f32 %v669, %v669
    %673 = vrot.lane.b32.xlu0 %v671, 2
    %v674 = vpop.permute.xlu0 %673
    %v676 = vsub.f32 %v669, %v674
    %v677 = vmax.f32 %v676, 0.0
    %v678 = vadd.f32 %v677, 1e-05
    %v679 = vrsqrt.pop %v678
    %v680 = vmul.f32 %v679, %v678
    %v681 = vmul.f32 %v680, %v679
    %v682 = vmul.f32 0.5, %v681
    %v683 = vsub.f32 1.5, %v682
    %v684 = vmul.f32 %v679, %v683
    %vm685 = vweird.f32 %v678
    %vm686 = vweird.f32 %v679
    %vm687 = vmor %vm685, %vm686
    %v688 = vsel %vm687, %v679, %v684
    %689 = vset.pattern.permute.xlu0 1
    %690 = vperm.xlu0 %689, %v124
    %v691 = vpop.permute.xlu0 %690
    %v693 = vmul.f32 %v688, %v691
    %695 = vrot.lane.b32.xlu0 %v693, 126
    %v696 = vpop.permute.xlu0 %695
    %v698 = vmul.f32 %v669, %v696
    %699 = vset.pattern.permute.xlu0 2
    %700 = vperm.xlu0 %699, %v124
    %v701 = vpop.permute.xlu0 %700
    %v703 = vsub.f32 %v701, %v698
    %704 = vset.pattern.permute.xlu0 2
    %705 = vperm.xlu0 %704, %v693
    %v706 = vpop.permute.xlu0 %705
    %v708 = vmul.f32 %v706, %v583
    %v709 = vmul.f32 %v706, %v584
    %v710 = vmul.f32 %v706, %v585
    %v711 = vmul.f32 %v706, %v586
    %712 = vset.pattern.permute.xlu0 3
    %713 = vperm.xlu0 %712, %v693
    %v714 = vpop.permute.xlu0 %713
    %v716 = vmul.f32 %v714, %v612
    %v717 = vmul.f32 %v714, %v613
    %v718 = vmul.f32 %v714, %v614
    %v719 = vmul.f32 %v714, %v615
    %v720 = vadd.f32 %v708, %v716
    %v721 = vadd.f32 %v709, %v717
    %v722 = vadd.f32 %v710, %v718
    %v723 = vadd.f32 %v711, %v719
    %v724 = vmul.f32 %v569, %v720
    %v725 = vmul.f32 %v570, %v721
    %v726 = vmul.f32 %v571, %v722
    %v727 = vmul.f32 %v572, %v723
    %729 = vset.pattern.permute.xlu0 0
    %730 = vperm.xlu0 %729, %v703
    %v731 = vpop.permute.xlu0 %730
    %v733 = vmul.f32 %v731, %v583
    %v734 = vmul.f32 %v731, %v584
    %v735 = vmul.f32 %v731, %v585
    %v736 = vmul.f32 %v731, %v586
    %737 = vset.pattern.permute.xlu0 1
    %738 = vperm.xlu0 %737, %v703
    %v739 = vpop.permute.xlu0 %738
    %v741 = vmul.f32 %v739, %v612
    %v742 = vmul.f32 %v739, %v613
    %v743 = vmul.f32 %v739, %v614
    %v744 = vmul.f32 %v739, %v615
    %v745 = vadd.f32 %v733, %v741
    %v746 = vadd.f32 %v734, %v742
    %v747 = vadd.f32 %v735, %v743
    %v748 = vadd.f32 %v736, %v744
    %v749 = vadd.f32 %v724, %v745
    %v750 = vadd.f32 %v725, %v746
    %v751 = vadd.f32 %v726, %v747
    %v752 = vadd.f32 %v727, %v748
    %v753 = vxor.u32 %v749, 2147483648
    %v754 = vxor.u32 %v750, 2147483648
    %v755 = vxor.u32 %v751, 2147483648
    %v756 = vxor.u32 %v752, 2147483648
    %v757 = vmul.f32 %v753, 1.442695
    %v758 = vpow.pop %v757
    %v759 = vmul.f32 %v754, 1.442695
    %v760 = vpow.pop %v759
    %v761 = vmul.f32 %v755, 1.442695
    %v762 = vpow.pop %v761
    %v763 = vmul.f32 %v756, 1.442695
    %v764 = vpow.pop %v763
    %v765 = vadd.f32 %v758, 1.0
    %v766 = vadd.f32 %v760, 1.0
    %v767 = vadd.f32 %v762, 1.0
    %v768 = vadd.f32 %v764, 1.0
    %v769 = vrcp.pop %v765
    %v770 = vmul.f32 %v765, %v769
    %v771 = vsub.f32 1.0, %v770
    %v772 = vmul.f32 %v769, %v771
    %v773 = vadd.f32 %v769, %v772
    %vm774 = vweird.f32 %v765
    %vm775 = vweird.f32 %v769
    %vm776 = vmor %vm774, %vm775
    %v777 = vsel %vm776, %v769, %v773
    %v778 = vand.u32 2147483647, %v765
    %vm779 = vcmp.eq.f32.partialorder %v778, 8.507059e+37
    %v780 = vand.u32 %v765, 2147483648
    %v781 = vor.u32 1.1754944e-38, %v780
    %v782 = vsel %vm779, %v781, %v777
    %v783 = vmul.f32 1.0, %v782
    %v784 = vrcp.pop %v766
    %v785 = vmul.f32 %v766, %v784
    %v786 = vsub.f32 1.0, %v785
    %v787 = vmul.f32 %v784, %v786
    %v788 = vadd.f32 %v784, %v787
    %vm789 = vweird.f32 %v766
    %vm790 = vweird.f32 %v784
    %vm791 = vmor %vm789, %vm790
    %v792 = vsel %vm791, %v784, %v788
    %v793 = vand.u32 2147483647, %v766
    %vm794 = vcmp.eq.f32.partialorder %v793, 8.507059e+37
    %v795 = vand.u32 %v766, 2147483648
    %v796 = vor.u32 1.1754944e-38, %v795
    %v797 = vsel %vm794, %v796, %v792
    %v798 = vmul.f32 1.0, %v797
    %v799 = vrcp.pop %v767
    %v800 = vmul.f32 %v767, %v799
    %v801 = vsub.f32 1.0, %v800
    %v802 = vmul.f32 %v799, %v801
    %v803 = vadd.f32 %v799, %v802
    %vm804 = vweird.f32 %v767
    %vm805 = vweird.f32 %v799
    %vm806 = vmor %vm804, %vm805
    %v807 = vsel %vm806, %v799, %v803
    %v808 = vand.u32 2147483647, %v767
    %vm809 = vcmp.eq.f32.partialorder %v808, 8.507059e+37
    %v810 = vand.u32 %v767, 2147483648
    %v811 = vor.u32 1.1754944e-38, %v810
    %v812 = vsel %vm809, %v811, %v807
    %v813 = vmul.f32 1.0, %v812
    %v814 = vrcp.pop %v768
    %v815 = vmul.f32 %v768, %v814
    %v816 = vsub.f32 1.0, %v815
    %v817 = vmul.f32 %v814, %v816
    %v818 = vadd.f32 %v814, %v817
    %vm819 = vweird.f32 %v768
    %vm820 = vweird.f32 %v814
    %vm821 = vmor %vm819, %vm820
    %v822 = vsel %vm821, %v814, %v818
    %v823 = vand.u32 2147483647, %v768
    %vm824 = vcmp.eq.f32.partialorder %v823, 8.507059e+37
    %v825 = vand.u32 %v768, 2147483648
    %v826 = vor.u32 1.1754944e-38, %v825
    %v827 = vsel %vm824, %v826, %v822
    %v828 = vmul.f32 1.0, %v827
    %v829 = vmul.f32 %v749, %v783
    %v830 = vmul.f32 %v750, %v798
    %v831 = vmul.f32 %v751, %v813
    %v832 = vmul.f32 %v752, %v828
    %834 = vset.pattern.permute.xlu0 0
    %835 = vperm.xlu0 %834, %v237
    %v836 = vpop.permute.xlu0 %835
    %v838 = vmul.f32 %v836, %v583
    %v839 = vmul.f32 %v836, %v584
    %v840 = vmul.f32 %v836, %v585
    %v841 = vmul.f32 %v836, %v586
    %842 = vset.pattern.permute.xlu0 1
    %843 = vperm.xlu0 %842, %v237
    %v844 = vpop.permute.xlu0 %843
    %v846 = vmul.f32 %v844, %v612
    %v847 = vmul.f32 %v844, %v613
    %v848 = vmul.f32 %v844, %v614
    %v849 = vmul.f32 %v844, %v615
    %v850 = vadd.f32 %v838, %v846
    %v851 = vadd.f32 %v839, %v847
    %v852 = vadd.f32 %v840, %v848
    %v853 = vadd.f32 %v841, %v849
    %v854 = vadd.f32 %v829, %v850
    %v855 = vadd.f32 %v830, %v851
    %v856 = vadd.f32 %v831, %v852
    %v857 = vadd.f32 %v832, %v853
    %858 = vrot.lane.b32.xlu0 %v854, 17
    %v859 = vpop.permute.xlu0 %858
    %860 = vrot.lane.b32.xlu0 %v855, 17
    %v861 = vpop.permute.xlu0 %860
    %862 = vrot.lane.b32.xlu0 %v856, 17
    %v863 = vpop.permute.xlu0 %862
    %864 = vrot.lane.b32.xlu0 %v857, 17
    %v865 = vpop.permute.xlu0 %864
    %v866 = vsel %vm249, %v863, %v865
    %v867 = vsel %vm249, %v861, %v863
    %v868 = vsel %vm249, %v859, %v861
    %v869 = vsel %vm249, %v865, %v859
    %v870 = vmul.f32 %v869, %v256
    %v871 = vmul.f32 %v868, %v257
    %v872 = vmul.f32 %v867, %v258
    %v873 = vmul.f32 %v866, %v259
    %874 = vrot.lane.b32.xlu0 %v854, 16
    %v875 = vpop.permute.xlu0 %874
    %876 = vrot.lane.b32.xlu0 %v855, 16
    %v877 = vpop.permute.xlu0 %876
    %878 = vrot.lane.b32.xlu0 %v856, 16
    %v879 = vpop.permute.xlu0 %878
    %880 = vrot.lane.b32.xlu0 %v857, 16
    %v881 = vpop.permute.xlu0 %880
    %v882 = vsel %vm276, %v879, %v881
    %v883 = vsel %vm276, %v877, %v879
    %v884 = vsel %vm276, %v875, %v877
    %v885 = vsel %vm276, %v881, %v875
    %v886 = vmul.f32 %v885, %v284
    %v887 = vmul.f32 %v884, %v285
    %v888 = vmul.f32 %v883, %v286
    %v889 = vmul.f32 %v882, %v287
    %890 = vrot.lane.b32.xlu0 %v854, 15
    %v891 = vpop.permute.xlu0 %890
    %892 = vrot.lane.b32.xlu0 %v855, 15
    %v893 = vpop.permute.xlu0 %892
    %894 = vrot.lane.b32.xlu0 %v856, 15
    %v895 = vpop.permute.xlu0 %894
    %896 = vrot.lane.b32.xlu0 %v857, 15
    %v897 = vpop.permute.xlu0 %896
    %v898 = vsel %vm304, %v895, %v897
    %v899 = vsel %vm304, %v893, %v895
    %v900 = vsel %vm304, %v891, %v893
    %v901 = vsel %vm304, %v897, %v891
    %v902 = vmul.f32 %v901, %v312
    %v903 = vmul.f32 %v900, %v313
    %v904 = vmul.f32 %v899, %v314
    %v905 = vmul.f32 %v898, %v315
    %906 = vrot.lane.b32.xlu0 %v854, 1
    %v907 = vpop.permute.xlu0 %906
    %908 = vrot.lane.b32.xlu0 %v855, 1
    %v909 = vpop.permute.xlu0 %908
    %910 = vrot.lane.b32.xlu0 %v856, 1
    %v911 = vpop.permute.xlu0 %910
    %912 = vrot.lane.b32.xlu0 %v857, 1
    %v913 = vpop.permute.xlu0 %912
    %v914 = vsel %vm332, %v911, %v913
    %v915 = vsel %vm332, %v909, %v911
    %v916 = vsel %vm332, %v907, %v909
    %v917 = vsel %vm332, %v913, %v907
    %v918 = vmul.f32 %v917, %v340
    %v919 = vmul.f32 %v916, %v341
    %v920 = vmul.f32 %v915, %v342
    %v921 = vmul.f32 %v914, %v343
    %922 = vrot.lane.b32.xlu0 %v854, 127
    %v923 = vpop.permute.xlu0 %922
    %924 = vrot.lane.b32.xlu0 %v855, 127
    %v925 = vpop.permute.xlu0 %924
    %926 = vrot.lane.b32.xlu0 %v856, 127
    %v927 = vpop.permute.xlu0 %926
    %928 = vrot.lane.b32.xlu0 %v857, 127
    %v929 = vpop.permute.xlu0 %928
    %v930 = vsel %vm360, %v927, %v929
    %v931 = vsel %vm360, %v925, %v927
    %v932 = vsel %vm360, %v923, %v925
    %v933 = vsel %vm360, %v929, %v923
    %v934 = vmul.f32 %v932, %v368
    %v935 = vmul.f32 %v931, %v369
    %v936 = vmul.f32 %v930, %v370
    %v937 = vmul.f32 %v933, %v371
    %938 = vrot.lane.b32.xlu0 %v854, 113
    %v939 = vpop.permute.xlu0 %938
    %940 = vrot.lane.b32.xlu0 %v855, 113
    %v941 = vpop.permute.xlu0 %940
    %942 = vrot.lane.b32.xlu0 %v856, 113
    %v943 = vpop.permute.xlu0 %942
    %944 = vrot.lane.b32.xlu0 %v857, 113
    %v945 = vpop.permute.xlu0 %944
    %v946 = vsel %vm388, %v943, %v945
    %v947 = vsel %vm388, %v941, %v943
    %v948 = vsel %vm388, %v939, %v941
    %v949 = vsel %vm388, %v945, %v939
    %v950 = vmul.f32 %v948, %v396
    %v951 = vmul.f32 %v947, %v397
    %v952 = vmul.f32 %v946, %v398
    %v953 = vmul.f32 %v949, %v399
    %954 = vrot.lane.b32.xlu0 %v854, 112
    %v955 = vpop.permute.xlu0 %954
    %956 = vrot.lane.b32.xlu0 %v855, 112
    %v957 = vpop.permute.xlu0 %956
    %958 = vrot.lane.b32.xlu0 %v856, 112
    %v959 = vpop.permute.xlu0 %958
    %960 = vrot.lane.b32.xlu0 %v857, 112
    %v961 = vpop.permute.xlu0 %960
    %v962 = vsel %vm416, %v959, %v961
    %v963 = vsel %vm416, %v957, %v959
    %v964 = vsel %vm416, %v955, %v957
    %v965 = vsel %vm416, %v961, %v955
    %v966 = vmul.f32 %v964, %v424
    %v967 = vmul.f32 %v963, %v425
    %v968 = vmul.f32 %v962, %v426
    %v969 = vmul.f32 %v965, %v427
    %970 = vrot.lane.b32.xlu0 %v854, 111
    %v971 = vpop.permute.xlu0 %970
    %972 = vrot.lane.b32.xlu0 %v855, 111
    %v973 = vpop.permute.xlu0 %972
    %974 = vrot.lane.b32.xlu0 %v856, 111
    %v975 = vpop.permute.xlu0 %974
    %976 = vrot.lane.b32.xlu0 %v857, 111
    %v977 = vpop.permute.xlu0 %976
    %v978 = vsel %vm444, %v975, %v977
    %v979 = vsel %vm444, %v973, %v975
    %v980 = vsel %vm444, %v971, %v973
    %v981 = vsel %vm444, %v977, %v971
    %v982 = vmul.f32 %v980, %v452
    %v983 = vmul.f32 %v979, %v453
    %v984 = vmul.f32 %v978, %v454
    %v985 = vmul.f32 %v981, %v455
    %v986 = vld [vmem:[#allocation5] sm:$0xff]
    %987 = vset.pattern.permute.xlu0 3
    %988 = vperm.xlu0 %987, %v124
    %v989 = vpop.permute.xlu0 %988
    %v992 = vsel %vm466, %v986, 0
    %994 = vmatpush.msra.mxu0 0.0
    %995 = vmatpush.msra.mxu0 0.0
    %996 = vmatpush.msra.mxu0 0.0
    %997 = vmatpush.msra.mxu0 0.0
    %998 = vmatpush.msra.mxu0 0.0
    %999 = vmatpush.msra.mxu0 0.0
    %1000 = vmatpush.msra.mxu0 0.0
    %1001 = vmatpush.msra.mxu0 %v982
    %1002 = vmatpush.msra.mxu0 %v966
    %1003 = vmatpush.msra.mxu0 %v950
    %1004 = vmatpush.msra.mxu0 %v934
    %1005 = vmatpush.msra.mxu0 %v854
    %1006 = vmatpush.msra.mxu0 %v918
    %1007 = vmatpush.msra.mxu0 %v902
    %1008 = vmatpush.msra.mxu0 %v886
    %1009 = vmatpush.msra.mxu0 %v870
    %1010 = vmatmul.f32.gmra.mxu0 %v992
    %v1011 = vpop.f32.mrf.mxu0
    %v1012 = vadd.f32 %v989, %v1011
    %1013 = vdwg.mxu0
    %1014 = vmatpush.msra.mxu0 0.0
    %1015 = vmatpush.msra.mxu0 0.0
    %1016 = vmatpush.msra.mxu0 0.0
    %1017 = vmatpush.msra.mxu0 0.0
    %1018 = vmatpush.msra.mxu0 0.0
    %1019 = vmatpush.msra.mxu0 0.0
    %1020 = vmatpush.msra.mxu0 0.0
    %1021 = vmatpush.msra.mxu0 %v983
    %1022 = vmatpush.msra.mxu0 %v967
    %1023 = vmatpush.msra.mxu0 %v951
    %1024 = vmatpush.msra.mxu0 %v935
    %1025 = vmatpush.msra.mxu0 %v855
    %1026 = vmatpush.msra.mxu0 %v919
    %1027 = vmatpush.msra.mxu0 %v903
    %1028 = vmatpush.msra.mxu0 %v887
    %1029 = vmatpush.msra.mxu0 %v871
    %1030 = vmatmul.f32.gmra.mxu0 %v992
    %v1031 = vpop.f32.mrf.mxu0
    %v1032 = vadd.f32 %v989, %v1031
    %1033 = vdwg.mxu0
    %1034 = vmatpush.msra.mxu0 0.0
    %1035 = vmatpush.msra.mxu0 0.0
    %1036 = vmatpush.msra.mxu0 0.0
    %1037 = vmatpush.msra.mxu0 0.0
    %1038 = vmatpush.msra.mxu0 0.0
    %1039 = vmatpush.msra.mxu0 0.0
    %1040 = vmatpush.msra.mxu0 0.0
    %1041 = vmatpush.msra.mxu0 %v984
    %1042 = vmatpush.msra.mxu0 %v968
    %1043 = vmatpush.msra.mxu0 %v952
    %1044 = vmatpush.msra.mxu0 %v936
    %1045 = vmatpush.msra.mxu0 %v856
    %1046 = vmatpush.msra.mxu0 %v920
    %1047 = vmatpush.msra.mxu0 %v904
    %1048 = vmatpush.msra.mxu0 %v888
    %1049 = vmatpush.msra.mxu0 %v872
    %1050 = vmatmul.f32.gmra.mxu0 %v992
    %v1051 = vpop.f32.mrf.mxu0
    %v1052 = vadd.f32 %v989, %v1051
    %1053 = vdwg.mxu0
    %1054 = vmatpush.msra.mxu0 0.0
    %1055 = vmatpush.msra.mxu0 0.0
    %1056 = vmatpush.msra.mxu0 0.0
    %1057 = vmatpush.msra.mxu0 0.0
    %1058 = vmatpush.msra.mxu0 0.0
    %1059 = vmatpush.msra.mxu0 0.0
    %1060 = vmatpush.msra.mxu0 0.0
    %1061 = vmatpush.msra.mxu0 %v985
    %1062 = vmatpush.msra.mxu0 %v969
    %1063 = vmatpush.msra.mxu0 %v953
    %1064 = vmatpush.msra.mxu0 %v937
    %1065 = vmatpush.msra.mxu0 %v857
    %1066 = vmatpush.msra.mxu0 %v921
    %1067 = vmatpush.msra.mxu0 %v905
    %1068 = vmatpush.msra.mxu0 %v889
    %1069 = vmatpush.msra.mxu0 %v873
    %1070 = vmatmul.f32.gmra.mxu0 %v992
    %v1071 = vpop.f32.mrf.mxu0
    %v1072 = vadd.f32 %v989, %v1071
    %1073 = vdwg.mxu0
    %v1074 = vmul.f32 %v1012, %v583
    %v1075 = vmul.f32 %v1032, %v584
    %v1076 = vmul.f32 %v1052, %v585
    %v1077 = vmul.f32 %v1072, %v586
    %v1078 = vadd.f32 %v1074, %v1075
    %v1079 = vadd.f32 %v1078, %v1076
    %v1080 = vadd.f32 %v1079, %v1077
    %1081 = vadd.xlane.f32.xlu0 %v1080
    %v1082 = vpop.xlane.xlu0 %1081
    %v1083 = vmul.f32 %v1074, %v1012
    %v1084 = vmul.f32 %v1075, %v1032
    %v1085 = vmul.f32 %v1076, %v1052
    %v1086 = vmul.f32 %v1077, %v1072
    %v1087 = vadd.f32 %v1083, %v1084
    %v1088 = vadd.f32 %v1087, %v1085
    %v1089 = vadd.f32 %v1088, %v1086
    %1090 = vadd.xlane.f32.xlu0 %v1089
    %v1091 = vpop.xlane.xlu0 %1090
    %v1092 = vmul.f32 %v1012, %v612
    %v1093 = vmul.f32 %v1032, %v613
    %v1094 = vmul.f32 %v1052, %v614
    %v1095 = vmul.f32 %v1072, %v615
    %v1096 = vadd.f32 %v1092, %v1093
    %v1097 = vadd.f32 %v1096, %v1094
    %v1098 = vadd.f32 %v1097, %v1095
    %1099 = vadd.xlane.f32.xlu0 %v1098
    %v1100 = vpop.xlane.xlu0 %1099
    %v1101 = vmul.f32 %v1092, %v1012
    %v1102 = vmul.f32 %v1093, %v1032
    %v1103 = vmul.f32 %v1094, %v1052
    %v1104 = vmul.f32 %v1095, %v1072
    %v1105 = vadd.f32 %v1101, %v1102
    %v1106 = vadd.f32 %v1105, %v1103
    %v1107 = vadd.f32 %v1106, %v1104
    %1108 = vadd.xlane.f32.xlu0 %v1107
    %v1109 = vpop.xlane.xlu0 %1108
    %v1110 = vsel %vm638, %v1082, %v1100
    %v1111 = vsel %vm638, %v1091, %v1109
    %1113 = vrot.lane.b32.xlu0 %v1111, 2
    %v1114 = vpop.permute.xlu0 %1113
    %v1116 = vsel %vm645, %v1110, %v1114
    %1117 = vmatpush.msra.mxu0 0.0
    %1118 = vmatpush.msra.mxu0 0.0
    %1119 = vmatpush.msra.mxu0 0.0
    %1120 = vmatpush.msra.mxu0 0.0
    %1121 = vmatpush.msra.mxu0 0.0
    %1122 = vmatpush.msra.mxu0 0.0
    %1123 = vmatpush.msra.mxu0 0.0
    %1124 = vmatpush.msra.mxu0 0.0
    %1125 = vmatpush.msra.mxu0 0.0
    %1126 = vmatpush.msra.mxu0 0.0
    %1127 = vmatpush.msra.mxu0 0.0
    %1128 = vmatpush.msra.mxu0 0.0
    %1129 = vmatpush.msra.mxu0 0.0
    %1130 = vmatpush.msra.mxu0 0.0
    %1131 = vmatpush.msra.mxu0 0.0
    %1132 = vmatpush.msra.mxu0 %v1116
    %1133 = vmatmul.f32.gmra.mxu0 %v649
    %v1134 = vpop.f32.mrf.mxu0
    %v1135 = vadd.f32 0.0, %v1134
    %1136 = vdwg.mxu0
    %v1137 = vmul.f32 %v1135, %v1135
    %1139 = vrot.lane.b32.xlu0 %v1137, 2
    %v1140 = vpop.permute.xlu0 %1139
    %v1142 = vsub.f32 %v1135, %v1140
    %v1143 = vmax.f32 %v1142, 0.0
    %v1144 = vadd.f32 %v1143, 1e-05
    %v1145 = vrsqrt.pop %v1144
    %v1146 = vmul.f32 %v1145, %v1144
    %v1147 = vmul.f32 %v1146, %v1145
    %v1148 = vmul.f32 0.5, %v1147
    %v1149 = vsub.f32 1.5, %v1148
    %v1150 = vmul.f32 %v1145, %v1149
    %vm1151 = vweird.f32 %v1144
    %vm1152 = vweird.f32 %v1145
    %vm1153 = vmor %vm1151, %vm1152
    %v1154 = vsel %vm1153, %v1145, %v1150
    %1155 = vset.pattern.permute.xlu0 4
    %1156 = vperm.xlu0 %1155, %v124
    %v1157 = vpop.permute.xlu0 %1156
    %v1159 = vmul.f32 %v1154, %v1157
    %1161 = vrot.lane.b32.xlu0 %v1159, 126
    %v1162 = vpop.permute.xlu0 %1161
    %v1164 = vmul.f32 %v1135, %v1162
    %1165 = vset.pattern.permute.xlu0 5
    %1166 = vperm.xlu0 %1165, %v124
    %v1167 = vpop.permute.xlu0 %1166
    %v1169 = vsub.f32 %v1167, %v1164
    %1170 = vset.pattern.permute.xlu0 2
    %1171 = vperm.xlu0 %1170, %v1159
    %v1172 = vpop.permute.xlu0 %1171
    %v1174 = vmul.f32 %v1172, %v583
    %v1175 = vmul.f32 %v1172, %v584
    %v1176 = vmul.f32 %v1172, %v585
    %v1177 = vmul.f32 %v1172, %v586
    %1178 = vset.pattern.permute.xlu0 3
    %1179 = vperm.xlu0 %1178, %v1159
    %v1180 = vpop.permute.xlu0 %1179
    %v1182 = vmul.f32 %v1180, %v612
    %v1183 = vmul.f32 %v1180, %v613
    %v1184 = vmul.f32 %v1180, %v614
    %v1185 = vmul.f32 %v1180, %v615
    %v1186 = vadd.f32 %v1174, %v1182
    %v1187 = vadd.f32 %v1175, %v1183
    %v1188 = vadd.f32 %v1176, %v1184
    %v1189 = vadd.f32 %v1177, %v1185
    %v1190 = vmul.f32 %v1012, %v1186
    %v1191 = vmul.f32 %v1032, %v1187
    %v1192 = vmul.f32 %v1052, %v1188
    %v1193 = vmul.f32 %v1072, %v1189
    %1195 = vset.pattern.permute.xlu0 0
    %1196 = vperm.xlu0 %1195, %v1169
    %v1197 = vpop.permute.xlu0 %1196
    %v1199 = vmul.f32 %v1197, %v583
    %v1200 = vmul.f32 %v1197, %v584
    %v1201 = vmul.f32 %v1197, %v585
    %v1202 = vmul.f32 %v1197, %v586
    %1203 = vset.pattern.permute.xlu0 1
    %1204 = vperm.xlu0 %1203, %v1169
    %v1205 = vpop.permute.xlu0 %1204
    %v1207 = vmul.f32 %v1205, %v612
    %v1208 = vmul.f32 %v1205, %v613
    %v1209 = vmul.f32 %v1205, %v614
    %v1210 = vmul.f32 %v1205, %v615
    %v1211 = vadd.f32 %v1199, %v1207
    %v1212 = vadd.f32 %v1200, %v1208
    %v1213 = vadd.f32 %v1201, %v1209
    %v1214 = vadd.f32 %v1202, %v1210
    %v1215 = vadd.f32 %v1190, %v1211
    %v1216 = vadd.f32 %v1191, %v1212
    %v1217 = vadd.f32 %v1192, %v1213
    %v1218 = vadd.f32 %v1193, %v1214
    %v1219 = vxor.u32 %v1215, 2147483648
    %v1220 = vxor.u32 %v1216, 2147483648
    %v1221 = vxor.u32 %v1217, 2147483648
    %v1222 = vxor.u32 %v1218, 2147483648
    %v1223 = vmul.f32 %v1219, 1.442695
    %v1224 = vpow.pop %v1223
    %v1225 = vmul.f32 %v1220, 1.442695
    %v1226 = vpow.pop %v1225
    %v1227 = vmul.f32 %v1221, 1.442695
    %v1228 = vpow.pop %v1227
    %v1229 = vmul.f32 %v1222, 1.442695
    %v1230 = vpow.pop %v1229
    %v1231 = vadd.f32 %v1224, 1.0
    %v1232 = vadd.f32 %v1226, 1.0
    %v1233 = vadd.f32 %v1228, 1.0
    %v1234 = vadd.f32 %v1230, 1.0
    %v1235 = vrcp.pop %v1231
    %v1236 = vmul.f32 %v1231, %v1235
    %v1237 = vsub.f32 1.0, %v1236
    %v1238 = vmul.f32 %v1235, %v1237
    %v1239 = vadd.f32 %v1235, %v1238
    %vm1240 = vweird.f32 %v1231
    %vm1241 = vweird.f32 %v1235
    %vm1242 = vmor %vm1240, %vm1241
    %v1243 = vsel %vm1242, %v1235, %v1239
    %v1244 = vand.u32 2147483647, %v1231
    %vm1245 = vcmp.eq.f32.partialorder %v1244, 8.507059e+37
    %v1246 = vand.u32 %v1231, 2147483648
    %v1247 = vor.u32 1.1754944e-38, %v1246
    %v1248 = vsel %vm1245, %v1247, %v1243
    %v1249 = vmul.f32 1.0, %v1248
    %v1250 = vrcp.pop %v1232
    %v1251 = vmul.f32 %v1232, %v1250
    %v1252 = vsub.f32 1.0, %v1251
    %v1253 = vmul.f32 %v1250, %v1252
    %v1254 = vadd.f32 %v1250, %v1253
    %vm1255 = vweird.f32 %v1232
    %vm1256 = vweird.f32 %v1250
    %vm1257 = vmor %vm1255, %vm1256
    %v1258 = vsel %vm1257, %v1250, %v1254
    %v1259 = vand.u32 2147483647, %v1232
    %vm1260 = vcmp.eq.f32.partialorder %v1259, 8.507059e+37
    %v1261 = vand.u32 %v1232, 2147483648
    %v1262 = vor.u32 1.1754944e-38, %v1261
    %v1263 = vsel %vm1260, %v1262, %v1258
    %v1264 = vmul.f32 1.0, %v1263
    %v1265 = vrcp.pop %v1233
    %v1266 = vmul.f32 %v1233, %v1265
    %v1267 = vsub.f32 1.0, %v1266
    %v1268 = vmul.f32 %v1265, %v1267
    %v1269 = vadd.f32 %v1265, %v1268
    %vm1270 = vweird.f32 %v1233
    %vm1271 = vweird.f32 %v1265
    %vm1272 = vmor %vm1270, %vm1271
    %v1273 = vsel %vm1272, %v1265, %v1269
    %v1274 = vand.u32 2147483647, %v1233
    %vm1275 = vcmp.eq.f32.partialorder %v1274, 8.507059e+37
    %v1276 = vand.u32 %v1233, 2147483648
    %v1277 = vor.u32 1.1754944e-38, %v1276
    %v1278 = vsel %vm1275, %v1277, %v1273
    %v1279 = vmul.f32 1.0, %v1278
    %v1280 = vrcp.pop %v1234
    %v1281 = vmul.f32 %v1234, %v1280
    %v1282 = vsub.f32 1.0, %v1281
    %v1283 = vmul.f32 %v1280, %v1282
    %v1284 = vadd.f32 %v1280, %v1283
    %vm1285 = vweird.f32 %v1234
    %vm1286 = vweird.f32 %v1280
    %vm1287 = vmor %vm1285, %vm1286
    %v1288 = vsel %vm1287, %v1280, %v1284
    %v1289 = vand.u32 2147483647, %v1234
    %vm1290 = vcmp.eq.f32.partialorder %v1289, 8.507059e+37
    %v1291 = vand.u32 %v1234, 2147483648
    %v1292 = vor.u32 1.1754944e-38, %v1291
    %v1293 = vsel %vm1290, %v1292, %v1288
    %v1294 = vmul.f32 1.0, %v1293
    %v1295 = vmul.f32 %v1215, %v1249
    %v1296 = vmul.f32 %v1216, %v1264
    %v1297 = vmul.f32 %v1217, %v1279
    %v1298 = vmul.f32 %v1218, %v1294
    %v1299 = vadd.f32 %v1295, %v577
    %v1300 = vadd.f32 %v1296, %v578
    %v1301 = vadd.f32 %v1297, %v579
    %v1302 = vadd.f32 %v1298, %v580
    %1303 = vst [vmem:[#allocation13] sm:$0xff] %v1299
    %1304 = vst [vmem:[#allocation13 + $0x8] sm:$0xff] %v1300
    %1305 = vst [vmem:[#allocation13 + $0x10] sm:$0xff] %v1301
    %1306 = vst [vmem:[#allocation13 + $0x18] sm:$0xff] %v1302
    // Predicated region
    $region62: #{tpu_custom_call.1} parent=1 // pred_check
      _
    $region63: #{tpu_custom_call.1} parent=1 // pred_check_branch
      %1308 = sbr.rel (0) target = $region65
    $region64: #{tpu_custom_call.1} parent=1 // pred_region
      %1310 = vsyncadd [#allocation4], 0
      %s1312 = sshll.u32 [#allocation13], 4
      %s1313 = int_to_ptr.vmem [resolvable:$true] %s1312
      %s1314 = sshll.u32 %s9, 4
      %s1315 = int_to_ptr.hbm [resolvable:$true] %s1314
      %1317 = dma.vmem_to_hbm [thread:$0]  %s1313, 512, %s1315, [#allocation4]
    $region65: #{tpu_custom_call.1} parent=1 // pred_fallthru
      _
    // Predicated region
    $region66: #{tpu_custom_call.1} parent=1 // pred_check
      _
    $region67: #{tpu_custom_call.1} parent=1 // pred_check_branch
      %1319 = sbr.rel (0) target = $region69
    $region68: #{tpu_custom_call.1} parent=1 // pred_region
      %1321 = dma.done [#allocation4], 512
    $region69: #{tpu_custom_call.1} parent=1 // pred_fallthru
      _
    %1322 = vsyncpa [#allocation3], 1
    %1323 = vsyncpa [#allocation6], 1
    %1324 = vsyncpa [#allocation9], 1
    %1325 = vsyncpa [#allocation12], 1
    %1326 = vsyncpa [#allocation4], 1

// kernel: tpu_custom_call.1
$region0: #{tpu_custom_call.1}
  #allocation0 [shape = 'u32[]', space=smem, size = 0x4, offset = 0x4, fixed_abs, tag = 'smem constant byte address 0x4 - core index']
  #allocation1 [shape = 'u32[72,128]{1,0:T(1,128)}', space=vmem, size = 0x9000, scoped, tag = 'internal scratch']
  %s0 = inlined_call_operand.vmem [shape: f32[1,8,512], index: 0, kind: input, shape index: {}]
  %s1 = inlined_call_operand.vmem [shape: f32[1,32,2], index: 1, kind: input, shape index: {}]
  %s2 = inlined_call_operand.hbm [shape: f32[16,72], index: 2, kind: input, shape index: {}]
  %s3 = inlined_call_operand.hbm [shape: f32[8,72], index: 3, kind: input, shape index: {}]
  %s4 = inlined_call_operand.hbm [shape: f32[8,32], index: 4, kind: input, shape index: {}]
  %s5 = inlined_call_operand.hbm [shape: f32[8,8], index: 5, kind: input, shape index: {}]
  %s6 = inlined_call_operand.hbm [shape: f32[8,8], index: 6, kind: input, shape index: {}]
  %s7 = inlined_call_operand.hbm [shape: f32[9,512], index: 7, kind: input, shape index: {}]
  %s8 = inlined_call_operand.vmem [shape: f32[2,512], index: 8, kind: input, shape index: {}]
  %s9 = inlined_call_operand.hbm [shape: f32[1,8,512], index: 9, kind: output, shape index: {}]
  %s10 = sld [smem:[#allocation0]]
  $region70: #{tpu_custom_call.1} parent=0
    _
  %s12 = ssub.s32 1, %s10
  %s13 = scalar_select 0, %s12, %s10
  $region1: #{tpu_custom_call.1} parent=0
    #allocation2 [shape = 'u8[8192]{0}', space=vmem, size = 0x2000, scoped, tag = 'input window, operand 2, single buffered']
    #allocation3 [shape = 's32[1]{0}', space=sflag, size = 0x4, scoped, tag = 'scoped memory for tpu_custom_call.1']
    #allocation4 [shape = 's32[1]{0}', space=sflag, size = 0x4, scoped, tag = 'scoped memory for tpu_custom_call.1']
    #allocation5 [shape = 'u8[4096]{0}', space=vmem, size = 0x1000, scoped, tag = 'input window, operand 3, single buffered']
    #allocation6 [shape = 's32[1]{0}', space=sflag, size = 0x4, scoped, tag = 'scoped memory for tpu_custom_call.1']
    #allocation7 [shape = 'u8[4096]{0}', space=vmem, size = 0x1000, scoped, tag = 'input window, operand 4, single buffered']
    #allocation8 [shape = 'u8[4096]{0}', space=vmem, size = 0x1000, scoped, tag = 'input window, operand 5, single buffered']
    #allocation9 [shape = 's32[1]{0}', space=sflag, size = 0x4, scoped, tag = 'scoped memory for tpu_custom_call.1']
    #allocation10 [shape = 'u8[4096]{0}', space=vmem, size = 0x1000, scoped, tag = 'input window, operand 6, single buffered']
    #allocation11 [shape = 'u8[32768]{0}', space=vmem, size = 0x8000, scoped, tag = 'input window, operand 7, single buffered']
    #allocation12 [shape = 's32[1]{0}', space=sflag, size = 0x4, scoped, tag = 'scoped memory for tpu_custom_call.1']
    #allocation13 [shape = 'u8[16384]{0}', space=vmem, size = 0x4000, scoped, tag = 'output window, operand 0, single buffered']
    %14 = vsyncpa [#allocation3], 0
    %15 = vsyncpa [#allocation6], 0
    %16 = vsyncpa [#allocation9], 0
    %17 = vsyncpa [#allocation12], 0
    %18 = vsyncpa [#allocation4], 0
    // Predicated region
    $region2: #{tpu_custom_call.1} parent=1 // pred_check
      _
    $region3: #{tpu_custom_call.1} parent=1 // pred_check_branch
      %20 = sbr.rel (0) target = $region5
    $region4: #{tpu_custom_call.1} parent=1 // pred_region
      _
    $region5: #{tpu_custom_call.1} parent=1 // pred_fallthru
      _
    // Predicated region
    $region6: #{tpu_custom_call.1} parent=1 // pred_check
      _
    $region7: #{tpu_custom_call.1} parent=1 // pred_check_branch
      %22 = sbr.rel (0) target = $region9
    $region8: #{tpu_custom_call.1} parent=1 // pred_region
      _
    $region9: #{tpu_custom_call.1} parent=1 // pred_fallthru
      _
    // Predicated region
    $region10: #{tpu_custom_call.1} parent=1 // pred_check
      _
    $region11: #{tpu_custom_call.1} parent=1 // pred_check_branch
      %24 = sbr.rel (0) target = $region13
    $region12: #{tpu_custom_call.1} parent=1 // pred_region
      %26 = vsyncadd [#allocation3], 0
      %s27 = sshll.u32 %s2, 4
      %s28 = int_to_ptr.hbm [resolvable:$true] %s27
      %s29 = sshll.u32 [#allocation2], 4
      %s30 = int_to_ptr.vmem [resolvable:$true] %s29
      %35 = dma.hbm_to_vmem [thread:$0]  %s28, 256, %s30, [#allocation3], 128, 128, 8
    $region13: #{tpu_custom_call.1} parent=1 // pred_fallthru
      _
    // Predicated region
    $region14: #{tpu_custom_call.1} parent=1 // pred_check
      _
    $region15: #{tpu_custom_call.1} parent=1 // pred_check_branch
      %37 = sbr.rel (0) target = $region17
    $region16: #{tpu_custom_call.1} parent=1 // pred_region
      %39 = vsyncadd [#allocation6], 0
      %s41 = sshll.u32 %s3, 4
      %s42 = int_to_ptr.hbm [resolvable:$true] %s41
      %s43 = sshll.u32 [#allocation5], 4
      %s44 = int_to_ptr.vmem [resolvable:$true] %s43
      %46 = dma.hbm_to_vmem [thread:$0]  %s42, 128, %s44, [#allocation6]
    $region17: #{tpu_custom_call.1} parent=1 // pred_fallthru
      _
    // Predicated region
    $region18: #{tpu_custom_call.1} parent=1 // pred_check
      _
    $region19: #{tpu_custom_call.1} parent=1 // pred_check_branch
      %48 = sbr.rel (0) target = $region21
    $region20: #{tpu_custom_call.1} parent=1 // pred_region
      %50 = vsyncadd [#allocation6], 0
      %s52 = sshll.u32 %s4, 4
      %s53 = int_to_ptr.hbm [resolvable:$true] %s52
      %s54 = sshll.u32 [#allocation7], 4
      %s55 = int_to_ptr.vmem [resolvable:$true] %s54
      %57 = dma.hbm_to_vmem [thread:$0]  %s53, 128, %s55, [#allocation6]
    $region21: #{tpu_custom_call.1} parent=1 // pred_fallthru
      _
    // Predicated region
    $region22: #{tpu_custom_call.1} parent=1 // pred_check
      _
    $region23: #{tpu_custom_call.1} parent=1 // pred_check_branch
      %59 = sbr.rel (0) target = $region25
    $region24: #{tpu_custom_call.1} parent=1 // pred_region
      %61 = vsyncadd [#allocation9], 0
      %s63 = sshll.u32 %s5, 4
      %s64 = int_to_ptr.hbm [resolvable:$true] %s63
      %s65 = sshll.u32 [#allocation8], 4
      %s66 = int_to_ptr.vmem [resolvable:$true] %s65
      %68 = dma.hbm_to_vmem [thread:$0]  %s64, 128, %s66, [#allocation9]
    $region25: #{tpu_custom_call.1} parent=1 // pred_fallthru
      _
    // Predicated region
    $region26: #{tpu_custom_call.1} parent=1 // pred_check
      _
    $region27: #{tpu_custom_call.1} parent=1 // pred_check_branch
      %70 = sbr.rel (0) target = $region29
    $region28: #{tpu_custom_call.1} parent=1 // pred_region
      %72 = vsyncadd [#allocation9], 0
      %s74 = sshll.u32 %s6, 4
      %s75 = int_to_ptr.hbm [resolvable:$true] %s74
      %s76 = sshll.u32 [#allocation10], 4
      %s77 = int_to_ptr.vmem [resolvable:$true] %s76
      %79 = dma.hbm_to_vmem [thread:$0]  %s75, 128, %s77, [#allocation9]
    $region29: #{tpu_custom_call.1} parent=1 // pred_fallthru
      _
    // Predicated region
    $region30: #{tpu_custom_call.1} parent=1 // pred_check
      _
    $region31: #{tpu_custom_call.1} parent=1 // pred_check_branch
      %81 = sbr.rel (0) target = $region33
    $region32: #{tpu_custom_call.1} parent=1 // pred_region
      %83 = vsyncadd [#allocation12], 0
      %s84 = sshll.u32 %s7, 4
      %s85 = int_to_ptr.hbm [resolvable:$true] %s84
      %s86 = sshll.u32 [#allocation11], 4
      %s87 = int_to_ptr.vmem [resolvable:$true] %s86
      %92 = dma.hbm_to_vmem [thread:$0]  %s85, 1024, %s87, [#allocation12], 512, 512, 32
    $region33: #{tpu_custom_call.1} parent=1 // pred_fallthru
      _
    // Predicated region
    $region34: #{tpu_custom_call.1} parent=1 // pred_check
      _
    $region35: #{tpu_custom_call.1} parent=1 // pred_check_branch
      %94 = sbr.rel (0) target = $region37
    $region36: #{tpu_custom_call.1} parent=1 // pred_region
      _
    $region37: #{tpu_custom_call.1} parent=1 // pred_fallthru
      _
    // Predicated region
    $region38: #{tpu_custom_call.1} parent=1 // pred_check
      _
    $region39: #{tpu_custom_call.1} parent=1 // pred_check_branch
      %96 = sbr.rel (0) target = $region41
    $region40: #{tpu_custom_call.1} parent=1 // pred_region
      %98 = dma.done [#allocation3], 256
    $region41: #{tpu_custom_call.1} parent=1 // pred_fallthru
      _
    // Predicated region
    $region42: #{tpu_custom_call.1} parent=1 // pred_check
      _
    $region43: #{tpu_custom_call.1} parent=1 // pred_check_branch
      %100 = sbr.rel (0) target = $region45
    $region44: #{tpu_custom_call.1} parent=1 // pred_region
      %102 = dma.done [#allocation6], 128
    $region45: #{tpu_custom_call.1} parent=1 // pred_fallthru
      _
    // Predicated region
    $region46: #{tpu_custom_call.1} parent=1 // pred_check
      _
    $region47: #{tpu_custom_call.1} parent=1 // pred_check_branch
      %104 = sbr.rel (0) target = $region49
    $region48: #{tpu_custom_call.1} parent=1 // pred_region
      %106 = dma.done [#allocation6], 128
    $region49: #{tpu_custom_call.1} parent=1 // pred_fallthru
      _
    // Predicated region
    $region50: #{tpu_custom_call.1} parent=1 // pred_check
      _
    $region51: #{tpu_custom_call.1} parent=1 // pred_check_branch
      %108 = sbr.rel (0) target = $region53
    $region52: #{tpu_custom_call.1} parent=1 // pred_region
      %110 = dma.done [#allocation9], 128
    $region53: #{tpu_custom_call.1} parent=1 // pred_fallthru
      _
    // Predicated region
    $region54: #{tpu_custom_call.1} parent=1 // pred_check
      _
    $region55: #{tpu_custom_call.1} parent=1 // pred_check_branch
      %112 = sbr.rel (0) target = $region57
    $region56: #{tpu_custom_call.1} parent=1 // pred_region
      %114 = dma.done [#allocation9], 128
    $region57: #{tpu_custom_call.1} parent=1 // pred_fallthru
      _
    // Predicated region
    $region58: #{tpu_custom_call.1} parent=1 // pred_check
      _
    $region59: #{tpu_custom_call.1} parent=1 // pred_check_branch
      %116 = sbr.rel (0) target = $region61
    $region60: #{tpu_custom_call.1} parent=1 // pred_region
      %118 = dma.done [#allocation12], 1024
    $region61: #{tpu_custom_call.1} parent=1 // pred_fallthru
      _
    %v119 = vld [vmem:[%s0] sm:$0xff]
    %v120 = vld [vmem:[%s0 + $0x8] sm:$0xff]
    %v121 = vld [vmem:[%s0 + $0x10] sm:$0xff]
    %v122 = vld [vmem:[%s0 + $0x18] sm:$0xff]
    %v123 = vld [vmem:[#allocation10] sm:$0xff]
    %v124 = vld [vmem:[#allocation8] sm:$0xff]
    %v125 = vld [vmem:[%s1] sm:$0xff]
    %v126 = vld [vmem:[%s1 + $0x8] sm:$0xff]
    %v127 = vld [vmem:[%s1 + $0x10] sm:$0xff]
    %v128 = vld [vmem:[%s1 + $0x18] sm:$0xff]
    %v129 = vxor.u32 %v125, 2147483648
    %v130 = vxor.u32 %v126, 2147483648
    %v131 = vxor.u32 %v127, 2147483648
    %v132 = vxor.u32 %v128, 2147483648
    %v133 = vmul.f32 %v129, 1.442695
    %v134 = vpow.pop %v133
    %v135 = vmul.f32 %v130, 1.442695
    %v136 = vpow.pop %v135
    %v137 = vmul.f32 %v131, 1.442695
    %v138 = vpow.pop %v137
    %v139 = vmul.f32 %v132, 1.442695
    %v140 = vpow.pop %v139
    %v141 = vadd.f32 %v134, 1.0
    %v142 = vadd.f32 %v136, 1.0
    %v143 = vadd.f32 %v138, 1.0
    %v144 = vadd.f32 %v140, 1.0
    %v145 = vrcp.pop %v141
    %v146 = vmul.f32 %v141, %v145
    %v147 = vsub.f32 1.0, %v146
    %v148 = vmul.f32 %v145, %v147
    %v149 = vadd.f32 %v145, %v148
    %vm150 = vweird.f32 %v141
    %vm151 = vweird.f32 %v145
    %vm152 = vmor %vm150, %vm151
    %v153 = vsel %vm152, %v145, %v149
    %v154 = vand.u32 2147483647, %v141
    %vm155 = vcmp.eq.f32.partialorder %v154, 8.507059e+37
    %v156 = vand.u32 %v141, 2147483648
    %v157 = vor.u32 1.1754944e-38, %v156
    %v158 = vsel %vm155, %v157, %v153
    %v159 = vmul.f32 1.0, %v158
    %v160 = vrcp.pop %v142
    %v161 = vmul.f32 %v142, %v160
    %v162 = vsub.f32 1.0, %v161
    %v163 = vmul.f32 %v160, %v162
    %v164 = vadd.f32 %v160, %v163
    %vm165 = vweird.f32 %v142
    %vm166 = vweird.f32 %v160
    %vm167 = vmor %vm165, %vm166
    %v168 = vsel %vm167, %v160, %v164
    %v169 = vand.u32 2147483647, %v142
    %vm170 = vcmp.eq.f32.partialorder %v169, 8.507059e+37
    %v171 = vand.u32 %v142, 2147483648
    %v172 = vor.u32 1.1754944e-38, %v171
    %v173 = vsel %vm170, %v172, %v168
    %v174 = vmul.f32 1.0, %v173
    %v175 = vrcp.pop %v143
    %v176 = vmul.f32 %v143, %v175
    %v177 = vsub.f32 1.0, %v176
    %v178 = vmul.f32 %v175, %v177
    %v179 = vadd.f32 %v175, %v178
    %vm180 = vweird.f32 %v143
    %vm181 = vweird.f32 %v175
    %vm182 = vmor %vm180, %vm181
    %v183 = vsel %vm182, %v175, %v179
    %v184 = vand.u32 2147483647, %v143
    %vm185 = vcmp.eq.f32.partialorder %v184, 8.507059e+37
    %v186 = vand.u32 %v143, 2147483648
    %v187 = vor.u32 1.1754944e-38, %v186
    %v188 = vsel %vm185, %v187, %v183
    %v189 = vmul.f32 1.0, %v188
    %v190 = vrcp.pop %v144
    %v191 = vmul.f32 %v144, %v190
    %v192 = vsub.f32 1.0, %v191
    %v193 = vmul.f32 %v190, %v192
    %v194 = vadd.f32 %v190, %v193
    %vm195 = vweird.f32 %v144
    %vm196 = vweird.f32 %v190
    %vm197 = vmor %vm195, %vm196
    %v198 = vsel %vm197, %v190, %v194
    %v199 = vand.u32 2147483647, %v144
    %vm200 = vcmp.eq.f32.partialorder %v199, 8.507059e+37
    %v201 = vand.u32 %v144, 2147483648
    %v202 = vor.u32 1.1754944e-38, %v201
    %v203 = vsel %vm200, %v202, %v198
    %v204 = vmul.f32 1.0, %v203
    %v205 = vmul.f32 %v125, %v159
    %v206 = vmul.f32 %v126, %v174
    %v207 = vmul.f32 %v127, %v189
    %v208 = vmul.f32 %v128, %v204
    %v209 = vld [vmem:[#allocation7] sm:$0xff]
    %211 = vset.pattern.permute.xlu0 6
    %212 = vperm.xlu0 %211, %v124
    %v213 = vpop.permute.xlu0 %212
    %vm215 = vcmask 261120
    %v217 = vsel %vm215, %v209, 0
    %219 = vmatpush.msra.mxu0 0.0
    %220 = vmatpush.msra.mxu0 0.0
    %221 = vmatpush.msra.mxu0 0.0
    %222 = vmatpush.msra.mxu0 0.0
    %223 = vmatpush.msra.mxu0 0.0
    %224 = vmatpush.msra.mxu0 0.0
    %225 = vmatpush.msra.mxu0 0.0
    %226 = vmatpush.msra.mxu0 0.0
    %227 = vmatpush.msra.mxu0 0.0
    %228 = vmatpush.msra.mxu0 0.0
    %229 = vmatpush.msra.mxu0 0.0
    %230 = vmatpush.msra.mxu0 0.0
    %231 = vmatpush.msra.mxu0 %v208
    %232 = vmatpush.msra.mxu0 %v207
    %233 = vmatpush.msra.mxu0 %v206
    %234 = vmatpush.msra.mxu0 %v205
    %235 = vmatmul.f32.gmra.mxu0 %v217
    %v236 = vpop.f32.mrf.mxu0
    %v237 = vadd.f32 %v213, %v236
    %238 = vdwg.mxu0
    %239 = vrot.lane.b32.xlu0 %v119, 17
    %v240 = vpop.permute.xlu0 %239
    %241 = vrot.lane.b32.xlu0 %v120, 17
    %v242 = vpop.permute.xlu0 %241
    %243 = vrot.lane.b32.xlu0 %v121, 17
    %v244 = vpop.permute.xlu0 %243
    %245 = vrot.lane.b32.xlu0 %v122, 17
    %v246 = vpop.permute.xlu0 %245
    %v247 = vlaneseq
    %v248 = vand.u32 %v247, 127
    %vm249 = vcmp.lt.s32.totalorder %v248, 17
    %v250 = vsel %vm249, %v244, %v246
    %v251 = vsel %vm249, %v242, %v244
    %v252 = vsel %vm249, %v240, %v242
    %v253 = vsel %vm249, %v246, %v240
    %v254 = vld [vmem:[#allocation11] ss:$8 sm:$0xf]
    %v256 = vperm.slane %v254, 0
    %v257 = vperm.slane %v254, 1
    %v258 = vperm.slane %v254, 2
    %v259 = vperm.slane %v254, 3
    %v264 = vmul.f32 %v253, %v256
    %v265 = vmul.f32 %v252, %v257
    %v266 = vmul.f32 %v251, %v258
    %v267 = vmul.f32 %v250, %v259
    %268 = vrot.lane.b32.xlu0 %v119, 16
    %v269 = vpop.permute.xlu0 %268
    %270 = vrot.lane.b32.xlu0 %v120, 16
    %v271 = vpop.permute.xlu0 %270
    %272 = vrot.lane.b32.xlu0 %v121, 16
    %v273 = vpop.permute.xlu0 %272
    %274 = vrot.lane.b32.xlu0 %v122, 16
    %v275 = vpop.permute.xlu0 %274
    %vm276 = vcmp.lt.s32.totalorder %v248, 16
    %v277 = vsel %vm276, %v273, %v275
    %v278 = vsel %vm276, %v271, %v273
    %v279 = vsel %vm276, %v269, %v271
    %v280 = vsel %vm276, %v275, %v269
    %s281 = scalar_lea.vmem [#allocation11], 1
    %v282 = vld [vmem:[%s281] ss:$8 sm:$0xf]
    %v284 = vperm.slane %v282, 0
    %v285 = vperm.slane %v282, 1
    %v286 = vperm.slane %v282, 2
    %v287 = vperm.slane %v282, 3
    %v292 = vmul.f32 %v280, %v284
    %v293 = vmul.f32 %v279, %v285
    %v294 = vmul.f32 %v278, %v286
    %v295 = vmul.f32 %v277, %v287
    %296 = vrot.lane.b32.xlu0 %v119, 15
    %v297 = vpop.permute.xlu0 %296
    %298 = vrot.lane.b32.xlu0 %v120, 15
    %v299 = vpop.permute.xlu0 %298
    %300 = vrot.lane.b32.xlu0 %v121, 15
    %v301 = vpop.permute.xlu0 %300
    %302 = vrot.lane.b32.xlu0 %v122, 15
    %v303 = vpop.permute.xlu0 %302
    %vm304 = vcmp.lt.s32.totalorder %v248, 15
    %v305 = vsel %vm304, %v301, %v303
    %v306 = vsel %vm304, %v299, %v301
    %v307 = vsel %vm304, %v297, %v299
    %v308 = vsel %vm304, %v303, %v297
    %s309 = scalar_lea.vmem [#allocation11], 2
    %v310 = vld [vmem:[%s309] ss:$8 sm:$0xf]
    %v312 = vperm.slane %v310, 0
    %v313 = vperm.slane %v310, 1
    %v314 = vperm.slane %v310, 2
    %v315 = vperm.slane %v310, 3
    %v320 = vmul.f32 %v308, %v312
    %v321 = vmul.f32 %v307, %v313
    %v322 = vmul.f32 %v306, %v314
    %v323 = vmul.f32 %v305, %v315
    %324 = vrot.lane.b32.xlu0 %v119, 1
    %v325 = vpop.permute.xlu0 %324
    %326 = vrot.lane.b32.xlu0 %v120, 1
    %v327 = vpop.permute.xlu0 %326
    %328 = vrot.lane.b32.xlu0 %v121, 1
    %v329 = vpop.permute.xlu0 %328
    %330 = vrot.lane.b32.xlu0 %v122, 1
    %v331 = vpop.permute.xlu0 %330
    %vm332 = vcmp.lt.s32.totalorder %v248, 1
    %v333 = vsel %vm332, %v329, %v331
    %v334 = vsel %vm332, %v327, %v329
    %v335 = vsel %vm332, %v325, %v327
    %v336 = vsel %vm332, %v331, %v325
    %s337 = scalar_lea.vmem [#allocation11], 3
    %v338 = vld [vmem:[%s337] ss:$8 sm:$0xf]
    %v340 = vperm.slane %v338, 0
    %v341 = vperm.slane %v338, 1
    %v342 = vperm.slane %v338, 2
    %v343 = vperm.slane %v338, 3
    %v348 = vmul.f32 %v336, %v340
    %v349 = vmul.f32 %v335, %v341
    %v350 = vmul.f32 %v334, %v342
    %v351 = vmul.f32 %v333, %v343
    %352 = vrot.lane.b32.xlu0 %v119, 127
    %v353 = vpop.permute.xlu0 %352
    %354 = vrot.lane.b32.xlu0 %v120, 127
    %v355 = vpop.permute.xlu0 %354
    %356 = vrot.lane.b32.xlu0 %v121, 127
    %v357 = vpop.permute.xlu0 %356
    %358 = vrot.lane.b32.xlu0 %v122, 127
    %v359 = vpop.permute.xlu0 %358
    %vm360 = vcmp.lt.s32.totalorder %v248, 127
    %v361 = vsel %vm360, %v357, %v359
    %v362 = vsel %vm360, %v355, %v357
    %v363 = vsel %vm360, %v353, %v355
    %v364 = vsel %vm360, %v359, %v353
    %s365 = scalar_lea.vmem [#allocation11], 5
    %v366 = vld [vmem:[%s365] ss:$8 sm:$0xf]
    %v368 = vperm.slane %v366, 0
    %v369 = vperm.slane %v366, 1
    %v370 = vperm.slane %v366, 2
    %v371 = vperm.slane %v366, 3
    %v376 = vmul.f32 %v363, %v368
    %v377 = vmul.f32 %v362, %v369
    %v378 = vmul.f32 %v361, %v370
    %v379 = vmul.f32 %v364, %v371
    %380 = vrot.lane.b32.xlu0 %v119, 113
    %v381 = vpop.permute.xlu0 %380
    %382 = vrot.lane.b32.xlu0 %v120, 113
    %v383 = vpop.permute.xlu0 %382
    %384 = vrot.lane.b32.xlu0 %v121, 113
    %v385 = vpop.permute.xlu0 %384
    %386 = vrot.lane.b32.xlu0 %v122, 113
    %v387 = vpop.permute.xlu0 %386
    %vm388 = vcmp.lt.s32.totalorder %v248, 113
    %v389 = vsel %vm388, %v385, %v387
    %v390 = vsel %vm388, %v383, %v385
    %v391 = vsel %vm388, %v381, %v383
    %v392 = vsel %vm388, %v387, %v381
    %s393 = scalar_lea.vmem [#allocation11], 6
    %v394 = vld [vmem:[%s393] ss:$8 sm:$0xf]
    %v396 = vperm.slane %v394, 0
    %v397 = vperm.slane %v394, 1
    %v398 = vperm.slane %v394, 2
    %v399 = vperm.slane %v394, 3
    %v404 = vmul.f32 %v391, %v396
    %v405 = vmul.f32 %v390, %v397
    %v406 = vmul.f32 %v389, %v398
    %v407 = vmul.f32 %v392, %v399
    %408 = vrot.lane.b32.xlu0 %v119, 112
    %v409 = vpop.permute.xlu0 %408
    %410 = vrot.lane.b32.xlu0 %v120, 112
    %v411 = vpop.permute.xlu0 %410
    %412 = vrot.lane.b32.xlu0 %v121, 112
    %v413 = vpop.permute.xlu0 %412
    %414 = vrot.lane.b32.xlu0 %v122, 112
    %v415 = vpop.permute.xlu0 %414
    %vm416 = vcmp.lt.s32.totalorder %v248, 112
    %v417 = vsel %vm416, %v413, %v415
    %v418 = vsel %vm416, %v411, %v413
    %v419 = vsel %vm416, %v409, %v411
    %v420 = vsel %vm416, %v415, %v409
    %s421 = scalar_lea.vmem [#allocation11], 7
    %v422 = vld [vmem:[%s421] ss:$8 sm:$0xf]
    %v424 = vperm.slane %v422, 0
    %v425 = vperm.slane %v422, 1
    %v426 = vperm.slane %v422, 2
    %v427 = vperm.slane %v422, 3
    %v432 = vmul.f32 %v419, %v424
    %v433 = vmul.f32 %v418, %v425
    %v434 = vmul.f32 %v417, %v426
    %v435 = vmul.f32 %v420, %v427
    %436 = vrot.lane.b32.xlu0 %v119, 111
    %v437 = vpop.permute.xlu0 %436
    %438 = vrot.lane.b32.xlu0 %v120, 111
    %v439 = vpop.permute.xlu0 %438
    %440 = vrot.lane.b32.xlu0 %v121, 111
    %v441 = vpop.permute.xlu0 %440
    %442 = vrot.lane.b32.xlu0 %v122, 111
    %v443 = vpop.permute.xlu0 %442
    %vm444 = vcmp.lt.s32.totalorder %v248, 111
    %v445 = vsel %vm444, %v441, %v443
    %v446 = vsel %vm444, %v439, %v441
    %v447 = vsel %vm444, %v437, %v439
    %v448 = vsel %vm444, %v443, %v437
    %s449 = scalar_lea.vmem [#allocation11], 32
    %v450 = vld [vmem:[%s449] ss:$8 sm:$0xf]
    %v452 = vperm.slane %v450, 0
    %v453 = vperm.slane %v450, 1
    %v454 = vperm.slane %v450, 2
    %v455 = vperm.slane %v450, 3
    %v460 = vmul.f32 %v447, %v452
    %v461 = vmul.f32 %v446, %v453
    %v462 = vmul.f32 %v445, %v454
    %v463 = vmul.f32 %v448, %v455
    %v464 = vld [vmem:[#allocation2] sm:$0xff]
    %v465 = vld [vmem:[#allocation2 + $0x8] sm:$0xff]
    %vm466 = vcmask 588800
    %v468 = vsel %vm466, %v464, 0
    %v471 = vsel %vm466, %v465, 0
    %473 = vmatpush.msra.mxu0 0.0
    %474 = vmatpush.msra.mxu0 0.0
    %475 = vmatpush.msra.mxu0 0.0
    %476 = vmatpush.msra.mxu0 0.0
    %477 = vmatpush.msra.mxu0 0.0
    %478 = vmatpush.msra.mxu0 0.0
    %479 = vmatpush.msra.mxu0 0.0
    %480 = vmatpush.msra.mxu0 %v460
    %481 = vmatpush.msra.mxu0 %v432
    %482 = vmatpush.msra.mxu0 %v404
    %483 = vmatpush.msra.mxu0 %v376
    %484 = vmatpush.msra.mxu0 %v119
    %485 = vmatpush.msra.mxu0 %v348
    %486 = vmatpush.msra.mxu0 %v320
    %487 = vmatpush.msra.mxu0 %v292
    %488 = vmatpush.msra.mxu0 %v264
    %489 = vmatmul.f32.gmra.mxu0 %v468
    %v490 = vpop.f32.mrf.mxu0
    %v491 = vadd.f32 0.0, %v490
    %492 = vmatmul.f32.gmra.mxu0 %v471
    %v493 = vpop.f32.mrf.mxu0
    %v494 = vadd.f32 0.0, %v493
    %495 = vdwg.mxu0
    %496 = vmatpush.msra.mxu0 0.0
    %497 = vmatpush.msra.mxu0 0.0
    %498 = vmatpush.msra.mxu0 0.0
    %499 = vmatpush.msra.mxu0 0.0
    %500 = vmatpush.msra.mxu0 0.0
    %501 = vmatpush.msra.mxu0 0.0
    %502 = vmatpush.msra.mxu0 0.0
    %503 = vmatpush.msra.mxu0 %v461
    %504 = vmatpush.msra.mxu0 %v433
    %505 = vmatpush.msra.mxu0 %v405
    %506 = vmatpush.msra.mxu0 %v377
    %507 = vmatpush.msra.mxu0 %v120
    %508 = vmatpush.msra.mxu0 %v349
    %509 = vmatpush.msra.mxu0 %v321
    %510 = vmatpush.msra.mxu0 %v293
    %511 = vmatpush.msra.mxu0 %v265
    %512 = vmatmul.f32.gmra.mxu0 %v468
    %v513 = vpop.f32.mrf.mxu0
    %v514 = vadd.f32 0.0, %v513
    %515 = vmatmul.f32.gmra.mxu0 %v471
    %v516 = vpop.f32.mrf.mxu0
    %v517 = vadd.f32 0.0, %v516
    %518 = vdwg.mxu0
    %519 = vmatpush.msra.mxu0 0.0
    %520 = vmatpush.msra.mxu0 0.0
    %521 = vmatpush.msra.mxu0 0.0
    %522 = vmatpush.msra.mxu0 0.0
    %523 = vmatpush.msra.mxu0 0.0
    %524 = vmatpush.msra.mxu0 0.0
    %525 = vmatpush.msra.mxu0 0.0
    %526 = vmatpush.msra.mxu0 %v462
    %527 = vmatpush.msra.mxu0 %v434
    %528 = vmatpush.msra.mxu0 %v406
    %529 = vmatpush.msra.mxu0 %v378
    %530 = vmatpush.msra.mxu0 %v121
    %531 = vmatpush.msra.mxu0 %v350
    %532 = vmatpush.msra.mxu0 %v322
    %533 = vmatpush.msra.mxu0 %v294
    %534 = vmatpush.msra.mxu0 %v266
    %535 = vmatmul.f32.gmra.mxu0 %v468
    %v536 = vpop.f32.mrf.mxu0
    %v537 = vadd.f32 0.0, %v536
    %538 = vmatmul.f32.gmra.mxu0 %v471
    %v539 = vpop.f32.mrf.mxu0
    %v540 = vadd.f32 0.0, %v539
    %541 = vdwg.mxu0
    %542 = vmatpush.msra.mxu0 0.0
    %543 = vmatpush.msra.mxu0 0.0
    %544 = vmatpush.msra.mxu0 0.0
    %545 = vmatpush.msra.mxu0 0.0
    %546 = vmatpush.msra.mxu0 0.0
    %547 = vmatpush.msra.mxu0 0.0
    %548 = vmatpush.msra.mxu0 0.0
    %549 = vmatpush.msra.mxu0 %v463
    %550 = vmatpush.msra.mxu0 %v435
    %551 = vmatpush.msra.mxu0 %v407
    %552 = vmatpush.msra.mxu0 %v379
    %553 = vmatpush.msra.mxu0 %v122
    %554 = vmatpush.msra.mxu0 %v351
    %555 = vmatpush.msra.mxu0 %v323
    %556 = vmatpush.msra.mxu0 %v295
    %557 = vmatpush.msra.mxu0 %v267
    %558 = vmatmul.f32.gmra.mxu0 %v468
    %v559 = vpop.f32.mrf.mxu0
    %v560 = vadd.f32 0.0, %v559
    %561 = vmatmul.f32.gmra.mxu0 %v471
    %v562 = vpop.f32.mrf.mxu0
    %v563 = vadd.f32 0.0, %v562
    %564 = vdwg.mxu0
    %565 = vset.pattern.permute.xlu0 0
    %566 = vperm.xlu0 %565, %v124
    %v567 = vpop.permute.xlu0 %566
    %v569 = vadd.f32 %v491, %v567
    %v570 = vadd.f32 %v514, %v567
    %v571 = vadd.f32 %v537, %v567
    %v572 = vadd.f32 %v560, %v567
    %573 = vset.pattern.permute.xlu0 7
    %574 = vperm.xlu0 %573, %v124
    %v575 = vpop.permute.xlu0 %574
    %v577 = vadd.f32 %v494, %v575
    %v578 = vadd.f32 %v517, %v575
    %v579 = vadd.f32 %v540, %v575
    %v580 = vadd.f32 %v563, %v575
    %v581 = vld [vmem:[%s8] ss:$2 sm:$0xf]
    %v583 = vperm.slane %v581, 0
    %v584 = vperm.slane %v581, 1
    %v585 = vperm.slane %v581, 2
    %v586 = vperm.slane %v581, 3
    %v591 = vmul.f32 %v569, %v583
    %v592 = vmul.f32 %v570, %v584
    %v593 = vmul.f32 %v571, %v585
    %v594 = vmul.f32 %v572, %v586
    %v595 = vadd.f32 %v591, %v592
    %v596 = vadd.f32 %v595, %v593
    %v597 = vadd.f32 %v596, %v594
    %598 = vadd.xlane.f32.xlu0 %v597
    %v599 = vpop.xlane.xlu0 %598
    %v600 = vmul.f32 %v591, %v569
    %v601 = vmul.f32 %v592, %v570
    %v602 = vmul.f32 %v593, %v571
    %v603 = vmul.f32 %v594, %v572
    %v604 = vadd.f32 %v600, %v601
    %v605 = vadd.f32 %v604, %v602
    %v606 = vadd.f32 %v605, %v603
    %607 = vadd.xlane.f32.xlu0 %v606
    %v608 = vpop.xlane.xlu0 %607
    %s609 = scalar_lea.vmem %s8, 1
    %v610 = vld [vmem:[%s609] ss:$2 sm:$0xf]
    %v612 = vperm.slane %v610, 0
    %v613 = vperm.slane %v610, 1
    %v614 = vperm.slane %v610, 2
    %v615 = vperm.slane %v610, 3
    %v620 = vmul.f32 %v569, %v612
    %v621 = vmul.f32 %v570, %v613
    %v622 = vmul.f32 %v571, %v614
    %v623 = vmul.f32 %v572, %v615
    %v624 = vadd.f32 %v620, %v621
    %v625 = vadd.f32 %v624, %v622
    %v626 = vadd.f32 %v625, %v623
    %627 = vadd.xlane.f32.xlu0 %v626
    %v628 = vpop.xlane.xlu0 %627
    %v629 = vmul.f32 %v620, %v569
    %v630 = vmul.f32 %v621, %v570
    %v631 = vmul.f32 %v622, %v571
    %v632 = vmul.f32 %v623, %v572
    %v633 = vadd.f32 %v629, %v630
    %v634 = vadd.f32 %v633, %v631
    %v635 = vadd.f32 %v634, %v632
    %636 = vadd.xlane.f32.xlu0 %v635
    %v637 = vpop.xlane.xlu0 %636
    %vm638 = vcmask 7168
    %v639 = vsel %vm638, %v599, %v628
    %v640 = vsel %vm638, %v608, %v637
    %642 = vrot.lane.b32.xlu0 %v640, 2
    %v643 = vpop.permute.xlu0 %642
    %vm645 = vcmask 15360
    %v646 = vsel %vm645, %v639, %v643
    %vm647 = vcmask 64512
    %v649 = vsel %vm647, %v123, 0
    %651 = vmatpush.msra.mxu0 0.0
    %652 = vmatpush.msra.mxu0 0.0
    %653 = vmatpush.msra.mxu0 0.0
    %654 = vmatpush.msra.mxu0 0.0
    %655 = vmatpush.msra.mxu0 0.0
    %656 = vmatpush.msra.mxu0 0.0
    %657 = vmatpush.msra.mxu0 0.0
    %658 = vmatpush.msra.mxu0 0.0
    %659 = vmatpush.msra.mxu0 0.0
    %660 = vmatpush.msra.mxu0 0.0
    %661 = vmatpush.msra.mxu0 0.0
    %662 = vmatpush.msra.mxu0 0.0
    %663 = vmatpush.msra.mxu0 0.0
    %664 = vmatpush.msra.mxu0 0.0
    %665 = vmatpush.msra.mxu0 0.0
    %666 = vmatpush.msra.mxu0 %v646
    %667 = vmatmul.f32.gmra.mxu0 %v649
    %v668 = vpop.f32.mrf.mxu0
    %v669 = vadd.f32 0.0, %v668
    %670 = vdwg.mxu0
    %v671 = vmul.f32 %v669, %v669
    %673 = vrot.lane.b32.xlu0 %v671, 2
    %v674 = vpop.permute.xlu0 %673
    %v676 = vsub.f32 %v669, %v674
    %v677 = vmax.f32 %v676, 0.0
    %v678 = vadd.f32 %v677, 1e-05
    %v679 = vrsqrt.pop %v678
    %v680 = vmul.f32 %v679, %v678
    %v681 = vmul.f32 %v680, %v679
    %v682 = vmul.f32 0.5, %v681
    %v683 = vsub.f32 1.5, %v682
    %v684 = vmul.f32 %v679, %v683
    %vm685 = vweird.f32 %v678
    %vm686 = vweird.f32 %v679
    %vm687 = vmor %vm685, %vm686
    %v688 = vsel %vm687, %v679, %v684
    %689 = vset.pattern.permute.xlu0 1
    %690 = vperm.xlu0 %689, %v124
    %v691 = vpop.permute.xlu0 %690
    %v693 = vmul.f32 %v688, %v691
    %695 = vrot.lane.b32.xlu0 %v693, 126
    %v696 = vpop.permute.xlu0 %695
    %v698 = vmul.f32 %v669, %v696
    %699 = vset.pattern.permute.xlu0 2
    %700 = vperm.xlu0 %699, %v124
    %v701 = vpop.permute.xlu0 %700
    %v703 = vsub.f32 %v701, %v698
    %704 = vset.pattern.permute.xlu0 2
    %705 = vperm.xlu0 %704, %v693
    %v706 = vpop.permute.xlu0 %705
    %v708 = vmul.f32 %v706, %v583
    %v709 = vmul.f32 %v706, %v584
    %v710 = vmul.f32 %v706, %v585
    %v711 = vmul.f32 %v706, %v586
    %712 = vset.pattern.permute.xlu0 3
    %713 = vperm.xlu0 %712, %v693
    %v714 = vpop.permute.xlu0 %713
    %v716 = vmul.f32 %v714, %v612
    %v717 = vmul.f32 %v714, %v613
    %v718 = vmul.f32 %v714, %v614
    %v719 = vmul.f32 %v714, %v615
    %v720 = vadd.f32 %v708, %v716
    %v721 = vadd.f32 %v709, %v717
    %v722 = vadd.f32 %v710, %v718
    %v723 = vadd.f32 %v711, %v719
    %v724 = vmul.f32 %v569, %v720
    %v725 = vmul.f32 %v570, %v721
    %v726 = vmul.f32 %v571, %v722
    %v727 = vmul.f32 %v572, %v723
    %729 = vset.pattern.permute.xlu0 0
    %730 = vperm.xlu0 %729, %v703
    %v731 = vpop.permute.xlu0 %730
    %v733 = vmul.f32 %v731, %v583
    %v734 = vmul.f32 %v731, %v584
    %v735 = vmul.f32 %v731, %v585
    %v736 = vmul.f32 %v731, %v586
    %737 = vset.pattern.permute.xlu0 1
    %738 = vperm.xlu0 %737, %v703
    %v739 = vpop.permute.xlu0 %738
    %v741 = vmul.f32 %v739, %v612
    %v742 = vmul.f32 %v739, %v613
    %v743 = vmul.f32 %v739, %v614
    %v744 = vmul.f32 %v739, %v615
    %v745 = vadd.f32 %v733, %v741
    %v746 = vadd.f32 %v734, %v742
    %v747 = vadd.f32 %v735, %v743
    %v748 = vadd.f32 %v736, %v744
    %v749 = vadd.f32 %v724, %v745
    %v750 = vadd.f32 %v725, %v746
    %v751 = vadd.f32 %v726, %v747
    %v752 = vadd.f32 %v727, %v748
    %v753 = vxor.u32 %v749, 2147483648
    %v754 = vxor.u32 %v750, 2147483648
    %v755 = vxor.u32 %v751, 2147483648
    %v756 = vxor.u32 %v752, 2147483648
    %v757 = vmul.f32 %v753, 1.442695
    %v758 = vpow.pop %v757
    %v759 = vmul.f32 %v754, 1.442695
    %v760 = vpow.pop %v759
    %v761 = vmul.f32 %v755, 1.442695
    %v762 = vpow.pop %v761
    %v763 = vmul.f32 %v756, 1.442695
    %v764 = vpow.pop %v763
    %v765 = vadd.f32 %v758, 1.0
    %v766 = vadd.f32 %v760, 1.0
    %v767 = vadd.f32 %v762, 1.0
    %v768 = vadd.f32 %v764, 1.0
    %v769 = vrcp.pop %v765
    %v770 = vmul.f32 %v765, %v769
    %v771 = vsub.f32 1.0, %v770
    %v772 = vmul.f32 %v769, %v771
    %v773 = vadd.f32 %v769, %v772
    %vm774 = vweird.f32 %v765
    %vm775 = vweird.f32 %v769
    %vm776 = vmor %vm774, %vm775
    %v777 = vsel %vm776, %v769, %v773
    %v778 = vand.u32 2147483647, %v765
    %vm779 = vcmp.eq.f32.partialorder %v778, 8.507059e+37
    %v780 = vand.u32 %v765, 2147483648
    %v781 = vor.u32 1.1754944e-38, %v780
    %v782 = vsel %vm779, %v781, %v777
    %v783 = vmul.f32 1.0, %v782
    %v784 = vrcp.pop %v766
    %v785 = vmul.f32 %v766, %v784
    %v786 = vsub.f32 1.0, %v785
    %v787 = vmul.f32 %v784, %v786
    %v788 = vadd.f32 %v784, %v787
    %vm789 = vweird.f32 %v766
    %vm790 = vweird.f32 %v784
    %vm791 = vmor %vm789, %vm790
    %v792 = vsel %vm791, %v784, %v788
    %v793 = vand.u32 2147483647, %v766
    %vm794 = vcmp.eq.f32.partialorder %v793, 8.507059e+37
    %v795 = vand.u32 %v766, 2147483648
    %v796 = vor.u32 1.1754944e-38, %v795
    %v797 = vsel %vm794, %v796, %v792
    %v798 = vmul.f32 1.0, %v797
    %v799 = vrcp.pop %v767
    %v800 = vmul.f32 %v767, %v799
    %v801 = vsub.f32 1.0, %v800
    %v802 = vmul.f32 %v799, %v801
    %v803 = vadd.f32 %v799, %v802
    %vm804 = vweird.f32 %v767
    %vm805 = vweird.f32 %v799
    %vm806 = vmor %vm804, %vm805
    %v807 = vsel %vm806, %v799, %v803
    %v808 = vand.u32 2147483647, %v767
    %vm809 = vcmp.eq.f32.partialorder %v808, 8.507059e+37
    %v810 = vand.u32 %v767, 2147483648
    %v811 = vor.u32 1.1754944e-38, %v810
    %v812 = vsel %vm809, %v811, %v807
    %v813 = vmul.f32 1.0, %v812
    %v814 = vrcp.pop %v768
    %v815 = vmul.f32 %v768, %v814
    %v816 = vsub.f32 1.0, %v815
    %v817 = vmul.f32 %v814, %v816
    %v818 = vadd.f32 %v814, %v817
    %vm819 = vweird.f32 %v768
    %vm820 = vweird.f32 %v814
    %vm821 = vmor %vm819, %vm820
    %v822 = vsel %vm821, %v814, %v818
    %v823 = vand.u32 2147483647, %v768
    %vm824 = vcmp.eq.f32.partialorder %v823, 8.507059e+37
    %v825 = vand.u32 %v768, 2147483648
    %v826 = vor.u32 1.1754944e-38, %v825
    %v827 = vsel %vm824, %v826, %v822
    %v828 = vmul.f32 1.0, %v827
    %v829 = vmul.f32 %v749, %v783
    %v830 = vmul.f32 %v750, %v798
    %v831 = vmul.f32 %v751, %v813
    %v832 = vmul.f32 %v752, %v828
    %834 = vset.pattern.permute.xlu0 0
    %835 = vperm.xlu0 %834, %v237
    %v836 = vpop.permute.xlu0 %835
    %v838 = vmul.f32 %v836, %v583
    %v839 = vmul.f32 %v836, %v584
    %v840 = vmul.f32 %v836, %v585
    %v841 = vmul.f32 %v836, %v586
    %842 = vset.pattern.permute.xlu0 1
    %843 = vperm.xlu0 %842, %v237
    %v844 = vpop.permute.xlu0 %843
    %v846 = vmul.f32 %v844, %v612
    %v847 = vmul.f32 %v844, %v613
    %v848 = vmul.f32 %v844, %v614
    %v849 = vmul.f32 %v844, %v615
    %v850 = vadd.f32 %v838, %v846
    %v851 = vadd.f32 %v839, %v847
    %v852 = vadd.f32 %v840, %v848
    %v853 = vadd.f32 %v841, %v849
    %v854 = vadd.f32 %v829, %v850
    %v855 = vadd.f32 %v830, %v851
    %v856 = vadd.f32 %v831, %v852
    %v857 = vadd.f32 %v832, %v853
    %858 = vrot.lane.b32.xlu0 %v854, 17
    %v859 = vpop.permute.xlu0 %858
    %860 = vrot.lane.b32.xlu0 %v855, 17
    %v861 = vpop.permute.xlu0 %860
    %862 = vrot.lane.b32.xlu0 %v856, 17
    %v863 = vpop.permute.xlu0 %862
    %864 = vrot.lane.b32.xlu0 %v857, 17
    %v865 = vpop.permute.xlu0 %864
    %v866 = vsel %vm249, %v863, %v865
    %v867 = vsel %vm249, %v861, %v863
    %v868 = vsel %vm249, %v859, %v861
    %v869 = vsel %vm249, %v865, %v859
    %v870 = vmul.f32 %v869, %v256
    %v871 = vmul.f32 %v868, %v257
    %v872 = vmul.f32 %v867, %v258
    %v873 = vmul.f32 %v866, %v259
    %874 = vrot.lane.b32.xlu0 %v854, 16
    %v875 = vpop.permute.xlu0 %874
    %876 = vrot.lane.b32.xlu0 %v855, 16
    %v877 = vpop.permute.xlu0 %876
    %878 = vrot.lane.b32.xlu0 %v856, 16
    %v879 = vpop.permute.xlu0 %878
    %880 = vrot.lane.b32.xlu0 %v857, 16
    %v881 = vpop.permute.xlu0 %880
    %v882 = vsel %vm276, %v879, %v881
    %v883 = vsel %vm276, %v877, %v879
    %v884 = vsel %vm276, %v875, %v877
    %v885 = vsel %vm276, %v881, %v875
    %v886 = vmul.f32 %v885, %v284
    %v887 = vmul.f32 %v884, %v285
    %v888 = vmul.f32 %v883, %v286
    %v889 = vmul.f32 %v882, %v287
    %890 = vrot.lane.b32.xlu0 %v854, 15
    %v891 = vpop.permute.xlu0 %890
    %892 = vrot.lane.b32.xlu0 %v855, 15
    %v893 = vpop.permute.xlu0 %892
    %894 = vrot.lane.b32.xlu0 %v856, 15
    %v895 = vpop.permute.xlu0 %894
    %896 = vrot.lane.b32.xlu0 %v857, 15
    %v897 = vpop.permute.xlu0 %896
    %v898 = vsel %vm304, %v895, %v897
    %v899 = vsel %vm304, %v893, %v895
    %v900 = vsel %vm304, %v891, %v893
    %v901 = vsel %vm304, %v897, %v891
    %v902 = vmul.f32 %v901, %v312
    %v903 = vmul.f32 %v900, %v313
    %v904 = vmul.f32 %v899, %v314
    %v905 = vmul.f32 %v898, %v315
    %906 = vrot.lane.b32.xlu0 %v854, 1
    %v907 = vpop.permute.xlu0 %906
    %908 = vrot.lane.b32.xlu0 %v855, 1
    %v909 = vpop.permute.xlu0 %908
    %910 = vrot.lane.b32.xlu0 %v856, 1
    %v911 = vpop.permute.xlu0 %910
    %912 = vrot.lane.b32.xlu0 %v857, 1
    %v913 = vpop.permute.xlu0 %912
    %v914 = vsel %vm332, %v911, %v913
    %v915 = vsel %vm332, %v909, %v911
    %v916 = vsel %vm332, %v907, %v909
    %v917 = vsel %vm332, %v913, %v907
    %v918 = vmul.f32 %v917, %v340
    %v919 = vmul.f32 %v916, %v341
    %v920 = vmul.f32 %v915, %v342
    %v921 = vmul.f32 %v914, %v343
    %922 = vrot.lane.b32.xlu0 %v854, 127
    %v923 = vpop.permute.xlu0 %922
    %924 = vrot.lane.b32.xlu0 %v855, 127
    %v925 = vpop.permute.xlu0 %924
    %926 = vrot.lane.b32.xlu0 %v856, 127
    %v927 = vpop.permute.xlu0 %926
    %928 = vrot.lane.b32.xlu0 %v857, 127
    %v929 = vpop.permute.xlu0 %928
    %v930 = vsel %vm360, %v927, %v929
    %v931 = vsel %vm360, %v925, %v927
    %v932 = vsel %vm360, %v923, %v925
    %v933 = vsel %vm360, %v929, %v923
    %v934 = vmul.f32 %v932, %v368
    %v935 = vmul.f32 %v931, %v369
    %v936 = vmul.f32 %v930, %v370
    %v937 = vmul.f32 %v933, %v371
    %938 = vrot.lane.b32.xlu0 %v854, 113
    %v939 = vpop.permute.xlu0 %938
    %940 = vrot.lane.b32.xlu0 %v855, 113
    %v941 = vpop.permute.xlu0 %940
    %942 = vrot.lane.b32.xlu0 %v856, 113
    %v943 = vpop.permute.xlu0 %942
    %944 = vrot.lane.b32.xlu0 %v857, 113
    %v945 = vpop.permute.xlu0 %944
    %v946 = vsel %vm388, %v943, %v945
    %v947 = vsel %vm388, %v941, %v943
    %v948 = vsel %vm388, %v939, %v941
    %v949 = vsel %vm388, %v945, %v939
    %v950 = vmul.f32 %v948, %v396
    %v951 = vmul.f32 %v947, %v397
    %v952 = vmul.f32 %v946, %v398
    %v953 = vmul.f32 %v949, %v399
    %954 = vrot.lane.b32.xlu0 %v854, 112
    %v955 = vpop.permute.xlu0 %954
    %956 = vrot.lane.b32.xlu0 %v855, 112
    %v957 = vpop.permute.xlu0 %956
    %958 = vrot.lane.b32.xlu0 %v856, 112
    %v959 = vpop.permute.xlu0 %958
    %960 = vrot.lane.b32.xlu0 %v857, 112
    %v961 = vpop.permute.xlu0 %960
    %v962 = vsel %vm416, %v959, %v961
    %v963 = vsel %vm416, %v957, %v959
    %v964 = vsel %vm416, %v955, %v957
    %v965 = vsel %vm416, %v961, %v955
    %v966 = vmul.f32 %v964, %v424
    %v967 = vmul.f32 %v963, %v425
    %v968 = vmul.f32 %v962, %v426
    %v969 = vmul.f32 %v965, %v427
    %970 = vrot.lane.b32.xlu0 %v854, 111
    %v971 = vpop.permute.xlu0 %970
    %972 = vrot.lane.b32.xlu0 %v855, 111
    %v973 = vpop.permute.xlu0 %972
    %974 = vrot.lane.b32.xlu0 %v856, 111
    %v975 = vpop.permute.xlu0 %974
    %976 = vrot.lane.b32.xlu0 %v857, 111
    %v977 = vpop.permute.xlu0 %976
    %v978 = vsel %vm444, %v975, %v977
    %v979 = vsel %vm444, %v973, %v975
    %v980 = vsel %vm444, %v971, %v973
    %v981 = vsel %vm444, %v977, %v971
    %v982 = vmul.f32 %v980, %v452
    %v983 = vmul.f32 %v979, %v453
    %v984 = vmul.f32 %v978, %v454
    %v985 = vmul.f32 %v981, %v455
    %v986 = vld [vmem:[#allocation5] sm:$0xff]
    %987 = vset.pattern.permute.xlu0 3
    %988 = vperm.xlu0 %987, %v124
    %v989 = vpop.permute.xlu0 %988
    %v992 = vsel %vm466, %v986, 0
    %994 = vmatpush.msra.mxu0 0.0
    %995 = vmatpush.msra.mxu0 0.0
    %996 = vmatpush.msra.mxu0 0.0
    %997 = vmatpush.msra.mxu0 0.0
    %998 = vmatpush.msra.mxu0 0.0
    %999 = vmatpush.msra.mxu0 0.0
    %1000 = vmatpush.msra.mxu0 0.0
    %1001 = vmatpush.msra.mxu0 %v982
    %1002 = vmatpush.msra.mxu0 %v966
    %1003 = vmatpush.msra.mxu0 %v950
    %1004 = vmatpush.msra.mxu0 %v934
    %1005 = vmatpush.msra.mxu0 %v854
    %1006 = vmatpush.msra.mxu0 %v918
    %1007 = vmatpush.msra.mxu0 %v902
    %1008 = vmatpush.msra.mxu0 %v886
    %1009 = vmatpush.msra.mxu0 %v870
    %1010 = vmatmul.f32.gmra.mxu0 %v992
    %v1011 = vpop.f32.mrf.mxu0
    %v1012 = vadd.f32 %v989, %v1011
    %1013 = vdwg.mxu0
    %1014 = vmatpush.msra.mxu0 0.0
    %1015 = vmatpush.msra.mxu0 0.0
    %1016 = vmatpush.msra.mxu0 0.0
    %1017 = vmatpush.msra.mxu0 0.0
    %1018 = vmatpush.msra.mxu0 0.0
    %1019 = vmatpush.msra.mxu0 0.0
    %1020 = vmatpush.msra.mxu0 0.0
    %1021 = vmatpush.msra.mxu0 %v983
    %1022 = vmatpush.msra.mxu0 %v967
    %1023 = vmatpush.msra.mxu0 %v951
    %1024 = vmatpush.msra.mxu0 %v935
    %1025 = vmatpush.msra.mxu0 %v855
    %1026 = vmatpush.msra.mxu0 %v919
    %1027 = vmatpush.msra.mxu0 %v903
    %1028 = vmatpush.msra.mxu0 %v887
    %1029 = vmatpush.msra.mxu0 %v871
    %1030 = vmatmul.f32.gmra.mxu0 %v992
    %v1031 = vpop.f32.mrf.mxu0
    %v1032 = vadd.f32 %v989, %v1031
    %1033 = vdwg.mxu0
    %1034 = vmatpush.msra.mxu0 0.0
    %1035 = vmatpush.msra.mxu0 0.0
    %1036 = vmatpush.msra.mxu0 0.0
    %1037 = vmatpush.msra.mxu0 0.0
    %1038 = vmatpush.msra.mxu0 0.0
    %1039 = vmatpush.msra.mxu0 0.0
    %1040 = vmatpush.msra.mxu0 0.0
    %1041 = vmatpush.msra.mxu0 %v984
    %1042 = vmatpush.msra.mxu0 %v968
    %1043 = vmatpush.msra.mxu0 %v952
    %1044 = vmatpush.msra.mxu0 %v936
    %1045 = vmatpush.msra.mxu0 %v856
    %1046 = vmatpush.msra.mxu0 %v920
    %1047 = vmatpush.msra.mxu0 %v904
    %1048 = vmatpush.msra.mxu0 %v888
    %1049 = vmatpush.msra.mxu0 %v872
    %1050 = vmatmul.f32.gmra.mxu0 %v992
    %v1051 = vpop.f32.mrf.mxu0
    %v1052 = vadd.f32 %v989, %v1051
    %1053 = vdwg.mxu0
    %1054 = vmatpush.msra.mxu0 0.0
    %1055 = vmatpush.msra.mxu0 0.0
    %1056 = vmatpush.msra.mxu0 0.0
    %1057 = vmatpush.msra.mxu0 0.0
    %1058 = vmatpush.msra.mxu0 0.0
    %1059 = vmatpush.msra.mxu0 0.0
    %1060 = vmatpush.msra.mxu0 0.0
    %1061 = vmatpush.msra.mxu0 %v985
    %1062 = vmatpush.msra.mxu0 %v969
    %1063 = vmatpush.msra.mxu0 %v953
    %1064 = vmatpush.msra.mxu0 %v937
    %1065 = vmatpush.msra.mxu0 %v857
    %1066 = vmatpush.msra.mxu0 %v921
    %1067 = vmatpush.msra.mxu0 %v905
    %1068 = vmatpush.msra.mxu0 %v889
    %1069 = vmatpush.msra.mxu0 %v873
    %1070 = vmatmul.f32.gmra.mxu0 %v992
    %v1071 = vpop.f32.mrf.mxu0
    %v1072 = vadd.f32 %v989, %v1071
    %1073 = vdwg.mxu0
    %v1074 = vmul.f32 %v1012, %v583
    %v1075 = vmul.f32 %v1032, %v584
    %v1076 = vmul.f32 %v1052, %v585
    %v1077 = vmul.f32 %v1072, %v586
    %v1078 = vadd.f32 %v1074, %v1075
    %v1079 = vadd.f32 %v1078, %v1076
    %v1080 = vadd.f32 %v1079, %v1077
    %1081 = vadd.xlane.f32.xlu0 %v1080
    %v1082 = vpop.xlane.xlu0 %1081
    %v1083 = vmul.f32 %v1074, %v1012
    %v1084 = vmul.f32 %v1075, %v1032
    %v1085 = vmul.f32 %v1076, %v1052
    %v1086 = vmul.f32 %v1077, %v1072
    %v1087 = vadd.f32 %v1083, %v1084
    %v1088 = vadd.f32 %v1087, %v1085
    %v1089 = vadd.f32 %v1088, %v1086
    %1090 = vadd.xlane.f32.xlu0 %v1089
    %v1091 = vpop.xlane.xlu0 %1090
    %v1092 = vmul.f32 %v1012, %v612
    %v1093 = vmul.f32 %v1032, %v613
    %v1094 = vmul.f32 %v1052, %v614
    %v1095 = vmul.f32 %v1072, %v615
    %v1096 = vadd.f32 %v1092, %v1093
    %v1097 = vadd.f32 %v1096, %v1094
    %v1098 = vadd.f32 %v1097, %v1095
    %1099 = vadd.xlane.f32.xlu0 %v1098
    %v1100 = vpop.xlane.xlu0 %1099
    %v1101 = vmul.f32 %v1092, %v1012
    %v1102 = vmul.f32 %v1093, %v1032
    %v1103 = vmul.f32 %v1094, %v1052
    %v1104 = vmul.f32 %v1095, %v1072
    %v1105 = vadd.f32 %v1101, %v1102
    %v1106 = vadd.f32 %v1105, %v1103
    %v1107 = vadd.f32 %v1106, %v1104
    %1108 = vadd.xlane.f32.xlu0 %v1107
    %v1109 = vpop.xlane.xlu0 %1108
    %v1110 = vsel %vm638, %v1082, %v1100
    %v1111 = vsel %vm638, %v1091, %v1109
    %1113 = vrot.lane.b32.xlu0 %v1111, 2
    %v1114 = vpop.permute.xlu0 %1113
    %v1116 = vsel %vm645, %v1110, %v1114
    %1117 = vmatpush.msra.mxu0 0.0
    %1118 = vmatpush.msra.mxu0 0.0
    %1119 = vmatpush.msra.mxu0 0.0
    %1120 = vmatpush.msra.mxu0 0.0
    %1121 = vmatpush.msra.mxu0 0.0
    %1122 = vmatpush.msra.mxu0 0.0
    %1123 = vmatpush.msra.mxu0 0.0
    %1124 = vmatpush.msra.mxu0 0.0
    %1125 = vmatpush.msra.mxu0 0.0
    %1126 = vmatpush.msra.mxu0 0.0
    %1127 = vmatpush.msra.mxu0 0.0
    %1128 = vmatpush.msra.mxu0 0.0
    %1129 = vmatpush.msra.mxu0 0.0
    %1130 = vmatpush.msra.mxu0 0.0
    %1131 = vmatpush.msra.mxu0 0.0
    %1132 = vmatpush.msra.mxu0 %v1116
    %1133 = vmatmul.f32.gmra.mxu0 %v649
    %v1134 = vpop.f32.mrf.mxu0
    %v1135 = vadd.f32 0.0, %v1134
    %1136 = vdwg.mxu0
    %v1137 = vmul.f32 %v1135, %v1135
    %1139 = vrot.lane.b32.xlu0 %v1137, 2
    %v1140 = vpop.permute.xlu0 %1139
    %v1142 = vsub.f32 %v1135, %v1140
    %v1143 = vmax.f32 %v1142, 0.0
    %v1144 = vadd.f32 %v1143, 1e-05
    %v1145 = vrsqrt.pop %v1144
    %v1146 = vmul.f32 %v1145, %v1144
    %v1147 = vmul.f32 %v1146, %v1145
    %v1148 = vmul.f32 0.5, %v1147
    %v1149 = vsub.f32 1.5, %v1148
    %v1150 = vmul.f32 %v1145, %v1149
    %vm1151 = vweird.f32 %v1144
    %vm1152 = vweird.f32 %v1145
    %vm1153 = vmor %vm1151, %vm1152
    %v1154 = vsel %vm1153, %v1145, %v1150
    %1155 = vset.pattern.permute.xlu0 4
    %1156 = vperm.xlu0 %1155, %v124
    %v1157 = vpop.permute.xlu0 %1156
    %v1159 = vmul.f32 %v1154, %v1157
    %1161 = vrot.lane.b32.xlu0 %v1159, 126
    %v1162 = vpop.permute.xlu0 %1161
    %v1164 = vmul.f32 %v1135, %v1162
    %1165 = vset.pattern.permute.xlu0 5
    %1166 = vperm.xlu0 %1165, %v124
    %v1167 = vpop.permute.xlu0 %1166
    %v1169 = vsub.f32 %v1167, %v1164
    %1170 = vset.pattern.permute.xlu0 2
    %1171 = vperm.xlu0 %1170, %v1159
    %v1172 = vpop.permute.xlu0 %1171
    %v1174 = vmul.f32 %v1172, %v583
    %v1175 = vmul.f32 %v1172, %v584
    %v1176 = vmul.f32 %v1172, %v585
    %v1177 = vmul.f32 %v1172, %v586
    %1178 = vset.pattern.permute.xlu0 3
    %1179 = vperm.xlu0 %1178, %v1159
    %v1180 = vpop.permute.xlu0 %1179
    %v1182 = vmul.f32 %v1180, %v612
    %v1183 = vmul.f32 %v1180, %v613
    %v1184 = vmul.f32 %v1180, %v614
    %v1185 = vmul.f32 %v1180, %v615
    %v1186 = vadd.f32 %v1174, %v1182
    %v1187 = vadd.f32 %v1175, %v1183
    %v1188 = vadd.f32 %v1176, %v1184
    %v1189 = vadd.f32 %v1177, %v1185
    %v1190 = vmul.f32 %v1012, %v1186
    %v1191 = vmul.f32 %v1032, %v1187
    %v1192 = vmul.f32 %v1052, %v1188
    %v1193 = vmul.f32 %v1072, %v1189
    %1195 = vset.pattern.permute.xlu0 0
    %1196 = vperm.xlu0 %1195, %v1169
    %v1197 = vpop.permute.xlu0 %1196
    %v1199 = vmul.f32 %v1197, %v583
    %v1200 = vmul.f32 %v1197, %v584
    %v1201 = vmul.f32 %v1197, %v585
    %v1202 = vmul.f32 %v1197, %v586
    %1203 = vset.pattern.permute.xlu0 1
    %1204 = vperm.xlu0 %1203, %v1169
    %v1205 = vpop.permute.xlu0 %1204
    %v1207 = vmul.f32 %v1205, %v612
    %v1208 = vmul.f32 %v1205, %v613
    %v1209 = vmul.f32 %v1205, %v614
    %v1210 = vmul.f32 %v1205, %v615
    %v1211 = vadd.f32 %v1199, %v1207
    %v1212 = vadd.f32 %v1200, %v1208
    %v1213 = vadd.f32 %v1201, %v1209
    %v1214 = vadd.f32 %v1202, %v1210
    %v1215 = vadd.f32 %v1190, %v1211
    %v1216 = vadd.f32 %v1191, %v1212
    %v1217 = vadd.f32 %v1192, %v1213
    %v1218 = vadd.f32 %v1193, %v1214
    %v1219 = vxor.u32 %v1215, 2147483648
    %v1220 = vxor.u32 %v1216, 2147483648
    %v1221 = vxor.u32 %v1217, 2147483648
    %v1222 = vxor.u32 %v1218, 2147483648
    %v1223 = vmul.f32 %v1219, 1.442695
    %v1224 = vpow.pop %v1223
    %v1225 = vmul.f32 %v1220, 1.442695
    %v1226 = vpow.pop %v1225
    %v1227 = vmul.f32 %v1221, 1.442695
    %v1228 = vpow.pop %v1227
    %v1229 = vmul.f32 %v1222, 1.442695
    %v1230 = vpow.pop %v1229
    %v1231 = vadd.f32 %v1224, 1.0
    %v1232 = vadd.f32 %v1226, 1.0
    %v1233 = vadd.f32 %v1228, 1.0
    %v1234 = vadd.f32 %v1230, 1.0
    %v1235 = vrcp.pop %v1231
    %v1236 = vmul.f32 %v1231, %v1235
    %v1237 = vsub.f32 1.0, %v1236
    %v1238 = vmul.f32 %v1235, %v1237
    %v1239 = vadd.f32 %v1235, %v1238
    %vm1240 = vweird.f32 %v1231
    %vm1241 = vweird.f32 %v1235
    %vm1242 = vmor %vm1240, %vm1241
    %v1243 = vsel %vm1242, %v1235, %v1239
    %v1244 = vand.u32 2147483647, %v1231
    %vm1245 = vcmp.eq.f32.partialorder %v1244, 8.507059e+37
    %v1246 = vand.u32 %v1231, 2147483648
    %v1247 = vor.u32 1.1754944e-38, %v1246
    %v1248 = vsel %vm1245, %v1247, %v1243
    %v1249 = vmul.f32 1.0, %v1248
    %v1250 = vrcp.pop %v1232
    %v1251 = vmul.f32 %v1232, %v1250
    %v1252 = vsub.f32 1.0, %v1251
    %v1253 = vmul.f32 %v1250, %v1252
    %v1254 = vadd.f32 %v1250, %v1253
    %vm1255 = vweird.f32 %v1232
    %vm1256 = vweird.f32 %v1250
    %vm1257 = vmor %vm1255, %vm1256
    %v1258 = vsel %vm1257, %v1250, %v1254
    %v1259 = vand.u32 2147483647, %v1232
    %vm1260 = vcmp.eq.f32.partialorder %v1259, 8.507059e+37
    %v1261 = vand.u32 %v1232, 2147483648
    %v1262 = vor.u32 1.1754944e-38, %v1261
    %v1263 = vsel %vm1260, %v1262, %v1258
    %v1264 = vmul.f32 1.0, %v1263
    %v1265 = vrcp.pop %v1233
    %v1266 = vmul.f32 %v1233, %v1265
    %v1267 = vsub.f32 1.0, %v1266
    %v1268 = vmul.f32 %v1265, %v1267
    %v1269 = vadd.f32 %v1265, %v1268
    %vm1270 = vweird.f32 %v1233
    %vm1271 = vweird.f32 %v1265
    %vm1272 = vmor %vm1270, %vm1271
    %v1273 = vsel %vm1272, %v1265, %v1269
    %v1274 = vand.u32 2147483647, %v1233
    %vm1275 = vcmp.eq.f32.partialorder %v1274, 8.507059e+37
    %v1276 = vand.u32 %v1233, 2147483648
    %v1277 = vor.u32 1.1754944e-38, %v1276
    %v1278 = vsel %vm1275, %v1277, %v1273
    %v1279 = vmul.f32 1.0, %v1278
    %v1280 = vrcp.pop %v1234
    %v1281 = vmul.f32 %v1234, %v1280
    %v1282 = vsub.f32 1.0, %v1281
    %v1283 = vmul.f32 %v1280, %v1282
    %v1284 = vadd.f32 %v1280, %v1283
    %vm1285 = vweird.f32 %v1234
    %vm1286 = vweird.f32 %v1280
    %vm1287 = vmor %vm1285, %vm1286
    %v1288 = vsel %vm1287, %v1280, %v1284
    %v1289 = vand.u32 2147483647, %v1234
    %vm1290 = vcmp.eq.f32.partialorder %v1289, 8.507059e+37
    %v1291 = vand.u32 %v1234, 2147483648
    %v1292 = vor.u32 1.1754944e-38, %v1291
    %v1293 = vsel %vm1290, %v1292, %v1288
    %v1294 = vmul.f32 1.0, %v1293
    %v1295 = vmul.f32 %v1215, %v1249
    %v1296 = vmul.f32 %v1216, %v1264
    %v1297 = vmul.f32 %v1217, %v1279
    %v1298 = vmul.f32 %v1218, %v1294
    %v1299 = vadd.f32 %v1295, %v577
    %v1300 = vadd.f32 %v1296, %v578
    %v1301 = vadd.f32 %v1297, %v579
    %v1302 = vadd.f32 %v1298, %v580
    %1303 = vst [vmem:[#allocation13] sm:$0xff] %v1299
    %1304 = vst [vmem:[#allocation13 + $0x8] sm:$0xff] %v1300
    %1305 = vst [vmem:[#allocation13 + $0x10] sm:$0xff] %v1301
    %1306 = vst [vmem:[#allocation13 + $0x18] sm:$0xff] %v1302
    // Predicated region
    $region62: #{tpu_custom_call.1} parent=1 // pred_check
      _
    $region63: #{tpu_custom_call.1} parent=1 // pred_check_branch
      %1308 = sbr.rel (0) target = $region65
    $region64: #{tpu_custom_call.1} parent=1 // pred_region
      %1310 = vsyncadd [#allocation4], 0
      %s1312 = sshll.u32 [#allocation13], 4
      %s1313 = int_to_ptr.vmem [resolvable:$true] %s1312
      %s1314 = sshll.u32 %s9, 4
      %s1315 = int_to_ptr.hbm [resolvable:$true] %s1314
      %1317 = dma.vmem_to_hbm [thread:$0]  %s1313, 512, %s1315, [#allocation4]
    $region65: #{tpu_custom_call.1} parent=1 // pred_fallthru
      _
    // Predicated region
    $region66: #{tpu_custom_call.1} parent=1 // pred_check
      _
    $region67: #{tpu_custom_call.1} parent=1 // pred_check_branch
      %1319 = sbr.rel (0) target = $region69
    $region68: #{tpu_custom_call.1} parent=1 // pred_region
      %1321 = dma.done [#allocation4], 512
    $region69: #{tpu_custom_call.1} parent=1 // pred_fallthru
      _
    %1322 = vsyncpa [#allocation3], 1
    %1323 = vsyncpa [#allocation6], 1
    %1324 = vsyncpa [#allocation9], 1
    %1325 = vsyncpa [#allocation12], 1
    %1326 = vsyncpa [#allocation4], 1

</llo_original>
